<compile_context>
chip_gen: v5e
topology: v5e:2x2
jax: 0.10.0
libtpu: 0.0.40
codegen_flags: <defaults>
</compile_context>

<pallas_src>
import math

import jax
import jax.numpy as jnp
from jax.experimental import pallas as pl
from jax.experimental.pallas import tpu as pltpu

D_STATE = 16
D_CONV = 4
EXPAND = 2
LN_EPS = 1e-5
BLK = 32          # tokens per scan block (log-step prefix scan over 4 sublane tiles)


def _softplus(v):
    # numerically stable softplus using only exp/log/abs/max (Mosaic-friendly)
    return jnp.maximum(v, 0.0) + jnp.log(1.0 + jnp.exp(-jnp.abs(v)))


def _sigmoid_ref(v):
    return 1.0 / (1.0 + jnp.exp(-v))


def _round_up(v, m):
    return ((v + m - 1) // m) * m


def mamba_layer_kernel(
    x_ref,           # (1, L, C)
    ln_w_ref,        # (1, C)   same LayerNorm applied twice (as in the PyTorch module)
    ln_b_ref,        # (1, C)
    w_in_ref,        # (C, d_pad + d_inner) bf16: [w_in_x | 0-pad | w_in_z]
    w_conv_ref,      # (d_conv, 1, d_inner) f32
    b_conv_ref,      # (1, d_inner)
    w_dbc_ref,       # (d_inner, d_pad + 2*d_state) bf16: [w_xdt@w_dt | 0-pad | w_xB | w_xC]
    b_dbc_ref,       # (1, d_pad + 2*d_state) f32:        [b_dt       | 0 ...          ]
    negA_ref,        # (1, N) f32, N = d_state*d_inner, lane s*d_inner+d = -exp(A_log)[d,s]
    d_par_ref,       # (1, d_inner)
    w_out_ref,       # (d_inner, C) bf16
    w_proj_ref,      # (C, Dout_pad) bf16
    b_proj_ref,      # (1, Dout_pad) f32
    m_tile_ref,      # (d_inner, N) bf16 0/1: lane tile   v[d] -> v[d] at s*d_inner+d
    m_bcast2_ref,    # (2*d_state, 2N) bf16 0/1: broadcast [B|C][s] over the d_inner lanes
    m_sum_ref,       # (N, d_inner) bf16 0/1: sum over the d_state lane groups
    skip_ref,        # (1, 1) scalar in SMEM
    out_ref,         # (1, L, Dout_pad)
    dt_s,            # scratch (L, d_inner)   f32
    dtxc_s,          # scratch (L, d_inner)   f32
    bc_s,            # scratch (L, 2*d_state) f32
    y_s,             # scratch (L, d_inner)   f32  (SSM part of y)
):
    L = x_ref.shape[1]
    d_inner = d_par_ref.shape[1]
    d_pad = w_in_ref.shape[1] - d_inner          # 128-aligned split point
    d_conv = w_conv_ref.shape[0]
    d_state2 = m_bcast2_ref.shape[0]             # 2 * d_state
    N = m_sum_ref.shape[0]                       # d_state * d_inner (multiple of 128)
    n_blk = L // BLK
    f32 = jnp.float32
    bf16 = jnp.bfloat16

    def _sigmoid(v):
        # divide goes to the (otherwise idle) EUP slot
        return pl.reciprocal(1.0 + jnp.exp(-v), approx=True)

    def _layer_norm(v):
        mu = jnp.mean(v, axis=-1, keepdims=True)
        var = jnp.mean((v - mu) ** 2, axis=-1, keepdims=True)
        return (v - mu) * jax.lax.rsqrt(var + LN_EPS) * ln_w_ref[...] + ln_b_ref[...]

    x_flat = x_ref[0]                                   # (L, C)
    x_norm = _layer_norm(x_flat)                        # first self.norm

    # fused in_proj (bias=False); the two halves sit on 128-aligned lane offsets
    xz = jnp.dot(x_norm.astype(bf16), w_in_ref[...], preferred_element_type=f32)
    x1 = xz[:, :d_inner]                                # (L, d_inner)
    z = xz[:, d_pad:d_pad + d_inner]                    # (L, d_inner)

    # depthwise causal conv1d (padding=d_conv-1, truncated to L) + SiLU
    # sublane rolls + (hoisted) masks of the wrapped rows
    row_l = jax.lax.broadcasted_iota(jnp.int32, (L, d_inner), 0)
    conv = x1 * w_conv_ref[d_conv - 1]
    for j in range(1, d_conv):
        keep = row_l >= j
        conv = conv + jnp.where(keep, pltpu.roll(x1, shift=j, axis=0), 0.0) * \
            w_conv_ref[d_conv - 1 - j]
    conv = conv + b_conv_ref[...]
    xc = conv * _sigmoid(conv)                          # SiLU

    # fused dt / B / C projection (single matmul); dt gets the softplus
    dbc = jnp.dot(xc.astype(bf16), w_dbc_ref[...], preferred_element_type=f32) + b_dbc_ref[...]
    dt = _softplus(dbc[:, :d_inner])
    dt_s[...] = dt
    dtxc_s[...] = dt * xc
    bc_s[...] = dbc[:, d_pad:d_pad + d_state2]          # [B | C], (L, 2*d_state)

    # hoisted constants for the scan (not re-materialized per block)
    row_b = jax.lax.broadcasted_iota(jnp.int32, (BLK, N), 0)
    shifts = []
    s = 1
    while s < BLK:
        shifts.append(s)
        s *= 2
    scan_masks = [row_b >= sh for sh in shifts]
    negA_f = negA_ref[...]
    m_tile = m_tile_ref[...]
    m_bcast2 = m_bcast2_ref[...]
    m_sum = m_sum_ref[...]

    # selective scan: 32-token blocks, states folded into lanes (BLK, d_state*d_inner),
    # within-block Hillis-Steele affine prefix scan, single packed (1, N) carry,
    # dA / dB*u construction and the C-combine fused into the block body.
    def blk_body(b, carry):
        start = pl.multiple_of(b * BLK, BLK)
        dt_blk = dt_s[pl.ds(start, BLK), :]             # (BLK, d_inner)
        dtxc_blk = dtxc_s[pl.ds(start, BLK), :]
        bc_blk = bc_s[pl.ds(start, BLK), :]             # (BLK, 2*d_state)

        dd = jnp.concatenate([dt_blk, dtxc_blk], axis=0).astype(bf16)   # (2*BLK, d_inner)
        dd_f = jnp.dot(dd, m_tile, preferred_element_type=f32)          # (2*BLK, N)
        dA = jnp.exp(dd_f[:BLK] * negA_f)                               # exp(dt * A_s)
        bc_f = jnp.dot(bc_blk.astype(bf16), m_bcast2,
                       preferred_element_type=f32)                      # (BLK, 2N)
        B_f = bc_f[:, :N]
        C_f = bc_f[:, N:]
        dBu = dd_f[BLK:] * B_f                                          # dt * u * B_s

        A, Bv = dA, dBu
        for sh, keep in zip(shifts, scan_masks):        # inclusive affine prefix scan
            a_prev = jnp.where(keep, pltpu.roll(A, shift=sh, axis=0), 1.0)
            b_prev = jnp.where(keep, pltpu.roll(Bv, shift=sh, axis=0), 0.0)
            Bv = A * b_prev + Bv
            A = A * a_prev
        h_blk = A * carry + Bv                          # fold in the cross-block carry

        # y_t[d] = sum_s C_t[s] * h_t[s, d]   (fused combine, one MXU call)
        y_s[pl.ds(start, BLK), :] = jnp.dot((h_blk * C_f).astype(bf16), m_sum,
                                            preferred_element_type=f32)
        return h_blk[BLK - 1:BLK, :]                    # packed (1, N) carry

    jax.lax.fori_loop(0, n_blk, blk_body, jnp.zeros((1, N), f32))

    # + D * u, gated with SiLU(z)
    y = (y_s[...] + xc * d_par_ref[...]) * (z * _sigmoid(z))

    # out_proj, skip, second norm (same weights), final projection
    out_m = jnp.dot(y.astype(bf16), w_out_ref[...], preferred_element_type=f32)   # (L, C)
    x_mamba = _layer_norm(out_m + skip_ref[0, 0] * x_flat)
    out_ref[0] = jnp.dot(x_mamba.astype(bf16), w_proj_ref[...],
                         preferred_element_type=f32) + b_proj_ref[...]


def mamba_layer_forward(x, params):
    x = x.astype(jnp.float32)                    # matches the fp16 -> fp32 promotion
    B, C, H, W = x.shape
    L = H * W
    d_inner = params["w_in_x"].shape[1]
    d_state = params["w_xB"].shape[1]
    Dout = params["w_proj"].shape[1]
    N = d_state * d_inner
    # d_inner % 8 == 0 keeps N a multiple of 128 so all lane split points are aligned
    assert d_inner % 8 == 0, "d_inner must be a multiple of 8 (input_dim multiple of 4)"

    L_pad = _round_up(L, BLK)
    Dout_pad = _round_up(Dout, 128)              # lane-dense output stores
    d_pad = _round_up(d_inner, 128)              # 128-aligned split point in fused weights

    x_seq = jnp.transpose(x.reshape(B, C, L), (0, 2, 1))        # (B, L, C)
    if L_pad != L:
        # padded tokens are causally downstream of the real ones -> safely discarded
        x_seq = jnp.pad(x_seq, ((0, 0), (0, L_pad - L), (0, 0)))

    bf = jnp.bfloat16
    f32 = jnp.float32

    # ---- derived / restructured parameters (wrapper-side, negligible cost) ----
    w_in = jnp.concatenate(
        [params["w_in_x"], jnp.zeros((C, d_pad - d_inner), f32), params["w_in_z"]],
        axis=1).astype(bf)                                      # (C, d_pad + d_inner)
    w_dtf = params["w_xdt"] @ params["w_dt"]                    # fused low-rank dt projection
    w_dbc = jnp.concatenate(
        [w_dtf, jnp.zeros((d_inner, d_pad - d_inner), f32),
         params["w_xB"], params["w_xC"]], axis=1).astype(bf)    # (d_inner, d_pad + 2*d_state)
    b_dbc = jnp.concatenate(
        [params["b_dt"], jnp.zeros((1, d_pad - d_inner + 2 * d_state), f32)], axis=1)
    w_conv3 = params["w_conv"].reshape(D_CONV, 1, d_inner)
    negA_f = jnp.transpose(params["negA"]).reshape(1, N)        # lane s*d_inner+d = negA[d,s]

    eye_i = jnp.eye(d_inner, dtype=f32)
    eye_s = jnp.eye(d_state, dtype=f32)
    m_tile = jnp.tile(eye_i, (1, d_state)).astype(bf)           # (d_inner, N)
    m_bcast = jnp.repeat(eye_s, d_inner, axis=1)                # (d_state, N)
    zb = jnp.zeros_like(m_bcast)
    m_bcast2 = jnp.concatenate(
        [jnp.concatenate([m_bcast, zb], axis=1),
         jnp.concatenate([zb, m_bcast], axis=1)], axis=0).astype(bf)   # (2*d_state, 2N)
    m_sum = jnp.tile(eye_i, (d_state, 1)).astype(bf)            # (N, d_inner)

    w_out = params["w_out"].astype(bf)
    w_proj_p = jnp.pad(params["w_proj"], ((0, 0), (0, Dout_pad - Dout))).astype(bf)
    b_proj_p = jnp.pad(params["b_proj"], ((0, 0), (0, Dout_pad - Dout)))

    plist = [
        params["ln_w"], params["ln_b"],
        w_in, w_conv3, params["b_conv"],
        w_dbc, b_dbc,
        negA_f, params["d_par"],
        w_out, w_proj_p, b_proj_p,
        m_tile, m_bcast2, m_sum,
        params["skip"],
    ]

    def full_spec(p):
        nd = p.ndim
        return pl.BlockSpec(p.shape, lambda b, _nd=nd: (0,) * _nd)

    in_specs = [pl.BlockSpec((1, L_pad, C), lambda b: (b, 0, 0))]
    in_specs += [full_spec(p) for p in plist[:-1]]
    in_specs += [pl.BlockSpec(memory_space=pltpu.MemorySpace.SMEM)]   # skip scalar -> SMEM

    out = pl.pallas_call(
        mamba_layer_kernel,
        out_shape=jax.ShapeDtypeStruct((B, L_pad, Dout_pad), jnp.float32),
        grid_spec=pltpu.PrefetchScalarGridSpec(
            num_scalar_prefetch=0,
            grid=(B,),
            in_specs=in_specs,
            out_specs=pl.BlockSpec((1, L_pad, Dout_pad), lambda b: (b, 0, 0)),
            scratch_shapes=[
                pltpu.VMEM((L_pad, d_inner), jnp.float32),       # dt
                pltpu.VMEM((L_pad, d_inner), jnp.float32),       # dt * u
                pltpu.VMEM((L_pad, 2 * d_state), jnp.float32),   # [B | C]
                pltpu.VMEM((L_pad, d_inner), jnp.float32),       # SSM output
            ],
        ),
        compiler_params=pltpu.CompilerParams(
            dimension_semantics=("parallel",),        # batch split across v7x's 2 TCs
            vmem_limit_bytes=48 * 1024 * 1024),       # explicit scoped-VMEM budget
    )(x_seq, *plist)

    out = out[:, :L, :Dout]
    return jnp.transpose(out, (0, 2, 1)).reshape(B, Dout, H, W)


def init_params(key, input_dim, output_dim):
    d_inner = EXPAND * input_dim
    dt_rank = math.ceil(input_dim / 16)
    keys = jax.random.split(key, 16)

    def rnd(k, shape, scale=0.2):
        return scale * jax.random.normal(k, shape, dtype=jnp.float32)

    p = {}
    p["ln_w"] = 1.0 + rnd(keys[0], (1, input_dim), 0.1)
    p["ln_b"] = rnd(keys[1], (1, input_dim), 0.1)
    p["w_in_x"] = rnd(keys[2], (input_dim, d_inner))
    p["w_in_z"] = rnd(keys[3], (input_dim, d_inner))
    p["w_conv"] = rnd(keys[4], (D_CONV, d_inner))
    p["b_conv"] = rnd(keys[5], (1, d_inner), 0.1)
    p["w_xdt"] = rnd(keys[6], (d_inner, dt_rank))
    p["w_xB"] = rnd(keys[7], (d_inner, D_STATE))
    p["w_xC"] = rnd(keys[8], (d_inner, D_STATE))
    p["w_dt"] = rnd(keys[9], (dt_rank, d_inner))
    p["b_dt"] = rnd(keys[10], (1, d_inner), 0.1)
    A_log = jnp.log(jnp.arange(1, D_STATE + 1, dtype=jnp.float32))
    p["negA"] = -jnp.exp(jnp.broadcast_to(A_log, (d_inner, D_STATE)))   # (d_inner, d_state)
    p["d_par"] = jnp.ones((1, d_inner), jnp.float32)                    # Mamba D init
    p["w_out"] = rnd(keys[11], (d_inner, input_dim))
    p["skip"] = jnp.ones((1, 1), jnp.float32)                           # skip_scale init
    p["w_proj"] = rnd(keys[12], (input_dim, output_dim))
    p["b_proj"] = rnd(keys[13], (1, output_dim), 0.1)
    return p


def mamba_layer_reference(x, params):
    """Pure-JAX reference (independent formulation) for validation."""
    x = x.astype(jnp.float32)
    B, C, H, W = x.shape
    L = H * W
    d_inner = params["w_in_x"].shape[1]
    xf = jnp.transpose(x.reshape(B, C, L), (0, 2, 1))

    def ln(v):
        mu = jnp.mean(v, axis=-1, keepdims=True)
        var = jnp.mean((v - mu) ** 2, axis=-1, keepdims=True)
        return (v - mu) * jax.lax.rsqrt(var + LN_EPS) * params["ln_w"][0] + params["ln_b"][0]

    xn = ln(xf)
    x1 = xn @ params["w_in_x"]
    z = xn @ params["w_in_z"]

    xpad = jnp.pad(x1, ((0, 0), (D_CONV - 1, 0), (0, 0)))
    conv = sum(xpad[:, k:k + L, :] * params["w_conv"][k] for k in range(D_CONV))
    conv = conv + params["b_conv"][0]
    xc = conv * _sigmoid_ref(conv)

    dt = _softplus((xc @ params["w_xdt"]) @ params["w_dt"] + params["b_dt"][0])
    Bm = xc @ params["w_xB"]
    Cm = xc @ params["w_xC"]
    negA = params["negA"]

    dA = jnp.exp(jnp.einsum("bld,dn->bldn", dt, negA))
    dBu = jnp.einsum("bld,bln->bldn", dt * xc, Bm)

    def step(h, inp):
        dA_t, dBu_t, C_t = inp
        h = dA_t * h + dBu_t
        return h, jnp.einsum("bdn,bn->bd", h, C_t)

    h0 = jnp.zeros((B, d_inner, D_STATE), jnp.float32)
    _, ys = jax.lax.scan(step, h0, (jnp.transpose(dA, (1, 0, 2, 3)),
                                    jnp.transpose(dBu, (1, 0, 2, 3)),
                                    jnp.transpose(Cm, (1, 0, 2))))
    y = jnp.transpose(ys, (1, 0, 2)) + xc * params["d_par"][0]
    y = y * (z * _sigmoid_ref(z))

    out_m = y @ params["w_out"]
    xm = out_m + params["skip"][0, 0] * xf
    xm = ln(xm)
    out = xm @ params["w_proj"] + params["b_proj"][0]
    Dout = params["w_proj"].shape[1]
    return jnp.transpose(out, (0, 2, 1)).reshape(B, Dout, H, W)


if __name__ == "__main__":
    key = jax.random.PRNGKey(0)
    kx, kp = jax.random.split(key)

    B, C, H, W = 2, 8, 8, 8          # input_dim = 8 -> d_inner = 16, L = 64
    OUT_DIM = 16                     # output_dim = 16
    x = jax.random.normal(kx, (B, C, H, W), dtype=jnp.float32)
    params = init_params(kp, C, OUT_DIM)

    out = jax.jit(mamba_layer_forward)(x, params)
    out = jax.block_until_ready(out)

    ref = mamba_layer_reference(x, params)
    max_err = float(jnp.max(jnp.abs(out - ref)))
    assert out.shape == (B, OUT_DIM, H, W), out.shape
    # bf16 MXU operands + approx-EUP sigmoid => slightly looser tolerance than pure f32
    if not bool(jnp.all(jnp.isfinite(out))) or not (max_err < 3e-2):
        raise RuntimeError(f"mismatch vs reference: max_err={max_err}")
    print("KERNEL_OK")
</pallas_src>

<mosaic_0001>
module attributes {stable_mosaic.version = 11 : i64} {
  func.func @mamba_layer_kernel(%arg0: i32, %arg1: memref<1x64x8xf32, #tpu.memory_space<vmem>>, %arg2: memref<1x8xf32, #tpu.memory_space<vmem>>, %arg3: memref<1x8xf32, #tpu.memory_space<vmem>>, %arg4: memref<8x144xbf16, #tpu.memory_space<vmem>>, %arg5: memref<4x1x16xf32, #tpu.memory_space<vmem>>, %arg6: memref<1x16xf32, #tpu.memory_space<vmem>>, %arg7: memref<16x160xbf16, #tpu.memory_space<vmem>>, %arg8: memref<1x160xf32, #tpu.memory_space<vmem>>, %arg9: memref<1x256xf32, #tpu.memory_space<vmem>>, %arg10: memref<1x16xf32, #tpu.memory_space<vmem>>, %arg11: memref<16x8xbf16, #tpu.memory_space<vmem>>, %arg12: memref<8x128xbf16, #tpu.memory_space<vmem>>, %arg13: memref<1x128xf32, #tpu.memory_space<vmem>>, %arg14: memref<16x256xbf16, #tpu.memory_space<vmem>>, %arg15: memref<32x512xbf16, #tpu.memory_space<vmem>>, %arg16: memref<256x16xbf16, #tpu.memory_space<vmem>>, %arg17: memref<1x1xf32, #tpu.memory_space<smem>>, %arg18: memref<1x64x128xf32, #tpu.memory_space<vmem>>, %arg19: memref<64x16xf32, #tpu.memory_space<vmem>>, %arg20: memref<64x16xf32, #tpu.memory_space<vmem>>, %arg21: memref<64x32xf32, #tpu.memory_space<vmem>>, %arg22: memref<64x16xf32, #tpu.memory_space<vmem>>) attributes {dimension_semantics = [#tpu.dimension_semantics<parallel>], iteration_bounds = array<i64: 2>, scalar_prefetch = 0 : i64, scratch_operands = 4 : i64, tpu.core_type = #tpu.core_type<tc>, window_params = [{transform_indices = @transform_0, window_bounds = array<i64: 1, 64, 8>}, {pipeline_mode = #tpu.pipeline_mode<synchronous>, transform_indices = @transform_1, window_bounds = array<i64: 1, 8>}, {pipeline_mode = #tpu.pipeline_mode<synchronous>, transform_indices = @transform_2, window_bounds = array<i64: 1, 8>}, {pipeline_mode = #tpu.pipeline_mode<synchronous>, transform_indices = @transform_3, window_bounds = array<i64: 8, 144>}, {pipeline_mode = #tpu.pipeline_mode<synchronous>, transform_indices = @transform_4, window_bounds = array<i64: 4, 1, 16>}, {pipeline_mode = #tpu.pipeline_mode<synchronous>, transform_indices = @transform_5, window_bounds = array<i64: 1, 16>}, {pipeline_mode = #tpu.pipeline_mode<synchronous>, transform_indices = @transform_6, window_bounds = array<i64: 16, 160>}, {pipeline_mode = #tpu.pipeline_mode<synchronous>, transform_indices = @transform_7, window_bounds = array<i64: 1, 160>}, {pipeline_mode = #tpu.pipeline_mode<synchronous>, transform_indices = @transform_8, window_bounds = array<i64: 1, 256>}, {pipeline_mode = #tpu.pipeline_mode<synchronous>, transform_indices = @transform_9, window_bounds = array<i64: 1, 16>}, {pipeline_mode = #tpu.pipeline_mode<synchronous>, transform_indices = @transform_10, window_bounds = array<i64: 16, 8>}, {pipeline_mode = #tpu.pipeline_mode<synchronous>, transform_indices = @transform_11, window_bounds = array<i64: 8, 128>}, {pipeline_mode = #tpu.pipeline_mode<synchronous>, transform_indices = @transform_12, window_bounds = array<i64: 1, 128>}, {pipeline_mode = #tpu.pipeline_mode<synchronous>, transform_indices = @transform_13, window_bounds = array<i64: 16, 256>}, {pipeline_mode = #tpu.pipeline_mode<synchronous>, transform_indices = @transform_14, window_bounds = array<i64: 32, 512>}, {pipeline_mode = #tpu.pipeline_mode<synchronous>, transform_indices = @transform_15, window_bounds = array<i64: 256, 16>}, {transform_indices = @transform_16, window_bounds = array<i64: 1, 1>}, {transform_indices = @transform_17, window_bounds = array<i64: 1, 64, 128>}]} {
    %c0 = arith.constant 0 : index
    %c0_0 = arith.constant 0 : index
    %c0_1 = arith.constant 0 : index
    %0 = vector.load %arg1[%c0, %c0_0, %c0_1] : memref<1x64x8xf32, #tpu.memory_space<vmem>>, vector<1x64x8xf32>
    %1 = vector.shape_cast %0 : vector<1x64x8xf32> to vector<64x8xf32>
    %cst = arith.constant dense<0.000000e+00> : vector<64xf32>
    %2 = vector.multi_reduction <add>, %1, %cst [1] : vector<64x8xf32> to vector<64xf32>
    %3 = vector.shape_cast %2 : vector<64xf32> to vector<64x1xf32>
    %cst_2 = arith.constant 8.000000e+00 : f32
    %4 = vector.broadcast %cst_2 : f32 to vector<64x1xf32>
    %5 = arith.divf %3, %4 : vector<64x1xf32>
    %6 = vector.broadcast %5 : vector<64x1xf32> to vector<64x8xf32>
    %7 = arith.subf %1, %6 : vector<64x8xf32>
    %8 = arith.mulf %7, %7 : vector<64x8xf32>
    %cst_3 = arith.constant dense<0.000000e+00> : vector<64xf32>
    %9 = vector.multi_reduction <add>, %8, %cst_3 [1] : vector<64x8xf32> to vector<64xf32>
    %10 = vector.shape_cast %9 : vector<64xf32> to vector<64x1xf32>
    %cst_4 = arith.constant 8.000000e+00 : f32
    %11 = vector.broadcast %cst_4 : f32 to vector<64x1xf32>
    %12 = arith.divf %10, %11 : vector<64x1xf32>
    %13 = vector.broadcast %5 : vector<64x1xf32> to vector<64x8xf32>
    %14 = arith.subf %1, %13 : vector<64x8xf32>
    %cst_5 = arith.constant 9.99999974E-6 : f32
    %15 = vector.broadcast %cst_5 : f32 to vector<64x1xf32>
    %16 = arith.addf %12, %15 : vector<64x1xf32>
    %17 = math.rsqrt %16 : vector<64x1xf32>
    %18 = vector.broadcast %17 : vector<64x1xf32> to vector<64x8xf32>
    %19 = arith.mulf %14, %18 : vector<64x8xf32>
    %c0_6 = arith.constant 0 : index
    %c0_7 = arith.constant 0 : index
    %20 = vector.load %arg2[%c0_6, %c0_7] : memref<1x8xf32, #tpu.memory_space<vmem>>, vector<1x8xf32>
    %21 = vector.broadcast %20 : vector<1x8xf32> to vector<64x8xf32>
    %22 = arith.mulf %19, %21 : vector<64x8xf32>
    %c0_8 = arith.constant 0 : index
    %c0_9 = arith.constant 0 : index
    %23 = vector.load %arg3[%c0_8, %c0_9] : memref<1x8xf32, #tpu.memory_space<vmem>>, vector<1x8xf32>
    %24 = vector.broadcast %23 : vector<1x8xf32> to vector<64x8xf32>
    %25 = arith.addf %22, %24 : vector<64x8xf32>
    %26 = arith.truncf %25 : vector<64x8xf32> to vector<64x8xbf16>
    %c0_10 = arith.constant 0 : index
    %c0_11 = arith.constant 0 : index
    %27 = vector.load %arg4[%c0_10, %c0_11] : memref<8x144xbf16, #tpu.memory_space<vmem>>, vector<8x144xbf16>
    %cst_12 = arith.constant dense<0.000000e+00> : vector<64x144xf32>
    %28 = tpu.matmul %26, %27, %cst_12 {dimension_numbers = #tpu.dot_dimension_numbers<[1], [0], [0], [1], [0, 0, 1, 1], [], []>} : vector<64x8xbf16>, vector<8x144xbf16>, vector<64x144xf32> -> vector<64x144xf32>
    %29 = vector.extract_strided_slice %28 {offsets = [0, 0], sizes = [64, 16], strides = [1, 1]} : vector<64x144xf32> to vector<64x16xf32>
    %30 = vector.extract_strided_slice %28 {offsets = [0, 128], sizes = [64, 16], strides = [1, 1]} : vector<64x144xf32> to vector<64x16xf32>
    %31 = tpu.iota {dimensions = array<i32: 0>} : vector<64x16xi32>
    %c3 = arith.constant 3 : index
    %c0_13 = arith.constant 0 : index
    %c0_14 = arith.constant 0 : index
    %32 = vector.load %arg5[%c3, %c0_13, %c0_14] : memref<4x1x16xf32, #tpu.memory_space<vmem>>, vector<1x1x16xf32>
    %33 = vector.shape_cast %32 : vector<1x1x16xf32> to vector<1x16xf32>
    %34 = vector.broadcast %33 : vector<1x16xf32> to vector<64x16xf32>
    %35 = arith.mulf %29, %34 : vector<64x16xf32>
    %c1_i32 = arith.constant 1 : i32
    %36 = vector.broadcast %c1_i32 : i32 to vector<64x16xi32>
    %37 = arith.cmpi sge, %31, %36 : vector<64x16xi32>
    %c1_i32_15 = arith.constant 1 : i32
    %38 = tpu.dynamic_rotate %29 by %c1_i32_15 dim 0 : vector<64x16xf32>, i32 -> vector<64x16xf32>
    %cst_16 = arith.constant 0.000000e+00 : f32
    %39 = vector.broadcast %cst_16 : f32 to vector<64x16xf32>
    %40 = arith.select %37, %38, %39 : vector<64x16xi1>, vector<64x16xf32>
    %c2 = arith.constant 2 : index
    %c0_17 = arith.constant 0 : index
    %c0_18 = arith.constant 0 : index
    %41 = vector.load %arg5[%c2, %c0_17, %c0_18] : memref<4x1x16xf32, #tpu.memory_space<vmem>>, vector<1x1x16xf32>
    %42 = vector.shape_cast %41 : vector<1x1x16xf32> to vector<1x16xf32>
    %43 = vector.broadcast %42 : vector<1x16xf32> to vector<64x16xf32>
    %44 = arith.mulf %40, %43 : vector<64x16xf32>
    %45 = arith.addf %35, %44 : vector<64x16xf32>
    %c2_i32 = arith.constant 2 : i32
    %46 = vector.broadcast %c2_i32 : i32 to vector<64x16xi32>
    %47 = arith.cmpi sge, %31, %46 : vector<64x16xi32>
    %c2_i32_19 = arith.constant 2 : i32
    %48 = tpu.dynamic_rotate %29 by %c2_i32_19 dim 0 : vector<64x16xf32>, i32 -> vector<64x16xf32>
    %cst_20 = arith.constant 0.000000e+00 : f32
    %49 = vector.broadcast %cst_20 : f32 to vector<64x16xf32>
    %50 = arith.select %47, %48, %49 : vector<64x16xi1>, vector<64x16xf32>
    %c1 = arith.constant 1 : index
    %c0_21 = arith.constant 0 : index
    %c0_22 = arith.constant 0 : index
    %51 = vector.load %arg5[%c1, %c0_21, %c0_22] : memref<4x1x16xf32, #tpu.memory_space<vmem>>, vector<1x1x16xf32>
    %52 = vector.shape_cast %51 : vector<1x1x16xf32> to vector<1x16xf32>
    %53 = vector.broadcast %52 : vector<1x16xf32> to vector<64x16xf32>
    %54 = arith.mulf %50, %53 : vector<64x16xf32>
    %55 = arith.addf %45, %54 : vector<64x16xf32>
    %c3_i32 = arith.constant 3 : i32
    %56 = vector.broadcast %c3_i32 : i32 to vector<64x16xi32>
    %57 = arith.cmpi sge, %31, %56 : vector<64x16xi32>
    %c3_i32_23 = arith.constant 3 : i32
    %58 = tpu.dynamic_rotate %29 by %c3_i32_23 dim 0 : vector<64x16xf32>, i32 -> vector<64x16xf32>
    %cst_24 = arith.constant 0.000000e+00 : f32
    %59 = vector.broadcast %cst_24 : f32 to vector<64x16xf32>
    %60 = arith.select %57, %58, %59 : vector<64x16xi1>, vector<64x16xf32>
    %c0_25 = arith.constant 0 : index
    %c0_26 = arith.constant 0 : index
    %c0_27 = arith.constant 0 : index
    %61 = vector.load %arg5[%c0_25, %c0_26, %c0_27] : memref<4x1x16xf32, #tpu.memory_space<vmem>>, vector<1x1x16xf32>
    %62 = vector.shape_cast %61 : vector<1x1x16xf32> to vector<1x16xf32>
    %63 = vector.broadcast %62 : vector<1x16xf32> to vector<64x16xf32>
    %64 = arith.mulf %60, %63 : vector<64x16xf32>
    %65 = arith.addf %55, %64 : vector<64x16xf32>
    %c0_28 = arith.constant 0 : index
    %c0_29 = arith.constant 0 : index
    %66 = vector.load %arg6[%c0_28, %c0_29] : memref<1x16xf32, #tpu.memory_space<vmem>>, vector<1x16xf32>
    %67 = vector.broadcast %66 : vector<1x16xf32> to vector<64x16xf32>
    %68 = arith.addf %65, %67 : vector<64x16xf32>
    %cst_30 = arith.constant 0.000000e+00 : f32
    %69 = vector.broadcast %cst_30 : f32 to vector<64x16xf32>
    %70 = arith.subf %69, %68 : vector<64x16xf32>
    %71 = math.exp %70 : vector<64x16xf32>
    %cst_31 = arith.constant 1.000000e+00 : f32
    %72 = vector.broadcast %cst_31 : f32 to vector<64x16xf32>
    %73 = arith.addf %72, %71 : vector<64x16xf32>
    %74 = tpu.reciprocal %73 {approx = true} : vector<64x16xf32> -> vector<64x16xf32>
    %75 = arith.mulf %68, %74 : vector<64x16xf32>
    %76 = arith.truncf %75 : vector<64x16xf32> to vector<64x16xbf16>
    %c0_32 = arith.constant 0 : index
    %c0_33 = arith.constant 0 : index
    %77 = vector.load %arg7[%c0_32, %c0_33] : memref<16x160xbf16, #tpu.memory_space<vmem>>, vector<16x160xbf16>
    %cst_34 = arith.constant dense<0.000000e+00> : vector<64x160xf32>
    %78 = tpu.matmul %76, %77, %cst_34 {dimension_numbers = #tpu.dot_dimension_numbers<[1], [0], [0], [1], [0, 0, 1, 1], [], []>} : vector<64x16xbf16>, vector<16x160xbf16>, vector<64x160xf32> -> vector<64x160xf32>
    %c0_35 = arith.constant 0 : index
    %c0_36 = arith.constant 0 : index
    %79 = vector.load %arg8[%c0_35, %c0_36] : memref<1x160xf32, #tpu.memory_space<vmem>>, vector<1x160xf32>
    %80 = vector.broadcast %79 : vector<1x160xf32> to vector<64x160xf32>
    %81 = arith.addf %78, %80 : vector<64x160xf32>
    %82 = vector.extract_strided_slice %81 {offsets = [0, 0], sizes = [64, 16], strides = [1, 1]} : vector<64x160xf32> to vector<64x16xf32>
    %cst_37 = arith.constant 0.000000e+00 : f32
    %83 = vector.broadcast %cst_37 : f32 to vector<64x16xf32>
    %84 = arith.maximumf %82, %83 : vector<64x16xf32>
    %85 = math.absf %82 : vector<64x16xf32>
    %cst_38 = arith.constant 0.000000e+00 : f32
    %86 = vector.broadcast %cst_38 : f32 to vector<64x16xf32>
    %87 = arith.subf %86, %85 : vector<64x16xf32>
    %88 = math.exp %87 : vector<64x16xf32>
    %cst_39 = arith.constant 1.000000e+00 : f32
    %89 = vector.broadcast %cst_39 : f32 to vector<64x16xf32>
    %90 = arith.addf %89, %88 : vector<64x16xf32>
    %91 = math.log %90 : vector<64x16xf32>
    %92 = arith.addf %84, %91 : vector<64x16xf32>
    %c0_40 = arith.constant 0 : index
    %c0_41 = arith.constant 0 : index
    %93 = vector.load %arg19[%c0_40, %c0_41] : memref<64x16xf32, #tpu.memory_space<vmem>>, vector<64x16xf32>
    tpu.vector_store %arg19[%c0_40, %c0_41], %92 {strides = array<i32>} : memref<64x16xf32, #tpu.memory_space<vmem>>, vector<64x16xf32>,
    %94 = arith.mulf %92, %75 : vector<64x16xf32>
    %c0_42 = arith.constant 0 : index
    %c0_43 = arith.constant 0 : index
    %95 = vector.load %arg20[%c0_42, %c0_43] : memref<64x16xf32, #tpu.memory_space<vmem>>, vector<64x16xf32>
    tpu.vector_store %arg20[%c0_42, %c0_43], %94 {strides = array<i32>} : memref<64x16xf32, #tpu.memory_space<vmem>>, vector<64x16xf32>,
    %96 = vector.extract_strided_slice %81 {offsets = [0, 128], sizes = [64, 32], strides = [1, 1]} : vector<64x160xf32> to vector<64x32xf32>
    %c0_44 = arith.constant 0 : index
    %c0_45 = arith.constant 0 : index
    %97 = vector.load %arg21[%c0_44, %c0_45] : memref<64x32xf32, #tpu.memory_space<vmem>>, vector<64x32xf32>
    tpu.vector_store %arg21[%c0_44, %c0_45], %96 {strides = array<i32>} : memref<64x32xf32, #tpu.memory_space<vmem>>, vector<64x32xf32>,
    %98 = tpu.iota {dimensions = array<i32: 0>} : vector<32x256xi32>
    %c1_i32_46 = arith.constant 1 : i32
    %99 = vector.broadcast %c1_i32_46 : i32 to vector<32x256xi32>
    %100 = arith.cmpi sge, %98, %99 : vector<32x256xi32>
    %c2_i32_47 = arith.constant 2 : i32
    %101 = vector.broadcast %c2_i32_47 : i32 to vector<32x256xi32>
    %102 = arith.cmpi sge, %98, %101 : vector<32x256xi32>
    %c4_i32 = arith.constant 4 : i32
    %103 = vector.broadcast %c4_i32 : i32 to vector<32x256xi32>
    %104 = arith.cmpi sge, %98, %103 : vector<32x256xi32>
    %c8_i32 = arith.constant 8 : i32
    %105 = vector.broadcast %c8_i32 : i32 to vector<32x256xi32>
    %106 = arith.cmpi sge, %98, %105 : vector<32x256xi32>
    %c16_i32 = arith.constant 16 : i32
    %107 = vector.broadcast %c16_i32 : i32 to vector<32x256xi32>
    %108 = arith.cmpi sge, %98, %107 : vector<32x256xi32>
    %c0_48 = arith.constant 0 : index
    %c0_49 = arith.constant 0 : index
    %109 = vector.load %arg9[%c0_48, %c0_49] : memref<1x256xf32, #tpu.memory_space<vmem>>, vector<1x256xf32>
    %c0_50 = arith.constant 0 : index
    %c0_51 = arith.constant 0 : index
    %110 = vector.load %arg14[%c0_50, %c0_51] : memref<16x256xbf16, #tpu.memory_space<vmem>>, vector<16x256xbf16>
    %c0_52 = arith.constant 0 : index
    %c0_53 = arith.constant 0 : index
    %111 = vector.load %arg15[%c0_52, %c0_53] : memref<32x512xbf16, #tpu.memory_space<vmem>>, vector<32x512xbf16>
    %c0_54 = arith.constant 0 : index
    %c0_55 = arith.constant 0 : index
    %112 = vector.load %arg16[%c0_54, %c0_55] : memref<256x16xbf16, #tpu.memory_space<vmem>>, vector<256x16xbf16>
    %cst_56 = arith.constant 0.000000e+00 : f32
    %113 = vector.broadcast %cst_56 : f32 to vector<1x256xf32>
    %c0_i32 = arith.constant 0 : i32
    %c2_i32_57 = arith.constant 2 : i32
    %114 = arith.addi %c0_i32, %c2_i32_57 : i32
    %c1_i32_58 = arith.constant 1 : i32
    %115 = scf.for %arg23 = %c0_i32 to %114 step %c1_i32_58 iter_args(%arg24 = %113) -> (vector<1x256xf32>)  : i32 {
      %c32_i32 = arith.constant 32 : i32
      %169 = arith.muli %arg23, %c32_i32 : i32
      %170 = tpu.assume_multiple %169, 32 : i32
      %171 = arith.index_cast %170 : i32 to index
      %c0_88 = arith.constant 0 : index
      %172 = vector.load %arg19[%171, %c0_88] : memref<64x16xf32, #tpu.memory_space<vmem>>, vector<32x16xf32>
      %173 = arith.index_cast %170 : i32 to index
      %c0_89 = arith.constant 0 : index
      %174 = vector.load %arg20[%173, %c0_89] : memref<64x16xf32, #tpu.memory_space<vmem>>, vector<32x16xf32>
      %175 = arith.index_cast %170 : i32 to index
      %c0_90 = arith.constant 0 : index
      %176 = vector.load %arg21[%175, %c0_90] : memref<64x32xf32, #tpu.memory_space<vmem>>, vector<32x32xf32>
      %177 = tpu.concatenate %172, %174 in 0 : vector<32x16xf32>, vector<32x16xf32> -> vector<64x16xf32>
      %178 = arith.truncf %177 : vector<64x16xf32> to vector<64x16xbf16>
      %cst_91 = arith.constant dense<0.000000e+00> : vector<64x256xf32>
      %179 = tpu.matmul %178, %110, %cst_91 {dimension_numbers = #tpu.dot_dimension_numbers<[1], [0], [0], [1], [0, 0, 1, 1], [], []>} : vector<64x16xbf16>, vector<16x256xbf16>, vector<64x256xf32> -> vector<64x256xf32>
      %180 = vector.extract_strided_slice %179 {offsets = [0, 0], sizes = [32, 256], strides = [1, 1]} : vector<64x256xf32> to vector<32x256xf32>
      %181 = vector.broadcast %109 : vector<1x256xf32> to vector<32x256xf32>
      %182 = arith.mulf %180, %181 : vector<32x256xf32>
      %183 = math.exp %182 : vector<32x256xf32>
      %184 = arith.truncf %176 : vector<32x32xf32> to vector<32x32xbf16>
      %cst_92 = arith.constant dense<0.000000e+00> : vector<32x512xf32>
      %185 = tpu.matmul %184, %111, %cst_92 {dimension_numbers = #tpu.dot_dimension_numbers<[1], [0], [0], [1], [0, 0, 1, 1], [], []>} : vector<32x32xbf16>, vector<32x512xbf16>, vector<32x512xf32> -> vector<32x512xf32>
      %186 = vector.extract_strided_slice %185 {offsets = [0, 0], sizes = [32, 256], strides = [1, 1]} : vector<32x512xf32> to vector<32x256xf32>
      %187 = vector.extract_strided_slice %185 {offsets = [0, 256], sizes = [32, 256], strides = [1, 1]} : vector<32x512xf32> to vector<32x256xf32>
      %188 = vector.extract_strided_slice %179 {offsets = [32, 0], sizes = [32, 256], strides = [1, 1]} : vector<64x256xf32> to vector<32x256xf32>
      %189 = arith.mulf %188, %186 : vector<32x256xf32>
      %c1_i32_93 = arith.constant 1 : i32
      %190 = tpu.dynamic_rotate %183 by %c1_i32_93 dim 0 : vector<32x256xf32>, i32 -> vector<32x256xf32>
      %cst_94 = arith.constant 1.000000e+00 : f32
      %191 = vector.broadcast %cst_94 : f32 to vector<32x256xf32>
      %192 = arith.select %100, %190, %191 : vector<32x256xi1>, vector<32x256xf32>
      %c1_i32_95 = arith.constant 1 : i32
      %193 = tpu.dynamic_rotate %189 by %c1_i32_95 dim 0 : vector<32x256xf32>, i32 -> vector<32x256xf32>
      %cst_96 = arith.constant 0.000000e+00 : f32
      %194 = vector.broadcast %cst_96 : f32 to vector<32x256xf32>
      %195 = arith.select %100, %193, %194 : vector<32x256xi1>, vector<32x256xf32>
      %196 = arith.mulf %183, %195 : vector<32x256xf32>
      %197 = arith.addf %196, %189 : vector<32x256xf32>
      %198 = arith.mulf %183, %192 : vector<32x256xf32>
      %c2_i32_97 = arith.constant 2 : i32
      %199 = tpu.dynamic_rotate %198 by %c2_i32_97 dim 0 : vector<32x256xf32>, i32 -> vector<32x256xf32>
      %cst_98 = arith.constant 1.000000e+00 : f32
      %200 = vector.broadcast %cst_98 : f32 to vector<32x256xf32>
      %201 = arith.select %102, %199, %200 : vector<32x256xi1>, vector<32x256xf32>
      %c2_i32_99 = arith.constant 2 : i32
      %202 = tpu.dynamic_rotate %197 by %c2_i32_99 dim 0 : vector<32x256xf32>, i32 -> vector<32x256xf32>
      %cst_100 = arith.constant 0.000000e+00 : f32
      %203 = vector.broadcast %cst_100 : f32 to vector<32x256xf32>
      %204 = arith.select %102, %202, %203 : vector<32x256xi1>, vector<32x256xf32>
      %205 = arith.mulf %198, %204 : vector<32x256xf32>
      %206 = arith.addf %205, %197 : vector<32x256xf32>
      %207 = arith.mulf %198, %201 : vector<32x256xf32>
      %c4_i32_101 = arith.constant 4 : i32
      %208 = tpu.dynamic_rotate %207 by %c4_i32_101 dim 0 : vector<32x256xf32>, i32 -> vector<32x256xf32>
      %cst_102 = arith.constant 1.000000e+00 : f32
      %209 = vector.broadcast %cst_102 : f32 to vector<32x256xf32>
      %210 = arith.select %104, %208, %209 : vector<32x256xi1>, vector<32x256xf32>
      %c4_i32_103 = arith.constant 4 : i32
      %211 = tpu.dynamic_rotate %206 by %c4_i32_103 dim 0 : vector<32x256xf32>, i32 -> vector<32x256xf32>
      %cst_104 = arith.constant 0.000000e+00 : f32
      %212 = vector.broadcast %cst_104 : f32 to vector<32x256xf32>
      %213 = arith.select %104, %211, %212 : vector<32x256xi1>, vector<32x256xf32>
      %214 = arith.mulf %207, %213 : vector<32x256xf32>
      %215 = arith.addf %214, %206 : vector<32x256xf32>
      %216 = arith.mulf %207, %210 : vector<32x256xf32>
      %c8_i32_105 = arith.constant 8 : i32
      %217 = tpu.dynamic_rotate %216 by %c8_i32_105 dim 0 : vector<32x256xf32>, i32 -> vector<32x256xf32>
      %cst_106 = arith.constant 1.000000e+00 : f32
      %218 = vector.broadcast %cst_106 : f32 to vector<32x256xf32>
      %219 = arith.select %106, %217, %218 : vector<32x256xi1>, vector<32x256xf32>
      %c8_i32_107 = arith.constant 8 : i32
      %220 = tpu.dynamic_rotate %215 by %c8_i32_107 dim 0 : vector<32x256xf32>, i32 -> vector<32x256xf32>
      %cst_108 = arith.constant 0.000000e+00 : f32
      %221 = vector.broadcast %cst_108 : f32 to vector<32x256xf32>
      %222 = arith.select %106, %220, %221 : vector<32x256xi1>, vector<32x256xf32>
      %223 = arith.mulf %216, %222 : vector<32x256xf32>
      %224 = arith.addf %223, %215 : vector<32x256xf32>
      %225 = arith.mulf %216, %219 : vector<32x256xf32>
      %c16_i32_109 = arith.constant 16 : i32
      %226 = tpu.dynamic_rotate %225 by %c16_i32_109 dim 0 : vector<32x256xf32>, i32 -> vector<32x256xf32>
      %cst_110 = arith.constant 1.000000e+00 : f32
      %227 = vector.broadcast %cst_110 : f32 to vector<32x256xf32>
      %228 = arith.select %108, %226, %227 : vector<32x256xi1>, vector<32x256xf32>
      %c16_i32_111 = arith.constant 16 : i32
      %229 = tpu.dynamic_rotate %224 by %c16_i32_111 dim 0 : vector<32x256xf32>, i32 -> vector<32x256xf32>
      %cst_112 = arith.constant 0.000000e+00 : f32
      %230 = vector.broadcast %cst_112 : f32 to vector<32x256xf32>
      %231 = arith.select %108, %229, %230 : vector<32x256xi1>, vector<32x256xf32>
      %232 = arith.mulf %225, %231 : vector<32x256xf32>
      %233 = arith.addf %232, %224 : vector<32x256xf32>
      %234 = arith.mulf %225, %228 : vector<32x256xf32>
      %235 = vector.broadcast %arg24 : vector<1x256xf32> to vector<32x256xf32>
      %236 = arith.mulf %234, %235 : vector<32x256xf32>
      %237 = arith.addf %236, %233 : vector<32x256xf32>
      %238 = arith.mulf %237, %187 : vector<32x256xf32>
      %239 = arith.truncf %238 : vector<32x256xf32> to vector<32x256xbf16>
      %cst_113 = arith.constant dense<0.000000e+00> : vector<32x16xf32>
      %240 = tpu.matmul %239, %112, %cst_113 {dimension_numbers = #tpu.dot_dimension_numbers<[1], [0], [0], [1], [0, 0, 1, 1], [], []>} : vector<32x256xbf16>, vector<256x16xbf16>, vector<32x16xf32> -> vector<32x16xf32>
      %241 = arith.index_cast %170 : i32 to index
      %c0_114 = arith.constant 0 : index
      %242 = vector.load %arg22[%241, %c0_114] : memref<64x16xf32, #tpu.memory_space<vmem>>, vector<32x16xf32>
      tpu.vector_store %arg22[%241, %c0_114], %240 {strides = array<i32>} : memref<64x16xf32, #tpu.memory_space<vmem>>, vector<32x16xf32>,
      %243 = vector.extract_strided_slice %237 {offsets = [31, 0], sizes = [1, 256], strides = [1, 1]} : vector<32x256xf32> to vector<1x256xf32>
      scf.yield %243 : vector<1x256xf32>
    }
    %c2_i32_59 = arith.constant 2 : i32
    %c0_60 = arith.constant 0 : index
    %c0_61 = arith.constant 0 : index
    %116 = vector.load %arg22[%c0_60, %c0_61] : memref<64x16xf32, #tpu.memory_space<vmem>>, vector<64x16xf32>
    %c0_62 = arith.constant 0 : index
    %c0_63 = arith.constant 0 : index
    %117 = vector.load %arg10[%c0_62, %c0_63] : memref<1x16xf32, #tpu.memory_space<vmem>>, vector<1x16xf32>
    %118 = vector.broadcast %117 : vector<1x16xf32> to vector<64x16xf32>
    %119 = arith.mulf %75, %118 : vector<64x16xf32>
    %120 = arith.addf %116, %119 : vector<64x16xf32>
    %cst_64 = arith.constant 0.000000e+00 : f32
    %121 = vector.broadcast %cst_64 : f32 to vector<64x16xf32>
    %122 = arith.subf %121, %30 : vector<64x16xf32>
    %123 = math.exp %122 : vector<64x16xf32>
    %cst_65 = arith.constant 1.000000e+00 : f32
    %124 = vector.broadcast %cst_65 : f32 to vector<64x16xf32>
    %125 = arith.addf %124, %123 : vector<64x16xf32>
    %126 = tpu.reciprocal %125 {approx = true} : vector<64x16xf32> -> vector<64x16xf32>
    %127 = arith.mulf %30, %126 : vector<64x16xf32>
    %128 = arith.mulf %120, %127 : vector<64x16xf32>
    %129 = arith.truncf %128 : vector<64x16xf32> to vector<64x16xbf16>
    %c0_66 = arith.constant 0 : index
    %c0_67 = arith.constant 0 : index
    %130 = vector.load %arg11[%c0_66, %c0_67] : memref<16x8xbf16, #tpu.memory_space<vmem>>, vector<16x8xbf16>
    %cst_68 = arith.constant dense<0.000000e+00> : vector<64x8xf32>
    %131 = tpu.matmul %129, %130, %cst_68 {dimension_numbers = #tpu.dot_dimension_numbers<[1], [0], [0], [1], [0, 0, 1, 1], [], []>} : vector<64x16xbf16>, vector<16x8xbf16>, vector<64x8xf32> -> vector<64x8xf32>
    %c0_69 = arith.constant 0 : index
    %c0_70 = arith.constant 0 : index
    %132 = memref.load %arg17[%c0_69, %c0_70] : memref<1x1xf32, #tpu.memory_space<smem>>
    %133 = vector.broadcast %132 : f32 to vector<64x8xf32>
    %134 = arith.mulf %133, %1 : vector<64x8xf32>
    %135 = arith.addf %131, %134 : vector<64x8xf32>
    %cst_71 = arith.constant dense<0.000000e+00> : vector<64xf32>
    %136 = vector.multi_reduction <add>, %135, %cst_71 [1] : vector<64x8xf32> to vector<64xf32>
    %137 = vector.shape_cast %136 : vector<64xf32> to vector<64x1xf32>
    %cst_72 = arith.constant 8.000000e+00 : f32
    %138 = vector.broadcast %cst_72 : f32 to vector<64x1xf32>
    %139 = arith.divf %137, %138 : vector<64x1xf32>
    %140 = vector.broadcast %139 : vector<64x1xf32> to vector<64x8xf32>
    %141 = arith.subf %135, %140 : vector<64x8xf32>
    %142 = arith.mulf %141, %141 : vector<64x8xf32>
    %cst_73 = arith.constant dense<0.000000e+00> : vector<64xf32>
    %143 = vector.multi_reduction <add>, %142, %cst_73 [1] : vector<64x8xf32> to vector<64xf32>
    %144 = vector.shape_cast %143 : vector<64xf32> to vector<64x1xf32>
    %cst_74 = arith.constant 8.000000e+00 : f32
    %145 = vector.broadcast %cst_74 : f32 to vector<64x1xf32>
    %146 = arith.divf %144, %145 : vector<64x1xf32>
    %147 = vector.broadcast %139 : vector<64x1xf32> to vector<64x8xf32>
    %148 = arith.subf %135, %147 : vector<64x8xf32>
    %cst_75 = arith.constant 9.99999974E-6 : f32
    %149 = vector.broadcast %cst_75 : f32 to vector<64x1xf32>
    %150 = arith.addf %146, %149 : vector<64x1xf32>
    %151 = math.rsqrt %150 : vector<64x1xf32>
    %152 = vector.broadcast %151 : vector<64x1xf32> to vector<64x8xf32>
    %153 = arith.mulf %148, %152 : vector<64x8xf32>
    %c0_76 = arith.constant 0 : index
    %c0_77 = arith.constant 0 : index
    %154 = vector.load %arg2[%c0_76, %c0_77] : memref<1x8xf32, #tpu.memory_space<vmem>>, vector<1x8xf32>
    %155 = vector.broadcast %154 : vector<1x8xf32> to vector<64x8xf32>
    %156 = arith.mulf %153, %155 : vector<64x8xf32>
    %c0_78 = arith.constant 0 : index
    %c0_79 = arith.constant 0 : index
    %157 = vector.load %arg3[%c0_78, %c0_79] : memref<1x8xf32, #tpu.memory_space<vmem>>, vector<1x8xf32>
    %158 = vector.broadcast %157 : vector<1x8xf32> to vector<64x8xf32>
    %159 = arith.addf %156, %158 : vector<64x8xf32>
    %160 = arith.truncf %159 : vector<64x8xf32> to vector<64x8xbf16>
    %c0_80 = arith.constant 0 : index
    %c0_81 = arith.constant 0 : index
    %161 = vector.load %arg12[%c0_80, %c0_81] : memref<8x128xbf16, #tpu.memory_space<vmem>>, vector<8x128xbf16>
    %cst_82 = arith.constant dense<0.000000e+00> : vector<64x128xf32>
    %162 = tpu.matmul %160, %161, %cst_82 {dimension_numbers = #tpu.dot_dimension_numbers<[1], [0], [0], [1], [0, 0, 1, 1], [], []>} : vector<64x8xbf16>, vector<8x128xbf16>, vector<64x128xf32> -> vector<64x128xf32>
    %c0_83 = arith.constant 0 : index
    %c0_84 = arith.constant 0 : index
    %163 = vector.load %arg13[%c0_83, %c0_84] : memref<1x128xf32, #tpu.memory_space<vmem>>, vector<1x128xf32>
    %164 = vector.broadcast %163 : vector<1x128xf32> to vector<64x128xf32>
    %165 = arith.addf %162, %164 : vector<64x128xf32>
    %c0_85 = arith.constant 0 : index
    %c0_86 = arith.constant 0 : index
    %c0_87 = arith.constant 0 : index
    %166 = vector.load %arg18[%c0_85, %c0_86, %c0_87] : memref<1x64x128xf32, #tpu.memory_space<vmem>>, vector<1x64x128xf32>
    %167 = vector.shape_cast %166 : vector<1x64x128xf32> to vector<64x128xf32>
    %168 = vector.shape_cast %165 : vector<64x128xf32> to vector<1x64x128xf32>
    tpu.vector_store %arg18[%c0_85, %c0_86, %c0_87], %168 {strides = array<i32>} : memref<1x64x128xf32, #tpu.memory_space<vmem>>, vector<1x64x128xf32>,
    return
  }
  func.func @transform_0(%arg0: i32) -> (i32, i32, i32) {
    %c0_i32 = arith.constant 0 : i32
    %c0_i32_0 = arith.constant 0 : i32
    %c0_i32_1 = arith.constant 0 : i32
    return %arg0, %c0_i32, %c0_i32_0 : i32, i32, i32
  }
  func.func @transform_1(%arg0: i32) -> (i32, i32) {
    %c0_i32 = arith.constant 0 : i32
    %c0_i32_0 = arith.constant 0 : i32
    %c0_i32_1 = arith.constant 0 : i32
    return %c0_i32, %c0_i32_0 : i32, i32
  }
  func.func @transform_2(%arg0: i32) -> (i32, i32) {
    %c0_i32 = arith.constant 0 : i32
    %c0_i32_0 = arith.constant 0 : i32
    %c0_i32_1 = arith.constant 0 : i32
    return %c0_i32, %c0_i32_0 : i32, i32
  }
  func.func @transform_3(%arg0: i32) -> (i32, i32) {
    %c0_i32 = arith.constant 0 : i32
    %c0_i32_0 = arith.constant 0 : i32
    %c0_i32_1 = arith.constant 0 : i32
    return %c0_i32, %c0_i32_0 : i32, i32
  }
  func.func @transform_4(%arg0: i32) -> (i32, i32, i32) {
    %c0_i32 = arith.constant 0 : i32
    %c0_i32_0 = arith.constant 0 : i32
    %c0_i32_1 = arith.constant 0 : i32
    %c0_i32_2 = arith.constant 0 : i32
    return %c0_i32, %c0_i32_0, %c0_i32_1 : i32, i32, i32
  }
  func.func @transform_5(%arg0: i32) -> (i32, i32) {
    %c0_i32 = arith.constant 0 : i32
    %c0_i32_0 = arith.constant 0 : i32
    %c0_i32_1 = arith.constant 0 : i32
    return %c0_i32, %c0_i32_0 : i32, i32
  }
  func.func @transform_6(%arg0: i32) -> (i32, i32) {
    %c0_i32 = arith.constant 0 : i32
    %c0_i32_0 = arith.constant 0 : i32
    %c0_i32_1 = arith.constant 0 : i32
    return %c0_i32, %c0_i32_0 : i32, i32
  }
  func.func @transform_7(%arg0: i32) -> (i32, i32) {
    %c0_i32 = arith.constant 0 : i32
    %c0_i32_0 = arith.constant 0 : i32
    %c0_i32_1 = arith.constant 0 : i32
    return %c0_i32, %c0_i32_0 : i32, i32
  }
  func.func @transform_8(%arg0: i32) -> (i32, i32) {
    %c0_i32 = arith.constant 0 : i32
    %c0_i32_0 = arith.constant 0 : i32
    %c0_i32_1 = arith.constant 0 : i32
    return %c0_i32, %c0_i32_0 : i32, i32
  }
  func.func @transform_9(%arg0: i32) -> (i32, i32) {
    %c0_i32 = arith.constant 0 : i32
    %c0_i32_0 = arith.constant 0 : i32
    %c0_i32_1 = arith.constant 0 : i32
    return %c0_i32, %c0_i32_0 : i32, i32
  }
  func.func @transform_10(%arg0: i32) -> (i32, i32) {
    %c0_i32 = arith.constant 0 : i32
    %c0_i32_0 = arith.constant 0 : i32
    %c0_i32_1 = arith.constant 0 : i32
    return %c0_i32, %c0_i32_0 : i32, i32
  }
  func.func @transform_11(%arg0: i32) -> (i32, i32) {
    %c0_i32 = arith.constant 0 : i32
    %c0_i32_0 = arith.constant 0 : i32
    %c0_i32_1 = arith.constant 0 : i32
    return %c0_i32, %c0_i32_0 : i32, i32
  }
  func.func @transform_12(%arg0: i32) -> (i32, i32) {
    %c0_i32 = arith.constant 0 : i32
    %c0_i32_0 = arith.constant 0 : i32
    %c0_i32_1 = arith.constant 0 : i32
    return %c0_i32, %c0_i32_0 : i32, i32
  }
  func.func @transform_13(%arg0: i32) -> (i32, i32) {
    %c0_i32 = arith.constant 0 : i32
    %c0_i32_0 = arith.constant 0 : i32
    %c0_i32_1 = arith.constant 0 : i32
    return %c0_i32, %c0_i32_0 : i32, i32
  }
  func.func @transform_14(%arg0: i32) -> (i32, i32) {
    %c0_i32 = arith.constant 0 : i32
    %c0_i32_0 = arith.constant 0 : i32
    %c0_i32_1 = arith.constant 0 : i32
    return %c0_i32, %c0_i32_0 : i32, i32
  }
  func.func @transform_15(%arg0: i32) -> (i32, i32) {
    %c0_i32 = arith.constant 0 : i32
    %c0_i32_0 = arith.constant 0 : i32
    %c0_i32_1 = arith.constant 0 : i32
    return %c0_i32, %c0_i32_0 : i32, i32
  }
  func.func @transform_16(%arg0: i32) -> (i32, i32) {
    %c0_i32 = arith.constant 0 : i32
    %c0_i32_0 = arith.constant 0 : i32
    %c0_i32_1 = arith.constant 0 : i32
    return %c0_i32, %c0_i32_0 : i32, i32
  }
  func.func @transform_17(%arg0: i32) -> (i32, i32, i32) {
    %c0_i32 = arith.constant 0 : i32
    %c0_i32_0 = arith.constant 0 : i32
    %c0_i32_1 = arith.constant 0 : i32
    return %arg0, %c0_i32, %c0_i32_0 : i32, i32, i32
  }
}

</mosaic_0001>

<llo_original>
// kernel: mamba_layer_forward.1
$region0: #{mamba_layer_forward.1}
  #allocation0 [shape = 'u32[]', space=smem, size = 0x4, offset = 0x4, fixed_abs, tag = 'smem constant byte address 0x4 - core index']
  #allocation1 [shape = 'u32[72,128]{1,0:T(1,128)}', space=vmem, size = 0x9000, scoped, tag = 'internal scratch']
  #allocation2 [shape = 'f32[64,16]{1,0:T(8,128)}', space=vmem, size = 0x8000, scoped, tag = 'scratch operand']
  #allocation3 [shape = 'f32[64,16]{1,0:T(8,128)}', space=vmem, size = 0x8000, scoped, tag = 'scratch operand']
  #allocation4 [shape = 'f32[64,32]{1,0:T(8,128)}', space=vmem, size = 0x8000, scoped, tag = 'scratch operand']
  #allocation5 [shape = 'f32[64,16]{1,0:T(8,128)}', space=vmem, size = 0x8000, scoped, tag = 'scratch operand']
  #allocation6 [shape = 'f32[1,1]{1,0:T(1,128)S(6)}', space=smem, size = 0x200, scoped, tag = 'scoped memory for mamba_layer_forward.1']
  %s0 = inlined_call_operand.vmem [shape: f32[2,64,8], index: 0, kind: input, shape index: {}]
  %s1 = inlined_call_operand.vmem [shape: f32[1,8], index: 1, kind: input, shape index: {}]
  %s2 = inlined_call_operand.vmem [shape: f32[1,8], index: 2, kind: input, shape index: {}]
  %s3 = inlined_call_operand.vmem [shape: bf16[8,144], index: 3, kind: input, shape index: {}]
  %s4 = inlined_call_operand.vmem [shape: f32[4,1,16], index: 4, kind: input, shape index: {}]
  %s5 = inlined_call_operand.vmem [shape: f32[1,16], index: 5, kind: input, shape index: {}]
  %s6 = inlined_call_operand.vmem [shape: bf16[16,160], index: 6, kind: input, shape index: {}]
  %s7 = inlined_call_operand.vmem [shape: f32[1,160], index: 7, kind: input, shape index: {}]
  %s8 = inlined_call_operand.vmem [shape: f32[1,256], index: 8, kind: input, shape index: {}]
  %s9 = inlined_call_operand.vmem [shape: f32[1,16], index: 9, kind: input, shape index: {}]
  %s10 = inlined_call_operand.vmem [shape: bf16[16,8], index: 10, kind: input, shape index: {}]
  %s11 = inlined_call_operand.vmem [shape: bf16[8,128], index: 11, kind: input, shape index: {}]
  %s12 = inlined_call_operand.vmem [shape: f32[1,128], index: 12, kind: input, shape index: {}]
  %s13 = inlined_call_operand.vmem [shape: bf16[16,256], index: 13, kind: input, shape index: {}]
  %s14 = inlined_call_operand.vmem [shape: bf16[32,512], index: 14, kind: input, shape index: {}]
  %s15 = inlined_call_operand.vmem [shape: bf16[256,16], index: 15, kind: input, shape index: {}]
  %s16 = inlined_call_operand.<no memory space> [shape: f32[1,1], index: 16, kind: input, shape index: {}]
  %s17 = inlined_call_operand.vmem [shape: f32[2,64,128], index: 17, kind: output, shape index: {}]
  %s18 = sld [smem:[#allocation0]]
  $region108: #{mamba_layer_forward.1} parent=0
    _
  %s20 = ssub.s32 1, %s18
  %s21 = scalar_select 0, %s20, %s18
  %22 = sst [smem:[#allocation6]] %s16
  loop: start=0, step=1, limit=4
  $region2: #{mamba_layer_forward.1} parent=0 // loop_pre_header
    _
  $region3: #{mamba_layer_forward.1} parent=0 // loop_header
    %s24 = sphi 0, %s28
    %p25 = scmp.ge.s32.totalorder %s24, 4
    %s34 = sphi 0, %s36
    %s37 = sphi 0, %s34
    %s38 = sphi 0, %s37
    %s54 = sphi 0, %s38
    %s58 = sphi 0, %s58
    %s60 = sphi 0, %s58
    %s61 = sphi 0, %s60
    %s75 = sphi 0, %s61
    %s79 = sphi 0, %s79
    %s81 = sphi 0, %s79
    %s82 = sphi 0, %s81
    %s96 = sphi 0, %s82
    %s100 = sphi 0, %s100
    %s102 = sphi 0, %s100
    %s103 = sphi 0, %s102
    %s117 = sphi 0, %s103
    %s121 = sphi 0, %s121
    %s123 = sphi 0, %s121
    %s124 = sphi 0, %s123
    %s138 = sphi 0, %s124
    %s142 = sphi 0, %s142
    %s144 = sphi 0, %s142
    %s145 = sphi 0, %s144
    %s159 = sphi 0, %s145
    %s163 = sphi 0, %s163
    %s165 = sphi 0, %s163
    %s166 = sphi 0, %s165
    %s180 = sphi 0, %s166
    %s184 = sphi 0, %s184
    %s186 = sphi 0, %s184
    %s187 = sphi 0, %s186
    %s201 = sphi 0, %s187
    %s205 = sphi 0, %s205
    %s207 = sphi 0, %s205
    %s208 = sphi 0, %s207
    %s222 = sphi 0, %s208
    %s226 = sphi 0, %s226
    %s228 = sphi 0, %s226
    %s229 = sphi 0, %s228
    %s243 = sphi 0, %s229
    %s247 = sphi 0, %s247
    %s249 = sphi 0, %s247
    %s250 = sphi 0, %s249
    %s264 = sphi 0, %s250
    %s268 = sphi 0, %s268
    %s270 = sphi 0, %s268
    %s271 = sphi 0, %s270
    %s285 = sphi 0, %s271
    %s289 = sphi 0, %s289
    %s291 = sphi 0, %s289
    %s292 = sphi 0, %s291
    %s306 = sphi 0, %s292
    %s310 = sphi 0, %s310
    %s312 = sphi 0, %s310
    %s313 = sphi 0, %s312
    %s327 = sphi 0, %s313
    %s331 = sphi 0, %s331
    %s333 = sphi 0, %s331
    %s334 = sphi 0, %s333
    %s348 = sphi 0, %s334
    %s352 = sphi 0, %s352
    %s354 = sphi 0, %s352
    %s355 = sphi 0, %s354
    %s369 = sphi 0, %s355
    %s373 = sphi 0, %s373
    %s375 = sphi 0, %s373
    %s376 = sphi 0, %s375
    %s390 = sphi 0, %s376
    %s396 = sphi 0, %s398
    %s399 = sphi 0, %s396
    %s400 = sphi 0, %s399
    %s416 = sphi 0, %s400
  $region4: #{mamba_layer_forward.1} parent=0 // loop_header_branch
    %27 = sbr.rel (%p25) target = $region8
  $region5: #{mamba_layer_forward.1} parent=0 // loop_body
    %s29 = ssub.s32 %s24, 1
    %s30 = ssub.s32 %s24, 2
    %s31 = sadd.s32 %s24, 1
    %s32 = ssub.s32 %s24, %s31
    %p33 = scmp.eq.s32.totalorder %s32, 0
    %s35 = sadd.s32 %s34, 1
    %s36 = scalar_select %p33, %s34, %s35
    %p39 = pneg %p33
    %p40 = scmp.eq.s32.totalorder %s24, 1
    %p41 = por %p39, %p40
    %p42 = scmp.ne.s32.totalorder %s34, %s37
    %p43 = scmp.eq.s32.totalorder %s24, 0
    %p44 = por %p42, %p43
    %p45 = scmp.ne.s32.totalorder %s34, %s37
    %p46 = scmp.eq.s32.totalorder %s29, 1
    %p47 = por %p45, %p46
    %p48 = scmp.ne.s32.totalorder %s37, %s38
    %p49 = scmp.eq.s32.totalorder %s29, 0
    %p50 = por %p48, %p49
    %p51 = scmp.ne.s32.totalorder %s37, %s38
    %p52 = scmp.eq.s32.totalorder %s30, 1
    %p53 = por %p51, %p52
    %p55 = scmp.ne.s32.totalorder %s38, %s54
    %p56 = scmp.eq.s32.totalorder %s30, 0
    %p57 = por %p55, %p56
    %s59 = sadd.s32 %s58, 1
    %p62 = scmp.eq.s32.totalorder %s24, 1
    %p63 = scmp.ne.s32.totalorder %s58, %s60
    %p64 = scmp.eq.s32.totalorder %s24, 0
    %p65 = por %p63, %p64
    %p66 = scmp.ne.s32.totalorder %s58, %s60
    %p67 = scmp.eq.s32.totalorder %s29, 1
    %p68 = por %p66, %p67
    %p69 = scmp.ne.s32.totalorder %s60, %s61
    %p70 = scmp.eq.s32.totalorder %s29, 0
    %p71 = por %p69, %p70
    %p72 = scmp.ne.s32.totalorder %s60, %s61
    %p73 = scmp.eq.s32.totalorder %s30, 1
    %p74 = por %p72, %p73
    %p76 = scmp.ne.s32.totalorder %s61, %s75
    %p77 = scmp.eq.s32.totalorder %s30, 0
    %p78 = por %p76, %p77
    %s80 = sadd.s32 %s79, 1
    %p83 = scmp.eq.s32.totalorder %s24, 1
    %p84 = scmp.ne.s32.totalorder %s79, %s81
    %p85 = scmp.eq.s32.totalorder %s24, 0
    %p86 = por %p84, %p85
    %p87 = scmp.ne.s32.totalorder %s79, %s81
    %p88 = scmp.eq.s32.totalorder %s29, 1
    %p89 = por %p87, %p88
    %p90 = scmp.ne.s32.totalorder %s81, %s82
    %p91 = scmp.eq.s32.totalorder %s29, 0
    %p92 = por %p90, %p91
    %p93 = scmp.ne.s32.totalorder %s81, %s82
    %p94 = scmp.eq.s32.totalorder %s30, 1
    %p95 = por %p93, %p94
    %p97 = scmp.ne.s32.totalorder %s82, %s96
    %p98 = scmp.eq.s32.totalorder %s30, 0
    %p99 = por %p97, %p98
    %s101 = sadd.s32 %s100, 1
    %p104 = scmp.eq.s32.totalorder %s24, 1
    %p105 = scmp.ne.s32.totalorder %s100, %s102
    %p106 = scmp.eq.s32.totalorder %s24, 0
    %p107 = por %p105, %p106
    %p108 = scmp.ne.s32.totalorder %s100, %s102
    %p109 = scmp.eq.s32.totalorder %s29, 1
    %p110 = por %p108, %p109
    %p111 = scmp.ne.s32.totalorder %s102, %s103
    %p112 = scmp.eq.s32.totalorder %s29, 0
    %p113 = por %p111, %p112
    %p114 = scmp.ne.s32.totalorder %s102, %s103
    %p115 = scmp.eq.s32.totalorder %s30, 1
    %p116 = por %p114, %p115
    %p118 = scmp.ne.s32.totalorder %s103, %s117
    %p119 = scmp.eq.s32.totalorder %s30, 0
    %p120 = por %p118, %p119
    %s122 = sadd.s32 %s121, 1
    %p125 = scmp.eq.s32.totalorder %s24, 1
    %p126 = scmp.ne.s32.totalorder %s121, %s123
    %p127 = scmp.eq.s32.totalorder %s24, 0
    %p128 = por %p126, %p127
    %p129 = scmp.ne.s32.totalorder %s121, %s123
    %p130 = scmp.eq.s32.totalorder %s29, 1
    %p131 = por %p129, %p130
    %p132 = scmp.ne.s32.totalorder %s123, %s124
    %p133 = scmp.eq.s32.totalorder %s29, 0
    %p134 = por %p132, %p133
    %p135 = scmp.ne.s32.totalorder %s123, %s124
    %p136 = scmp.eq.s32.totalorder %s30, 1
    %p137 = por %p135, %p136
    %p139 = scmp.ne.s32.totalorder %s124, %s138
    %p140 = scmp.eq.s32.totalorder %s30, 0
    %p141 = por %p139, %p140
    %s143 = sadd.s32 %s142, 1
    %p146 = scmp.eq.s32.totalorder %s24, 1
    %p147 = scmp.ne.s32.totalorder %s142, %s144
    %p148 = scmp.eq.s32.totalorder %s24, 0
    %p149 = por %p147, %p148
    %p150 = scmp.ne.s32.totalorder %s142, %s144
    %p151 = scmp.eq.s32.totalorder %s29, 1
    %p152 = por %p150, %p151
    %p153 = scmp.ne.s32.totalorder %s144, %s145
    %p154 = scmp.eq.s32.totalorder %s29, 0
    %p155 = por %p153, %p154
    %p156 = scmp.ne.s32.totalorder %s144, %s145
    %p157 = scmp.eq.s32.totalorder %s30, 1
    %p158 = por %p156, %p157
    %p160 = scmp.ne.s32.totalorder %s145, %s159
    %p161 = scmp.eq.s32.totalorder %s30, 0
    %p162 = por %p160, %p161
    %s164 = sadd.s32 %s163, 1
    %p167 = scmp.eq.s32.totalorder %s24, 1
    %p168 = scmp.ne.s32.totalorder %s163, %s165
    %p169 = scmp.eq.s32.totalorder %s24, 0
    %p170 = por %p168, %p169
    %p171 = scmp.ne.s32.totalorder %s163, %s165
    %p172 = scmp.eq.s32.totalorder %s29, 1
    %p173 = por %p171, %p172
    %p174 = scmp.ne.s32.totalorder %s165, %s166
    %p175 = scmp.eq.s32.totalorder %s29, 0
    %p176 = por %p174, %p175
    %p177 = scmp.ne.s32.totalorder %s165, %s166
    %p178 = scmp.eq.s32.totalorder %s30, 1
    %p179 = por %p177, %p178
    %p181 = scmp.ne.s32.totalorder %s166, %s180
    %p182 = scmp.eq.s32.totalorder %s30, 0
    %p183 = por %p181, %p182
    %s185 = sadd.s32 %s184, 1
    %p188 = scmp.eq.s32.totalorder %s24, 1
    %p189 = scmp.ne.s32.totalorder %s184, %s186
    %p190 = scmp.eq.s32.totalorder %s24, 0
    %p191 = por %p189, %p190
    %p192 = scmp.ne.s32.totalorder %s184, %s186
    %p193 = scmp.eq.s32.totalorder %s29, 1
    %p194 = por %p192, %p193
    %p195 = scmp.ne.s32.totalorder %s186, %s187
    %p196 = scmp.eq.s32.totalorder %s29, 0
    %p197 = por %p195, %p196
    %p198 = scmp.ne.s32.totalorder %s186, %s187
    %p199 = scmp.eq.s32.totalorder %s30, 1
    %p200 = por %p198, %p199
    %p202 = scmp.ne.s32.totalorder %s187, %s201
    %p203 = scmp.eq.s32.totalorder %s30, 0
    %p204 = por %p202, %p203
    %s206 = sadd.s32 %s205, 1
    %p209 = scmp.eq.s32.totalorder %s24, 1
    %p210 = scmp.ne.s32.totalorder %s205, %s207
    %p211 = scmp.eq.s32.totalorder %s24, 0
    %p212 = por %p210, %p211
    %p213 = scmp.ne.s32.totalorder %s205, %s207
    %p214 = scmp.eq.s32.totalorder %s29, 1
    %p215 = por %p213, %p214
    %p216 = scmp.ne.s32.totalorder %s207, %s208
    %p217 = scmp.eq.s32.totalorder %s29, 0
    %p218 = por %p216, %p217
    %p219 = scmp.ne.s32.totalorder %s207, %s208
    %p220 = scmp.eq.s32.totalorder %s30, 1
    %p221 = por %p219, %p220
    %p223 = scmp.ne.s32.totalorder %s208, %s222
    %p224 = scmp.eq.s32.totalorder %s30, 0
    %p225 = por %p223, %p224
    %s227 = sadd.s32 %s226, 1
    %p230 = scmp.eq.s32.totalorder %s24, 1
    %p231 = scmp.ne.s32.totalorder %s226, %s228
    %p232 = scmp.eq.s32.totalorder %s24, 0
    %p233 = por %p231, %p232
    %p234 = scmp.ne.s32.totalorder %s226, %s228
    %p235 = scmp.eq.s32.totalorder %s29, 1
    %p236 = por %p234, %p235
    %p237 = scmp.ne.s32.totalorder %s228, %s229
    %p238 = scmp.eq.s32.totalorder %s29, 0
    %p239 = por %p237, %p238
    %p240 = scmp.ne.s32.totalorder %s228, %s229
    %p241 = scmp.eq.s32.totalorder %s30, 1
    %p242 = por %p240, %p241
    %p244 = scmp.ne.s32.totalorder %s229, %s243
    %p245 = scmp.eq.s32.totalorder %s30, 0
    %p246 = por %p244, %p245
    %s248 = sadd.s32 %s247, 1
    %p251 = scmp.eq.s32.totalorder %s24, 1
    %p252 = scmp.ne.s32.totalorder %s247, %s249
    %p253 = scmp.eq.s32.totalorder %s24, 0
    %p254 = por %p252, %p253
    %p255 = scmp.ne.s32.totalorder %s247, %s249
    %p256 = scmp.eq.s32.totalorder %s29, 1
    %p257 = por %p255, %p256
    %p258 = scmp.ne.s32.totalorder %s249, %s250
    %p259 = scmp.eq.s32.totalorder %s29, 0
    %p260 = por %p258, %p259
    %p261 = scmp.ne.s32.totalorder %s249, %s250
    %p262 = scmp.eq.s32.totalorder %s30, 1
    %p263 = por %p261, %p262
    %p265 = scmp.ne.s32.totalorder %s250, %s264
    %p266 = scmp.eq.s32.totalorder %s30, 0
    %p267 = por %p265, %p266
    %s269 = sadd.s32 %s268, 1
    %p272 = scmp.eq.s32.totalorder %s24, 1
    %p273 = scmp.ne.s32.totalorder %s268, %s270
    %p274 = scmp.eq.s32.totalorder %s24, 0
    %p275 = por %p273, %p274
    %p276 = scmp.ne.s32.totalorder %s268, %s270
    %p277 = scmp.eq.s32.totalorder %s29, 1
    %p278 = por %p276, %p277
    %p279 = scmp.ne.s32.totalorder %s270, %s271
    %p280 = scmp.eq.s32.totalorder %s29, 0
    %p281 = por %p279, %p280
    %p282 = scmp.ne.s32.totalorder %s270, %s271
    %p283 = scmp.eq.s32.totalorder %s30, 1
    %p284 = por %p282, %p283
    %p286 = scmp.ne.s32.totalorder %s271, %s285
    %p287 = scmp.eq.s32.totalorder %s30, 0
    %p288 = por %p286, %p287
    %s290 = sadd.s32 %s289, 1
    %p293 = scmp.eq.s32.totalorder %s24, 1
    %p294 = scmp.ne.s32.totalorder %s289, %s291
    %p295 = scmp.eq.s32.totalorder %s24, 0
    %p296 = por %p294, %p295
    %p297 = scmp.ne.s32.totalorder %s289, %s291
    %p298 = scmp.eq.s32.totalorder %s29, 1
    %p299 = por %p297, %p298
    %p300 = scmp.ne.s32.totalorder %s291, %s292
    %p301 = scmp.eq.s32.totalorder %s29, 0
    %p302 = por %p300, %p301
    %p303 = scmp.ne.s32.totalorder %s291, %s292
    %p304 = scmp.eq.s32.totalorder %s30, 1
    %p305 = por %p303, %p304
    %p307 = scmp.ne.s32.totalorder %s292, %s306
    %p308 = scmp.eq.s32.totalorder %s30, 0
    %p309 = por %p307, %p308
    %s311 = sadd.s32 %s310, 1
    %p314 = scmp.eq.s32.totalorder %s24, 1
    %p315 = scmp.ne.s32.totalorder %s310, %s312
    %p316 = scmp.eq.s32.totalorder %s24, 0
    %p317 = por %p315, %p316
    %p318 = scmp.ne.s32.totalorder %s310, %s312
    %p319 = scmp.eq.s32.totalorder %s29, 1
    %p320 = por %p318, %p319
    %p321 = scmp.ne.s32.totalorder %s312, %s313
    %p322 = scmp.eq.s32.totalorder %s29, 0
    %p323 = por %p321, %p322
    %p324 = scmp.ne.s32.totalorder %s312, %s313
    %p325 = scmp.eq.s32.totalorder %s30, 1
    %p326 = por %p324, %p325
    %p328 = scmp.ne.s32.totalorder %s313, %s327
    %p329 = scmp.eq.s32.totalorder %s30, 0
    %p330 = por %p328, %p329
    %s332 = sadd.s32 %s331, 1
    %p335 = scmp.eq.s32.totalorder %s24, 1
    %p336 = scmp.ne.s32.totalorder %s331, %s333
    %p337 = scmp.eq.s32.totalorder %s24, 0
    %p338 = por %p336, %p337
    %p339 = scmp.ne.s32.totalorder %s331, %s333
    %p340 = scmp.eq.s32.totalorder %s29, 1
    %p341 = por %p339, %p340
    %p342 = scmp.ne.s32.totalorder %s333, %s334
    %p343 = scmp.eq.s32.totalorder %s29, 0
    %p344 = por %p342, %p343
    %p345 = scmp.ne.s32.totalorder %s333, %s334
    %p346 = scmp.eq.s32.totalorder %s30, 1
    %p347 = por %p345, %p346
    %p349 = scmp.ne.s32.totalorder %s334, %s348
    %p350 = scmp.eq.s32.totalorder %s30, 0
    %p351 = por %p349, %p350
    %s353 = sadd.s32 %s352, 1
    %p356 = scmp.eq.s32.totalorder %s24, 1
    %p357 = scmp.ne.s32.totalorder %s352, %s354
    %p358 = scmp.eq.s32.totalorder %s24, 0
    %p359 = por %p357, %p358
    %p360 = scmp.ne.s32.totalorder %s352, %s354
    %p361 = scmp.eq.s32.totalorder %s29, 1
    %p362 = por %p360, %p361
    %p363 = scmp.ne.s32.totalorder %s354, %s355
    %p364 = scmp.eq.s32.totalorder %s29, 0
    %p365 = por %p363, %p364
    %p366 = scmp.ne.s32.totalorder %s354, %s355
    %p367 = scmp.eq.s32.totalorder %s30, 1
    %p368 = por %p366, %p367
    %p370 = scmp.ne.s32.totalorder %s355, %s369
    %p371 = scmp.eq.s32.totalorder %s30, 0
    %p372 = por %p370, %p371
    %s374 = sadd.s32 %s373, 1
    %p377 = scmp.eq.s32.totalorder %s24, 1
    %p378 = scmp.ne.s32.totalorder %s373, %s375
    %p379 = scmp.eq.s32.totalorder %s24, 0
    %p380 = por %p378, %p379
    %p381 = scmp.ne.s32.totalorder %s373, %s375
    %p382 = scmp.eq.s32.totalorder %s29, 1
    %p383 = por %p381, %p382
    %p384 = scmp.ne.s32.totalorder %s375, %s376
    %p385 = scmp.eq.s32.totalorder %s29, 0
    %p386 = por %p384, %p385
    %p387 = scmp.ne.s32.totalorder %s375, %s376
    %p388 = scmp.eq.s32.totalorder %s30, 1
    %p389 = por %p387, %p388
    %p391 = scmp.ne.s32.totalorder %s376, %s390
    %p392 = scmp.eq.s32.totalorder %s30, 0
    %p393 = por %p391, %p392
    %s394 = ssub.s32 %s24, %s31
    %p395 = scmp.eq.s32.totalorder %s394, 0
    %s397 = sadd.s32 %s396, 1
    %s398 = scalar_select %p395, %s396, %s397
    %p401 = pneg %p395
    %p402 = scmp.eq.s32.totalorder %s24, 1
    %p403 = por %p401, %p402
    %p404 = scmp.ne.s32.totalorder %s396, %s399
    %p405 = scmp.eq.s32.totalorder %s24, 0
    %p406 = por %p404, %p405
    %p407 = scmp.ne.s32.totalorder %s396, %s399
    %p408 = scmp.eq.s32.totalorder %s29, 1
    %p409 = por %p407, %p408
    %p410 = scmp.ne.s32.totalorder %s399, %s400
    %p411 = scmp.eq.s32.totalorder %s29, 0
    %p412 = por %p410, %p411
    %p413 = scmp.ne.s32.totalorder %s399, %s400
    %p414 = scmp.eq.s32.totalorder %s30, 1
    %p415 = por %p413, %p414
    %p417 = scmp.ne.s32.totalorder %s400, %s416
    %p418 = scmp.eq.s32.totalorder %s30, 0
    %p419 = por %p417, %p418
    %p420 = scmp.le.s32.totalorder 1, %s24
    %p421 = scmp.lt.s32.totalorder %s24, 3
    %p422 = pnand %p420, %p421
    %p423 = pneg %p422
    // Predicated region
    $region9: #{mamba_layer_forward.1} parent=5 // pred_check
      _
    $region10: #{mamba_layer_forward.1} parent=5 // pred_check_branch
      %425 = sbr.rel (%p422) target = $region12
    $region11: #{mamba_layer_forward.1} parent=5 // pred_region
      %s426 = ssub.s32 %s24, 1
      // Predicated region
      $region13: #{mamba_layer_forward.1} parent=11 // pred_check
        %p427 = pneg %p71
      $region14: #{mamba_layer_forward.1} parent=11 // pred_check_branch
        %429 = sbr.rel (%p427) target = $region16
      $region15: #{mamba_layer_forward.1} parent=11 // pred_region
        _
      $region16: #{mamba_layer_forward.1} parent=11 // pred_fallthru
        _
      // Predicated region
      $region17: #{mamba_layer_forward.1} parent=11 // pred_check
        %p430 = pneg %p92
      $region18: #{mamba_layer_forward.1} parent=11 // pred_check_branch
        %432 = sbr.rel (%p430) target = $region20
      $region19: #{mamba_layer_forward.1} parent=11 // pred_region
        _
      $region20: #{mamba_layer_forward.1} parent=11 // pred_fallthru
        _
      // Predicated region
      $region21: #{mamba_layer_forward.1} parent=11 // pred_check
        %p433 = pneg %p113
      $region22: #{mamba_layer_forward.1} parent=11 // pred_check_branch
        %435 = sbr.rel (%p433) target = $region24
      $region23: #{mamba_layer_forward.1} parent=11 // pred_region
        _
      $region24: #{mamba_layer_forward.1} parent=11 // pred_fallthru
        _
      // Predicated region
      $region25: #{mamba_layer_forward.1} parent=11 // pred_check
        %p436 = pneg %p134
      $region26: #{mamba_layer_forward.1} parent=11 // pred_check_branch
        %438 = sbr.rel (%p436) target = $region28
      $region27: #{mamba_layer_forward.1} parent=11 // pred_region
        _
      $region28: #{mamba_layer_forward.1} parent=11 // pred_fallthru
        _
      // Predicated region
      $region29: #{mamba_layer_forward.1} parent=11 // pred_check
        %p439 = pneg %p155
      $region30: #{mamba_layer_forward.1} parent=11 // pred_check_branch
        %441 = sbr.rel (%p439) target = $region32
      $region31: #{mamba_layer_forward.1} parent=11 // pred_region
        _
      $region32: #{mamba_layer_forward.1} parent=11 // pred_fallthru
        _
      // Predicated region
      $region33: #{mamba_layer_forward.1} parent=11 // pred_check
        %p442 = pneg %p176
      $region34: #{mamba_layer_forward.1} parent=11 // pred_check_branch
        %444 = sbr.rel (%p442) target = $region36
      $region35: #{mamba_layer_forward.1} parent=11 // pred_region
        _
      $region36: #{mamba_layer_forward.1} parent=11 // pred_fallthru
        _
      // Predicated region
      $region37: #{mamba_layer_forward.1} parent=11 // pred_check
        %p445 = pneg %p197
      $region38: #{mamba_layer_forward.1} parent=11 // pred_check_branch
        %447 = sbr.rel (%p445) target = $region40
      $region39: #{mamba_layer_forward.1} parent=11 // pred_region
        _
      $region40: #{mamba_layer_forward.1} parent=11 // pred_fallthru
        _
      // Predicated region
      $region41: #{mamba_layer_forward.1} parent=11 // pred_check
        %p448 = pneg %p218
      $region42: #{mamba_layer_forward.1} parent=11 // pred_check_branch
        %450 = sbr.rel (%p448) target = $region44
      $region43: #{mamba_layer_forward.1} parent=11 // pred_region
        _
      $region44: #{mamba_layer_forward.1} parent=11 // pred_fallthru
        _
      // Predicated region
      $region45: #{mamba_layer_forward.1} parent=11 // pred_check
        %p451 = pneg %p239
      $region46: #{mamba_layer_forward.1} parent=11 // pred_check_branch
        %453 = sbr.rel (%p451) target = $region48
      $region47: #{mamba_layer_forward.1} parent=11 // pred_region
        _
      $region48: #{mamba_layer_forward.1} parent=11 // pred_fallthru
        _
      // Predicated region
      $region49: #{mamba_layer_forward.1} parent=11 // pred_check
        %p454 = pneg %p260
      $region50: #{mamba_layer_forward.1} parent=11 // pred_check_branch
        %456 = sbr.rel (%p454) target = $region52
      $region51: #{mamba_layer_forward.1} parent=11 // pred_region
        _
      $region52: #{mamba_layer_forward.1} parent=11 // pred_fallthru
        _
      // Predicated region
      $region53: #{mamba_layer_forward.1} parent=11 // pred_check
        %p457 = pneg %p281
      $region54: #{mamba_layer_forward.1} parent=11 // pred_check_branch
        %459 = sbr.rel (%p457) target = $region56
      $region55: #{mamba_layer_forward.1} parent=11 // pred_region
        _
      $region56: #{mamba_layer_forward.1} parent=11 // pred_fallthru
        _
      // Predicated region
      $region57: #{mamba_layer_forward.1} parent=11 // pred_check
        %p460 = pneg %p302
      $region58: #{mamba_layer_forward.1} parent=11 // pred_check_branch
        %462 = sbr.rel (%p460) target = $region60
      $region59: #{mamba_layer_forward.1} parent=11 // pred_region
        _
      $region60: #{mamba_layer_forward.1} parent=11 // pred_fallthru
        _
      // Predicated region
      $region61: #{mamba_layer_forward.1} parent=11 // pred_check
        %p463 = pneg %p323
      $region62: #{mamba_layer_forward.1} parent=11 // pred_check_branch
        %465 = sbr.rel (%p463) target = $region64
      $region63: #{mamba_layer_forward.1} parent=11 // pred_region
        _
      $region64: #{mamba_layer_forward.1} parent=11 // pred_fallthru
        _
      // Predicated region
      $region65: #{mamba_layer_forward.1} parent=11 // pred_check
        %p466 = pneg %p344
      $region66: #{mamba_layer_forward.1} parent=11 // pred_check_branch
        %468 = sbr.rel (%p466) target = $region68
      $region67: #{mamba_layer_forward.1} parent=11 // pred_region
        _
      $region68: #{mamba_layer_forward.1} parent=11 // pred_fallthru
        _
      // Predicated region
      $region69: #{mamba_layer_forward.1} parent=11 // pred_check
        %p469 = pneg %p365
      $region70: #{mamba_layer_forward.1} parent=11 // pred_check_branch
        %471 = sbr.rel (%p469) target = $region72
      $region71: #{mamba_layer_forward.1} parent=11 // pred_region
        _
      $region72: #{mamba_layer_forward.1} parent=11 // pred_fallthru
        _
      // Predicated region
      $region73: #{mamba_layer_forward.1} parent=11 // pred_check
        %p472 = pneg %p386
      $region74: #{mamba_layer_forward.1} parent=11 // pred_check_branch
        %474 = sbr.rel (%p472) target = $region76
      $region75: #{mamba_layer_forward.1} parent=11 // pred_region
        _
      $region76: #{mamba_layer_forward.1} parent=11 // pred_fallthru
        _
    $region12: #{mamba_layer_forward.1} parent=5 // pred_fallthru
      _
    %p475 = scmp.lt.s32.totalorder %s24, 2
    // Predicated region
    $region77: #{mamba_layer_forward.1} parent=5 // pred_check
      %p476 = pneg %p475
    $region78: #{mamba_layer_forward.1} parent=5 // pred_check_branch
      %478 = sbr.rel (%p476) target = $region80
    $region79: #{mamba_layer_forward.1} parent=5 // pred_region
      // Predicated region
      $region81: #{mamba_layer_forward.1} parent=79 // pred_check
        %p479 = pneg %p44
      $region82: #{mamba_layer_forward.1} parent=79 // pred_check_branch
        %481 = sbr.rel (%p479) target = $region84
      $region83: #{mamba_layer_forward.1} parent=79 // pred_region
        %p482 = scmp.lt.s32.totalorder %s24, 1
        %s483 = scalar_select %p482, %s24, 1
        %s484 = smul.addr %s483, 8
        %s485 = smul.addr %s484, 8
        %s486 = scalar_lea.vmem %s0, %s485
      $region84: #{mamba_layer_forward.1} parent=79 // pred_fallthru
        _
    $region80: #{mamba_layer_forward.1} parent=5 // pred_fallthru
      _
    %p487 = scmp.le.s32.totalorder 1, %s24
    %p488 = scmp.lt.s32.totalorder %s24, 3
    %p489 = pnand %p487, %p488
    %p490 = pneg %p489
    // Predicated region
    $region85: #{mamba_layer_forward.1} parent=5 // pred_check
      _
    $region86: #{mamba_layer_forward.1} parent=5 // pred_check_branch
      %492 = sbr.rel (%p489) target = $region88
    $region87: #{mamba_layer_forward.1} parent=5 // pred_region
      %s493 = ssub.s32 %s24, 1
      %p494 = scmp.lt.s32.totalorder %s29, 1
      %s495 = scalar_select %p494, %s29, 1
      %s496 = smul.addr %s495, 8
      %s497 = smul.addr %s496, 8
      %s498 = scalar_lea.vmem %s0, %s497
      %p499 = pneg %p50
      %p500 = pneg %p47
      %p501 = pneg %p71
      %p502 = pneg %p68
      %p503 = pneg %p92
      %p504 = pneg %p89
      %p505 = pneg %p113
      %p506 = pneg %p110
      %p507 = pneg %p134
      %p508 = pneg %p131
      %p509 = pneg %p155
      %p510 = pneg %p152
      %p511 = pneg %p176
      %p512 = pneg %p173
      %p513 = pneg %p197
      %p514 = pneg %p194
      %p515 = pneg %p218
      %p516 = pneg %p215
      %p517 = pneg %p239
      %p518 = pneg %p236
      %p519 = pneg %p260
      %p520 = pneg %p257
      %p521 = pneg %p281
      %p522 = pneg %p278
      %p523 = pneg %p302
      %p524 = pneg %p299
      %p525 = pneg %p323
      %p526 = pneg %p320
      %p527 = pneg %p344
      %p528 = pneg %p341
      %p529 = pneg %p365
      %p530 = pneg %p362
      %p531 = pneg %p386
      %p532 = pneg %p383
      %p533 = pneg %p412
      %p534 = pneg %p409
      %p535 = scmp.lt.s32.totalorder %s29, 1
      %s536 = scalar_select %p535, %s29, 1
      %s537 = smul.addr %s536, 8
      %s538 = smul.addr %s537, 8
      %s539 = scalar_lea.vmem %s17, %s538
      %p540 = scmp.lt.s32.totalorder %s29, 1
      %s541 = scalar_select %p540, %s29, 1
      %s542 = smul.addr %s541, 8
      %s543 = smul.addr %s542, 8
      %s544 = scalar_lea.vmem %s0, %s543
      %p545 = scmp.lt.s32.totalorder %s29, 1
      %s546 = scalar_select %p545, %s29, 1
      %s547 = smul.addr %s546, 8
      %s548 = smul.addr %s547, 8
      %s549 = scalar_lea.vmem %s17, %s548
      %v551 = vld [vmem:[%s544] sm:$0xff]
      %v552 = vld [vmem:[%s544 + $0x8] sm:$0xff]
      %v553 = vld [vmem:[%s544 + $0x10] sm:$0xff]
      %v554 = vld [vmem:[%s544 + $0x18] sm:$0xff]
      %v555 = vld [vmem:[%s544 + $0x20] sm:$0xff]
      %v556 = vld [vmem:[%s544 + $0x28] sm:$0xff]
      %v557 = vld [vmem:[%s544 + $0x30] sm:$0xff]
      %v558 = vld [vmem:[%s544 + $0x38] sm:$0xff]
      %vm559 = vcmask 64512
      %v560 = vsel %vm559, %v551, 0.0
      %561 = vadd.xlane.f32.xlu0 %v560
      %v562 = vpop.xlane.xlu0 %561
      %v563 = vsel %vm559, %v552, 0.0
      %564 = vadd.xlane.f32.xlu0 %v563
      %v565 = vpop.xlane.xlu0 %564
      %v566 = vsel %vm559, %v553, 0.0
      %567 = vadd.xlane.f32.xlu0 %v566
      %v568 = vpop.xlane.xlu0 %567
      %v569 = vsel %vm559, %v554, 0.0
      %570 = vadd.xlane.f32.xlu0 %v569
      %v571 = vpop.xlane.xlu0 %570
      %v572 = vsel %vm559, %v555, 0.0
      %573 = vadd.xlane.f32.xlu0 %v572
      %v574 = vpop.xlane.xlu0 %573
      %v575 = vsel %vm559, %v556, 0.0
      %576 = vadd.xlane.f32.xlu0 %v575
      %v577 = vpop.xlane.xlu0 %576
      %v578 = vsel %vm559, %v557, 0.0
      %579 = vadd.xlane.f32.xlu0 %v578
      %v580 = vpop.xlane.xlu0 %579
      %v581 = vsel %vm559, %v558, 0.0
      %582 = vadd.xlane.f32.xlu0 %v581
      %v583 = vpop.xlane.xlu0 %582
      %v584 = vrcp.pop 8.0
      %v585 = vmul.f32 8.0, %v584
      %v586 = vsub.f32 1.0, %v585
      %v587 = vmul.f32 %v584, %v586
      %v588 = vadd.f32 %v584, %v587
      %vm589 = vweird.f32 %v584
      %v590 = vsel %vm589, %v584, %v588
      %v591 = vmul.f32 %v562, %v590
      %v592 = vmul.f32 %v565, %v590
      %v593 = vmul.f32 %v568, %v590
      %v594 = vmul.f32 %v571, %v590
      %v595 = vmul.f32 %v574, %v590
      %v596 = vmul.f32 %v577, %v590
      %v597 = vmul.f32 %v580, %v590
      %v598 = vmul.f32 %v583, %v590
      %v599 = vsub.f32 %v551, %v591
      %v600 = vsub.f32 %v552, %v592
      %v601 = vsub.f32 %v553, %v593
      %v602 = vsub.f32 %v554, %v594
      %v603 = vsub.f32 %v555, %v595
      %v604 = vsub.f32 %v556, %v596
      %v605 = vsub.f32 %v557, %v597
      %v606 = vsub.f32 %v558, %v598
      %v607 = vmul.f32 %v599, %v599
      %v608 = vmul.f32 %v600, %v600
      %v609 = vmul.f32 %v601, %v601
      %v610 = vmul.f32 %v602, %v602
      %v611 = vmul.f32 %v603, %v603
      %v612 = vmul.f32 %v604, %v604
      %v613 = vmul.f32 %v605, %v605
      %v614 = vmul.f32 %v606, %v606
      %v615 = vsel %vm559, %v607, 0.0
      %616 = vadd.xlane.f32.xlu0 %v615
      %v617 = vpop.xlane.xlu0 %616
      %v618 = vsel %vm559, %v608, 0.0
      %619 = vadd.xlane.f32.xlu0 %v618
      %v620 = vpop.xlane.xlu0 %619
      %v621 = vsel %vm559, %v609, 0.0
      %622 = vadd.xlane.f32.xlu0 %v621
      %v623 = vpop.xlane.xlu0 %622
      %v624 = vsel %vm559, %v610, 0.0
      %625 = vadd.xlane.f32.xlu0 %v624
      %v626 = vpop.xlane.xlu0 %625
      %v627 = vsel %vm559, %v611, 0.0
      %628 = vadd.xlane.f32.xlu0 %v627
      %v629 = vpop.xlane.xlu0 %628
      %v630 = vsel %vm559, %v612, 0.0
      %631 = vadd.xlane.f32.xlu0 %v630
      %v632 = vpop.xlane.xlu0 %631
      %v633 = vsel %vm559, %v613, 0.0
      %634 = vadd.xlane.f32.xlu0 %v633
      %v635 = vpop.xlane.xlu0 %634
      %v636 = vsel %vm559, %v614, 0.0
      %637 = vadd.xlane.f32.xlu0 %v636
      %v638 = vpop.xlane.xlu0 %637
      %v639 = vmul.f32 %v617, %v590
      %v640 = vmul.f32 %v620, %v590
      %v641 = vmul.f32 %v623, %v590
      %v642 = vmul.f32 %v626, %v590
      %v643 = vmul.f32 %v629, %v590
      %v644 = vmul.f32 %v632, %v590
      %v645 = vmul.f32 %v635, %v590
      %v646 = vmul.f32 %v638, %v590
      %v647 = vadd.f32 %v639, 1e-05
      %v648 = vadd.f32 %v640, 1e-05
      %v649 = vadd.f32 %v641, 1e-05
      %v650 = vadd.f32 %v642, 1e-05
      %v651 = vadd.f32 %v643, 1e-05
      %v652 = vadd.f32 %v644, 1e-05
      %v653 = vadd.f32 %v645, 1e-05
      %v654 = vadd.f32 %v646, 1e-05
      %v655 = vrsqrt.pop %v647
      %v656 = vmul.f32 %v655, %v647
      %v657 = vmul.f32 %v656, %v655
      %v658 = vmul.f32 0.5, %v657
      %v659 = vsub.f32 1.5, %v658
      %v660 = vmul.f32 %v655, %v659
      %vm661 = vweird.f32 %v647
      %vm662 = vweird.f32 %v655
      %vm663 = vmor %vm661, %vm662
      %v664 = vsel %vm663, %v655, %v660
      %v665 = vrsqrt.pop %v648
      %v666 = vmul.f32 %v665, %v648
      %v667 = vmul.f32 %v666, %v665
      %v668 = vmul.f32 0.5, %v667
      %v669 = vsub.f32 1.5, %v668
      %v670 = vmul.f32 %v665, %v669
      %vm671 = vweird.f32 %v648
      %vm672 = vweird.f32 %v665
      %vm673 = vmor %vm671, %vm672
      %v674 = vsel %vm673, %v665, %v670
      %v675 = vrsqrt.pop %v649
      %v676 = vmul.f32 %v675, %v649
      %v677 = vmul.f32 %v676, %v675
      %v678 = vmul.f32 0.5, %v677
      %v679 = vsub.f32 1.5, %v678
      %v680 = vmul.f32 %v675, %v679
      %vm681 = vweird.f32 %v649
      %vm682 = vweird.f32 %v675
      %vm683 = vmor %vm681, %vm682
      %v684 = vsel %vm683, %v675, %v680
      %v685 = vrsqrt.pop %v650
      %v686 = vmul.f32 %v685, %v650
      %v687 = vmul.f32 %v686, %v685
      %v688 = vmul.f32 0.5, %v687
      %v689 = vsub.f32 1.5, %v688
      %v690 = vmul.f32 %v685, %v689
      %vm691 = vweird.f32 %v650
      %vm692 = vweird.f32 %v685
      %vm693 = vmor %vm691, %vm692
      %v694 = vsel %vm693, %v685, %v690
      %v695 = vrsqrt.pop %v651
      %v696 = vmul.f32 %v695, %v651
      %v697 = vmul.f32 %v696, %v695
      %v698 = vmul.f32 0.5, %v697
      %v699 = vsub.f32 1.5, %v698
      %v700 = vmul.f32 %v695, %v699
      %vm701 = vweird.f32 %v651
      %vm702 = vweird.f32 %v695
      %vm703 = vmor %vm701, %vm702
      %v704 = vsel %vm703, %v695, %v700
      %v705 = vrsqrt.pop %v652
      %v706 = vmul.f32 %v705, %v652
      %v707 = vmul.f32 %v706, %v705
      %v708 = vmul.f32 0.5, %v707
      %v709 = vsub.f32 1.5, %v708
      %v710 = vmul.f32 %v705, %v709
      %vm711 = vweird.f32 %v652
      %vm712 = vweird.f32 %v705
      %vm713 = vmor %vm711, %vm712
      %v714 = vsel %vm713, %v705, %v710
      %v715 = vrsqrt.pop %v653
      %v716 = vmul.f32 %v715, %v653
      %v717 = vmul.f32 %v716, %v715
      %v718 = vmul.f32 0.5, %v717
      %v719 = vsub.f32 1.5, %v718
      %v720 = vmul.f32 %v715, %v719
      %vm721 = vweird.f32 %v653
      %vm722 = vweird.f32 %v715
      %vm723 = vmor %vm721, %vm722
      %v724 = vsel %vm723, %v715, %v720
      %v725 = vrsqrt.pop %v654
      %v726 = vmul.f32 %v725, %v654
      %v727 = vmul.f32 %v726, %v725
      %v728 = vmul.f32 0.5, %v727
      %v729 = vsub.f32 1.5, %v728
      %v730 = vmul.f32 %v725, %v729
      %vm731 = vweird.f32 %v654
      %vm732 = vweird.f32 %v725
      %vm733 = vmor %vm731, %vm732
      %v734 = vsel %vm733, %v725, %v730
      %v735 = vmul.f32 %v599, %v664
      %v736 = vmul.f32 %v600, %v674
      %v737 = vmul.f32 %v601, %v684
      %v738 = vmul.f32 %v602, %v694
      %v739 = vmul.f32 %v603, %v704
      %v740 = vmul.f32 %v604, %v714
      %v741 = vmul.f32 %v605, %v724
      %v742 = vmul.f32 %v606, %v734
      %v743 = vld [vmem:[%s1] sm:$0x1]
      %v745 = vperm.slane %v743, 0
      %v747 = vmul.f32 %v735, %v745
      %v748 = vmul.f32 %v736, %v745
      %v749 = vmul.f32 %v737, %v745
      %v750 = vmul.f32 %v738, %v745
      %v751 = vmul.f32 %v739, %v745
      %v752 = vmul.f32 %v740, %v745
      %v753 = vmul.f32 %v741, %v745
      %v754 = vmul.f32 %v742, %v745
      %v755 = vld [vmem:[%s2] sm:$0x1]
      %v757 = vperm.slane %v755, 0
      %v759 = vadd.f32 %v747, %v757
      %v760 = vadd.f32 %v748, %v757
      %v761 = vadd.f32 %v749, %v757
      %v762 = vadd.f32 %v750, %v757
      %v763 = vadd.f32 %v751, %v757
      %v764 = vadd.f32 %v752, %v757
      %v765 = vadd.f32 %v753, %v757
      %v766 = vadd.f32 %v754, %v757
      %v767 = vpack.c.bf16 %v760, %v759
      %v768 = vpack.c.bf16 %v762, %v761
      %v769 = vpack.c.bf16 %v764, %v763
      %v770 = vpack.c.bf16 %v766, %v765
      %v771 = vld [vmem:[%s3] sm:$0xff]
      %v773 = vunpack.c.l.b16 %v771
      %v774 = vunpack.c.h.b16 %v771
      %v775 = vpack.c.b16 %v773, %v773
      %v776 = vpack.c.b16 %v774, %v774
      %v778 = vsel %vm559, %v767, 0
      %v781 = vsel %vm559, %v768, 0
      %v784 = vsel %vm559, %v769, 0
      %v787 = vsel %vm559, %v770, 0
      %vm789 = vcmask 1043456
      %v791 = vsel %vm789, %v775, 0
      %v794 = vsel %vm789, %v776, 0
      %796 = vmatpush.bf16.msra.mxu0 0
      %797 = vmatpush.bf16.msra.mxu0 0
      %798 = vmatpush.bf16.msra.mxu0 0
      %799 = vmatpush.bf16.msra.mxu0 0
      %800 = vmatpush.bf16.msra.mxu0 0
      %801 = vmatpush.bf16.msra.mxu0 0
      %802 = vmatpush.bf16.msra.mxu0 0
      %803 = vmatpush.bf16.msra.mxu0 %v791
      %804 = vmatmul.bf16.gmra.mxu0 %v778
      %v805 = vpop.f32.mrf.mxu0
      %v806 = vadd.f32 0.0, %v805
      %v807 = vpop.f32.mrf.mxu0
      %v808 = vadd.f32 0.0, %v807
      %809 = vmatmul.bf16.gmra.mxu0 %v781
      %v810 = vpop.f32.mrf.mxu0
      %v811 = vadd.f32 0.0, %v810
      %v812 = vpop.f32.mrf.mxu0
      %v813 = vadd.f32 0.0, %v812
      %814 = vmatmul.bf16.gmra.mxu0 %v784
      %v815 = vpop.f32.mrf.mxu0
      %v816 = vadd.f32 0.0, %v815
      %v817 = vpop.f32.mrf.mxu0
      %v818 = vadd.f32 0.0, %v817
      %819 = vmatmul.bf16.gmra.mxu0 %v787
      %v820 = vpop.f32.mrf.mxu0
      %v821 = vadd.f32 0.0, %v820
      %v822 = vpop.f32.mrf.mxu0
      %v823 = vadd.f32 0.0, %v822
      %824 = vdwg.mxu0
      %825 = vmatpush.bf16.msra.mxu0 0
      %826 = vmatpush.bf16.msra.mxu0 0
      %827 = vmatpush.bf16.msra.mxu0 0
      %828 = vmatpush.bf16.msra.mxu0 0
      %829 = vmatpush.bf16.msra.mxu0 0
      %830 = vmatpush.bf16.msra.mxu0 0
      %831 = vmatpush.bf16.msra.mxu0 0
      %832 = vmatpush.bf16.msra.mxu0 %v794
      %833 = vmatmul.bf16.gmra.mxu0 %v778
      %v834 = vpop.f32.mrf.mxu0
      %v835 = vadd.f32 0.0, %v834
      %v836 = vpop.f32.mrf.mxu0
      %v837 = vadd.f32 0.0, %v836
      %838 = vmatmul.bf16.gmra.mxu0 %v781
      %v839 = vpop.f32.mrf.mxu0
      %v840 = vadd.f32 0.0, %v839
      %v841 = vpop.f32.mrf.mxu0
      %v842 = vadd.f32 0.0, %v841
      %843 = vmatmul.bf16.gmra.mxu0 %v784
      %v844 = vpop.f32.mrf.mxu0
      %v845 = vadd.f32 0.0, %v844
      %v846 = vpop.f32.mrf.mxu0
      %v847 = vadd.f32 0.0, %v846
      %848 = vmatmul.bf16.gmra.mxu0 %v787
      %v849 = vpop.f32.mrf.mxu0
      %v850 = vadd.f32 0.0, %v849
      %v851 = vpop.f32.mrf.mxu0
      %v852 = vadd.f32 0.0, %v851
      %853 = vdwg.mxu0
      %v854 = vlaneseq
      %v855 = vshrl.u32 %v854, 7
      %v856 = vadd.s32 %v855, 8
      %v857 = vadd.s32 %v855, 16
      %v858 = vadd.s32 %v855, 24
      %v859 = vadd.s32 %v855, 32
      %v860 = vadd.s32 %v855, 40
      %v861 = vadd.s32 %v855, 48
      %v862 = vadd.s32 %v855, 56
      %s863 = scalar_lea.vmem %s4, 3
      %v864 = vld [vmem:[%s863] sm:$0x1]
      %v866 = vperm.slane %v864, 0
      %v868 = vmul.f32 %v806, %v866
      %v869 = vmul.f32 %v808, %v866
      %v870 = vmul.f32 %v811, %v866
      %v871 = vmul.f32 %v813, %v866
      %v872 = vmul.f32 %v816, %v866
      %v873 = vmul.f32 %v818, %v866
      %v874 = vmul.f32 %v821, %v866
      %v875 = vmul.f32 %v823, %v866
      %vm876 = vcmp.ge.s32.totalorder %v855, 1
      %vm877 = vcmp.ge.s32.totalorder %v856, 1
      %vm878 = vcmp.ge.s32.totalorder %v857, 1
      %vm879 = vcmp.ge.s32.totalorder %v858, 1
      %vm880 = vcmp.ge.s32.totalorder %v859, 1
      %vm881 = vcmp.ge.s32.totalorder %v860, 1
      %vm882 = vcmp.ge.s32.totalorder %v861, 1
      %vm883 = vcmp.ge.s32.totalorder %v862, 1
      %v884 = vrot.slane %v806, 7
      %v885 = vrot.slane %v808, 7
      %v886 = vrot.slane %v811, 7
      %v887 = vrot.slane %v813, 7
      %v888 = vrot.slane %v816, 7
      %v889 = vrot.slane %v818, 7
      %v890 = vrot.slane %v821, 7
      %v891 = vrot.slane %v823, 7
      %vm892 = vcmp.lt.s32.totalorder %v855, 1
      %v893 = vsel %vm892, %v890, %v891
      %v894 = vsel %vm892, %v889, %v890
      %v895 = vsel %vm892, %v888, %v889
      %v896 = vsel %vm892, %v887, %v888
      %v897 = vsel %vm892, %v886, %v887
      %v898 = vsel %vm892, %v885, %v886
      %v899 = vsel %vm892, %v884, %v885
      %v900 = vsel %vm892, %v891, %v884
      %v901 = vsel %vm876, %v900, 0.0
      %v902 = vsel %vm877, %v899, 0.0
      %v903 = vsel %vm878, %v898, 0.0
      %v904 = vsel %vm879, %v897, 0.0
      %v905 = vsel %vm880, %v896, 0.0
      %v906 = vsel %vm881, %v895, 0.0
      %v907 = vsel %vm882, %v894, 0.0
      %v908 = vsel %vm883, %v893, 0.0
      %s909 = scalar_lea.vmem %s4, 2
      %v910 = vld [vmem:[%s909] sm:$0x1]
      %v912 = vperm.slane %v910, 0
      %v914 = vmul.f32 %v901, %v912
      %v915 = vmul.f32 %v902, %v912
      %v916 = vmul.f32 %v903, %v912
      %v917 = vmul.f32 %v904, %v912
      %v918 = vmul.f32 %v905, %v912
      %v919 = vmul.f32 %v906, %v912
      %v920 = vmul.f32 %v907, %v912
      %v921 = vmul.f32 %v908, %v912
      %v922 = vadd.f32 %v868, %v914
      %v923 = vadd.f32 %v869, %v915
      %v924 = vadd.f32 %v870, %v916
      %v925 = vadd.f32 %v871, %v917
      %v926 = vadd.f32 %v872, %v918
      %v927 = vadd.f32 %v873, %v919
      %v928 = vadd.f32 %v874, %v920
      %v929 = vadd.f32 %v875, %v921
      %vm930 = vcmp.ge.s32.totalorder %v855, 2
      %vm931 = vcmp.ge.s32.totalorder %v856, 2
      %vm932 = vcmp.ge.s32.totalorder %v857, 2
      %vm933 = vcmp.ge.s32.totalorder %v858, 2
      %vm934 = vcmp.ge.s32.totalorder %v859, 2
      %vm935 = vcmp.ge.s32.totalorder %v860, 2
      %vm936 = vcmp.ge.s32.totalorder %v861, 2
      %vm937 = vcmp.ge.s32.totalorder %v862, 2
      %v938 = vrot.slane %v806, 6
      %v939 = vrot.slane %v808, 6
      %v940 = vrot.slane %v811, 6
      %v941 = vrot.slane %v813, 6
      %v942 = vrot.slane %v816, 6
      %v943 = vrot.slane %v818, 6
      %v944 = vrot.slane %v821, 6
      %v945 = vrot.slane %v823, 6
      %vm946 = vcmp.lt.s32.totalorder %v855, 2
      %v947 = vsel %vm946, %v944, %v945
      %v948 = vsel %vm946, %v943, %v944
      %v949 = vsel %vm946, %v942, %v943
      %v950 = vsel %vm946, %v941, %v942
      %v951 = vsel %vm946, %v940, %v941
      %v952 = vsel %vm946, %v939, %v940
      %v953 = vsel %vm946, %v938, %v939
      %v954 = vsel %vm946, %v945, %v938
      %v955 = vsel %vm930, %v954, 0.0
      %v956 = vsel %vm931, %v953, 0.0
      %v957 = vsel %vm932, %v952, 0.0
      %v958 = vsel %vm933, %v951, 0.0
      %v959 = vsel %vm934, %v950, 0.0
      %v960 = vsel %vm935, %v949, 0.0
      %v961 = vsel %vm936, %v948, 0.0
      %v962 = vsel %vm937, %v947, 0.0
      %s963 = scalar_lea.vmem %s4, 1
      %v964 = vld [vmem:[%s963] sm:$0x1]
      %v966 = vperm.slane %v964, 0
      %v968 = vmul.f32 %v955, %v966
      %v969 = vmul.f32 %v956, %v966
      %v970 = vmul.f32 %v957, %v966
      %v971 = vmul.f32 %v958, %v966
      %v972 = vmul.f32 %v959, %v966
      %v973 = vmul.f32 %v960, %v966
      %v974 = vmul.f32 %v961, %v966
      %v975 = vmul.f32 %v962, %v966
      %v976 = vadd.f32 %v922, %v968
      %v977 = vadd.f32 %v923, %v969
      %v978 = vadd.f32 %v924, %v970
      %v979 = vadd.f32 %v925, %v971
      %v980 = vadd.f32 %v926, %v972
      %v981 = vadd.f32 %v927, %v973
      %v982 = vadd.f32 %v928, %v974
      %v983 = vadd.f32 %v929, %v975
      %vm984 = vcmp.ge.s32.totalorder %v855, 3
      %vm985 = vcmp.ge.s32.totalorder %v856, 3
      %vm986 = vcmp.ge.s32.totalorder %v857, 3
      %vm987 = vcmp.ge.s32.totalorder %v858, 3
      %vm988 = vcmp.ge.s32.totalorder %v859, 3
      %vm989 = vcmp.ge.s32.totalorder %v860, 3
      %vm990 = vcmp.ge.s32.totalorder %v861, 3
      %vm991 = vcmp.ge.s32.totalorder %v862, 3
      %v992 = vrot.slane %v806, 5
      %v993 = vrot.slane %v808, 5
      %v994 = vrot.slane %v811, 5
      %v995 = vrot.slane %v813, 5
      %v996 = vrot.slane %v816, 5
      %v997 = vrot.slane %v818, 5
      %v998 = vrot.slane %v821, 5
      %v999 = vrot.slane %v823, 5
      %vm1000 = vcmp.lt.s32.totalorder %v855, 3
      %v1001 = vsel %vm1000, %v998, %v999
      %v1002 = vsel %vm1000, %v997, %v998
      %v1003 = vsel %vm1000, %v996, %v997
      %v1004 = vsel %vm1000, %v995, %v996
      %v1005 = vsel %vm1000, %v994, %v995
      %v1006 = vsel %vm1000, %v993, %v994
      %v1007 = vsel %vm1000, %v992, %v993
      %v1008 = vsel %vm1000, %v999, %v992
      %v1009 = vsel %vm984, %v1008, 0.0
      %v1010 = vsel %vm985, %v1007, 0.0
      %v1011 = vsel %vm986, %v1006, 0.0
      %v1012 = vsel %vm987, %v1005, 0.0
      %v1013 = vsel %vm988, %v1004, 0.0
      %v1014 = vsel %vm989, %v1003, 0.0
      %v1015 = vsel %vm990, %v1002, 0.0
      %v1016 = vsel %vm991, %v1001, 0.0
      %v1017 = vld [vmem:[%s4] sm:$0x1]
      %v1019 = vperm.slane %v1017, 0
      %v1021 = vmul.f32 %v1009, %v1019
      %v1022 = vmul.f32 %v1010, %v1019
      %v1023 = vmul.f32 %v1011, %v1019
      %v1024 = vmul.f32 %v1012, %v1019
      %v1025 = vmul.f32 %v1013, %v1019
      %v1026 = vmul.f32 %v1014, %v1019
      %v1027 = vmul.f32 %v1015, %v1019
      %v1028 = vmul.f32 %v1016, %v1019
      %v1029 = vadd.f32 %v976, %v1021
      %v1030 = vadd.f32 %v977, %v1022
      %v1031 = vadd.f32 %v978, %v1023
      %v1032 = vadd.f32 %v979, %v1024
      %v1033 = vadd.f32 %v980, %v1025
      %v1034 = vadd.f32 %v981, %v1026
      %v1035 = vadd.f32 %v982, %v1027
      %v1036 = vadd.f32 %v983, %v1028
      %v1037 = vld [vmem:[%s5] sm:$0x1]
      %v1039 = vperm.slane %v1037, 0
      %v1041 = vadd.f32 %v1029, %v1039
      %v1042 = vadd.f32 %v1030, %v1039
      %v1043 = vadd.f32 %v1031, %v1039
      %v1044 = vadd.f32 %v1032, %v1039
      %v1045 = vadd.f32 %v1033, %v1039
      %v1046 = vadd.f32 %v1034, %v1039
      %v1047 = vadd.f32 %v1035, %v1039
      %v1048 = vadd.f32 %v1036, %v1039
      %v1049 = vsub.f32 0.0, %v1041
      %v1050 = vsub.f32 0.0, %v1042
      %v1051 = vsub.f32 0.0, %v1043
      %v1052 = vsub.f32 0.0, %v1044
      %v1053 = vsub.f32 0.0, %v1045
      %v1054 = vsub.f32 0.0, %v1046
      %v1055 = vsub.f32 0.0, %v1047
      %v1056 = vsub.f32 0.0, %v1048
      %v1057 = vmul.f32 %v1049, 1.442695
      %v1058 = vpow.pop %v1057
      %v1059 = vmul.f32 %v1050, 1.442695
      %v1060 = vpow.pop %v1059
      %v1061 = vmul.f32 %v1051, 1.442695
      %v1062 = vpow.pop %v1061
      %v1063 = vmul.f32 %v1052, 1.442695
      %v1064 = vpow.pop %v1063
      %v1065 = vmul.f32 %v1053, 1.442695
      %v1066 = vpow.pop %v1065
      %v1067 = vmul.f32 %v1054, 1.442695
      %v1068 = vpow.pop %v1067
      %v1069 = vmul.f32 %v1055, 1.442695
      %v1070 = vpow.pop %v1069
      %v1071 = vmul.f32 %v1056, 1.442695
      %v1072 = vpow.pop %v1071
      %v1073 = vadd.f32 %v1058, 1.0
      %v1074 = vadd.f32 %v1060, 1.0
      %v1075 = vadd.f32 %v1062, 1.0
      %v1076 = vadd.f32 %v1064, 1.0
      %v1077 = vadd.f32 %v1066, 1.0
      %v1078 = vadd.f32 %v1068, 1.0
      %v1079 = vadd.f32 %v1070, 1.0
      %v1080 = vadd.f32 %v1072, 1.0
      %v1081 = vrcp.pop %v1073
      %v1082 = vrcp.pop %v1074
      %v1083 = vrcp.pop %v1075
      %v1084 = vrcp.pop %v1076
      %v1085 = vrcp.pop %v1077
      %v1086 = vrcp.pop %v1078
      %v1087 = vrcp.pop %v1079
      %v1088 = vrcp.pop %v1080
      %v1089 = vmul.f32 %v1041, %v1081
      %v1090 = vmul.f32 %v1042, %v1082
      %v1091 = vmul.f32 %v1043, %v1083
      %v1092 = vmul.f32 %v1044, %v1084
      %v1093 = vmul.f32 %v1045, %v1085
      %v1094 = vmul.f32 %v1046, %v1086
      %v1095 = vmul.f32 %v1047, %v1087
      %v1096 = vmul.f32 %v1048, %v1088
      %v1097 = vpack.c.bf16 %v1090, %v1089
      %v1098 = vpack.c.bf16 %v1092, %v1091
      %v1099 = vpack.c.bf16 %v1094, %v1093
      %v1100 = vpack.c.bf16 %v1096, %v1095
      %v1101 = vld [vmem:[%s6] sm:$0xff]
      %v1102 = vld [vmem:[%s6 + $0x8] sm:$0xff]
      %v1103 = vld [vmem:[%s7] sm:$0x3]
      %v1105 = vperm.slane %v1103, 0
      %v1106 = vperm.slane %v1103, 1
      %v1111 = vunpack.c.l.b16 %v1101
      %v1112 = vunpack.c.h.b16 %v1101
      %v1113 = vunpack.c.l.b16 %v1102
      %v1114 = vunpack.c.h.b16 %v1102
      %v1115 = vpack.c.b16 %v1113, %v1111
      %v1116 = vpack.c.b16 %v1114, %v1112
      %vm1119 = vcmask 130048
      %v1121 = vsel %vm1119, %v1097, 0
      %v1124 = vsel %vm1119, %v1098, 0
      %v1127 = vsel %vm1119, %v1099, 0
      %v1130 = vsel %vm1119, %v1100, 0
      %1132 = vmatpush.bf16.msra.mxu0 0
      %1133 = vmatpush.bf16.msra.mxu0 0
      %1134 = vmatpush.bf16.msra.mxu0 0
      %1135 = vmatpush.bf16.msra.mxu0 0
      %1136 = vmatpush.bf16.msra.mxu0 0
      %1137 = vmatpush.bf16.msra.mxu0 0
      %1138 = vmatpush.bf16.msra.mxu0 0
      %1139 = vmatpush.bf16.msra.mxu0 %v1115
      %1140 = vmatmul.bf16.gmra.mxu0 %v1121
      %v1141 = vpop.f32.mrf.mxu0
      %v1142 = vadd.f32 %v1105, %v1141
      %v1143 = vpop.f32.mrf.mxu0
      %v1144 = vadd.f32 %v1105, %v1143
      %1145 = vmatmul.bf16.gmra.mxu0 %v1124
      %v1146 = vpop.f32.mrf.mxu0
      %v1147 = vadd.f32 %v1105, %v1146
      %v1148 = vpop.f32.mrf.mxu0
      %v1149 = vadd.f32 %v1105, %v1148
      %1150 = vmatmul.bf16.gmra.mxu0 %v1127
      %v1151 = vpop.f32.mrf.mxu0
      %v1152 = vadd.f32 %v1105, %v1151
      %v1153 = vpop.f32.mrf.mxu0
      %v1154 = vadd.f32 %v1105, %v1153
      %1155 = vmatmul.bf16.gmra.mxu0 %v1130
      %v1156 = vpop.f32.mrf.mxu0
      %v1157 = vadd.f32 %v1105, %v1156
      %v1158 = vpop.f32.mrf.mxu0
      %v1159 = vadd.f32 %v1105, %v1158
      %1160 = vdwg.mxu0
      %1161 = vmatpush.bf16.msra.mxu0 0
      %1162 = vmatpush.bf16.msra.mxu0 0
      %1163 = vmatpush.bf16.msra.mxu0 0
      %1164 = vmatpush.bf16.msra.mxu0 0
      %1165 = vmatpush.bf16.msra.mxu0 0
      %1166 = vmatpush.bf16.msra.mxu0 0
      %1167 = vmatpush.bf16.msra.mxu0 0
      %1168 = vmatpush.bf16.msra.mxu0 %v1116
      %1169 = vmatmul.bf16.gmra.mxu0 %v1121
      %v1170 = vpop.f32.mrf.mxu0
      %v1171 = vadd.f32 %v1106, %v1170
      %v1172 = vpop.f32.mrf.mxu0
      %v1173 = vadd.f32 %v1106, %v1172
      %1174 = vmatmul.bf16.gmra.mxu0 %v1124
      %v1175 = vpop.f32.mrf.mxu0
      %v1176 = vadd.f32 %v1106, %v1175
      %v1177 = vpop.f32.mrf.mxu0
      %v1178 = vadd.f32 %v1106, %v1177
      %1179 = vmatmul.bf16.gmra.mxu0 %v1127
      %v1180 = vpop.f32.mrf.mxu0
      %v1181 = vadd.f32 %v1106, %v1180
      %v1182 = vpop.f32.mrf.mxu0
      %v1183 = vadd.f32 %v1106, %v1182
      %1184 = vmatmul.bf16.gmra.mxu0 %v1130
      %v1185 = vpop.f32.mrf.mxu0
      %v1186 = vadd.f32 %v1106, %v1185
      %v1187 = vpop.f32.mrf.mxu0
      %v1188 = vadd.f32 %v1106, %v1187
      %1189 = vdwg.mxu0
      %v1190 = vmax.f32 %v1142, 0.0
      %v1191 = vmax.f32 %v1144, 0.0
      %v1192 = vmax.f32 %v1147, 0.0
      %v1193 = vmax.f32 %v1149, 0.0
      %v1194 = vmax.f32 %v1152, 0.0
      %v1195 = vmax.f32 %v1154, 0.0
      %v1196 = vmax.f32 %v1157, 0.0
      %v1197 = vmax.f32 %v1159, 0.0
      %v1198 = vand.u32 2147483647, %v1142
      %v1199 = vand.u32 2147483647, %v1144
      %v1200 = vand.u32 2147483647, %v1147
      %v1201 = vand.u32 2147483647, %v1149
      %v1202 = vand.u32 2147483647, %v1152
      %v1203 = vand.u32 2147483647, %v1154
      %v1204 = vand.u32 2147483647, %v1157
      %v1205 = vand.u32 2147483647, %v1159
      %v1206 = vsub.f32 0.0, %v1198
      %v1207 = vsub.f32 0.0, %v1199
      %v1208 = vsub.f32 0.0, %v1200
      %v1209 = vsub.f32 0.0, %v1201
      %v1210 = vsub.f32 0.0, %v1202
      %v1211 = vsub.f32 0.0, %v1203
      %v1212 = vsub.f32 0.0, %v1204
      %v1213 = vsub.f32 0.0, %v1205
      %v1214 = vmul.f32 %v1206, 1.442695
      %v1215 = vpow.pop %v1214
      %v1216 = vmul.f32 %v1207, 1.442695
      %v1217 = vpow.pop %v1216
      %v1218 = vmul.f32 %v1208, 1.442695
      %v1219 = vpow.pop %v1218
      %v1220 = vmul.f32 %v1209, 1.442695
      %v1221 = vpow.pop %v1220
      %v1222 = vmul.f32 %v1210, 1.442695
      %v1223 = vpow.pop %v1222
      %v1224 = vmul.f32 %v1211, 1.442695
      %v1225 = vpow.pop %v1224
      %v1226 = vmul.f32 %v1212, 1.442695
      %v1227 = vpow.pop %v1226
      %v1228 = vmul.f32 %v1213, 1.442695
      %v1229 = vpow.pop %v1228
      %v1230 = vadd.f32 %v1215, 1.0
      %v1231 = vadd.f32 %v1217, 1.0
      %v1232 = vadd.f32 %v1219, 1.0
      %v1233 = vadd.f32 %v1221, 1.0
      %v1234 = vadd.f32 %v1223, 1.0
      %v1235 = vadd.f32 %v1225, 1.0
      %v1236 = vadd.f32 %v1227, 1.0
      %v1237 = vadd.f32 %v1229, 1.0
      %v1238 = vlog2.pop %v1230
      %v1239 = vmul.f32 %v1238, 0.6931472
      %v1240 = vlog2.pop %v1231
      %v1241 = vmul.f32 %v1240, 0.6931472
      %v1242 = vlog2.pop %v1232
      %v1243 = vmul.f32 %v1242, 0.6931472
      %v1244 = vlog2.pop %v1233
      %v1245 = vmul.f32 %v1244, 0.6931472
      %v1246 = vlog2.pop %v1234
      %v1247 = vmul.f32 %v1246, 0.6931472
      %v1248 = vlog2.pop %v1235
      %v1249 = vmul.f32 %v1248, 0.6931472
      %v1250 = vlog2.pop %v1236
      %v1251 = vmul.f32 %v1250, 0.6931472
      %v1252 = vlog2.pop %v1237
      %v1253 = vmul.f32 %v1252, 0.6931472
      %v1254 = vadd.f32 %v1190, %v1239
      %v1255 = vadd.f32 %v1191, %v1241
      %v1256 = vadd.f32 %v1192, %v1243
      %v1257 = vadd.f32 %v1193, %v1245
      %v1258 = vadd.f32 %v1194, %v1247
      %v1259 = vadd.f32 %v1195, %v1249
      %v1260 = vadd.f32 %v1196, %v1251
      %v1261 = vadd.f32 %v1197, %v1253
      %1262 = vst.msk [vmem:[#allocation2] sm:$0xff] %vm1119, %v1254
      %1263 = vst.msk [vmem:[#allocation2 + $0x8] sm:$0xff] %vm1119, %v1255
      %1264 = vst.msk [vmem:[#allocation2 + $0x10] sm:$0xff] %vm1119, %v1256
      %1265 = vst.msk [vmem:[#allocation2 + $0x18] sm:$0xff] %vm1119, %v1257
      %1266 = vst.msk [vmem:[#allocation2 + $0x20] sm:$0xff] %vm1119, %v1258
      %1267 = vst.msk [vmem:[#allocation2 + $0x28] sm:$0xff] %vm1119, %v1259
      %1268 = vst.msk [vmem:[#allocation2 + $0x30] sm:$0xff] %vm1119, %v1260
      %1269 = vst.msk [vmem:[#allocation2 + $0x38] sm:$0xff] %vm1119, %v1261
      %v1270 = vmul.f32 %v1254, %v1089
      %v1271 = vmul.f32 %v1255, %v1090
      %v1272 = vmul.f32 %v1256, %v1091
      %v1273 = vmul.f32 %v1257, %v1092
      %v1274 = vmul.f32 %v1258, %v1093
      %v1275 = vmul.f32 %v1259, %v1094
      %v1276 = vmul.f32 %v1260, %v1095
      %v1277 = vmul.f32 %v1261, %v1096
      %1278 = vst.msk [vmem:[#allocation3] sm:$0xff] %vm1119, %v1270
      %1279 = vst.msk [vmem:[#allocation3 + $0x8] sm:$0xff] %vm1119, %v1271
      %1280 = vst.msk [vmem:[#allocation3 + $0x10] sm:$0xff] %vm1119, %v1272
      %1281 = vst.msk [vmem:[#allocation3 + $0x18] sm:$0xff] %vm1119, %v1273
      %1282 = vst.msk [vmem:[#allocation3 + $0x20] sm:$0xff] %vm1119, %v1274
      %1283 = vst.msk [vmem:[#allocation3 + $0x28] sm:$0xff] %vm1119, %v1275
      %1284 = vst.msk [vmem:[#allocation3 + $0x30] sm:$0xff] %vm1119, %v1276
      %1285 = vst.msk [vmem:[#allocation3 + $0x38] sm:$0xff] %vm1119, %v1277
      %vm1286 = vcmask 261120
      %1287 = vst.msk [vmem:[#allocation4] sm:$0xff] %vm1286, %v1171
      %1288 = vst.msk [vmem:[#allocation4 + $0x8] sm:$0xff] %vm1286, %v1173
      %1289 = vst.msk [vmem:[#allocation4 + $0x10] sm:$0xff] %vm1286, %v1176
      %1290 = vst.msk [vmem:[#allocation4 + $0x18] sm:$0xff] %vm1286, %v1178
      %1291 = vst.msk [vmem:[#allocation4 + $0x20] sm:$0xff] %vm1286, %v1181
      %1292 = vst.msk [vmem:[#allocation4 + $0x28] sm:$0xff] %vm1286, %v1183
      %1293 = vst.msk [vmem:[#allocation4 + $0x30] sm:$0xff] %vm1286, %v1186
      %1294 = vst.msk [vmem:[#allocation4 + $0x38] sm:$0xff] %vm1286, %v1188
      %vm1295 = vcmp.ge.s32.totalorder %v855, 4
      %vm1296 = vcmp.ge.s32.totalorder %v856, 4
      %vm1297 = vcmp.ge.s32.totalorder %v857, 4
      %vm1298 = vcmp.ge.s32.totalorder %v858, 4
      %vm1299 = vcmp.ge.s32.totalorder %v855, 8
      %vm1300 = vcmp.ge.s32.totalorder %v856, 8
      %vm1301 = vcmp.ge.s32.totalorder %v857, 8
      %vm1302 = vcmp.ge.s32.totalorder %v858, 8
      %vm1303 = vcmp.ge.s32.totalorder %v855, 16
      %vm1304 = vcmp.ge.s32.totalorder %v856, 16
      %vm1305 = vcmp.ge.s32.totalorder %v857, 16
      %vm1306 = vcmp.ge.s32.totalorder %v858, 16
      %v1307 = vld [vmem:[%s8] sm:$0x3]
      %v1308 = vld [vmem:[%s13] sm:$0xff]
      %v1309 = vld [vmem:[%s13 + $0x8] sm:$0xff]
      %v1310 = vld [vmem:[%s14] sm:$0xff]
      %v1311 = vld [vmem:[%s14 + $0x8] sm:$0xff]
      %v1312 = vld [vmem:[%s14 + $0x10] sm:$0xff]
      %v1313 = vld [vmem:[%s14 + $0x18] sm:$0xff]
      %v1314 = vld [vmem:[%s14 + $0x20] sm:$0xff]
      %v1315 = vld [vmem:[%s14 + $0x28] sm:$0xff]
      %v1316 = vld [vmem:[%s14 + $0x30] sm:$0xff]
      %v1317 = vld [vmem:[%s14 + $0x38] sm:$0xff]
      %v1318 = vld [vmem:[%s15] sm:$0xf]
      %v1319 = vld [vmem:[%s15 + $0x4] sm:$0xf]
      %v1320 = vld [vmem:[%s15 + $0x8] sm:$0xf]
      %v1321 = vld [vmem:[%s15 + $0xc] sm:$0xf]
      %v1322 = vld [vmem:[%s15 + $0x10] sm:$0xf]
      %v1323 = vld [vmem:[%s15 + $0x14] sm:$0xf]
      %v1324 = vld [vmem:[%s15 + $0x18] sm:$0xf]
      %v1325 = vld [vmem:[%s15 + $0x1c] sm:$0xf]
      %v1326 = vld [vmem:[%s15 + $0x20] sm:$0xf]
      %v1327 = vld [vmem:[%s15 + $0x24] sm:$0xf]
      %v1328 = vld [vmem:[%s15 + $0x28] sm:$0xf]
      %v1329 = vld [vmem:[%s15 + $0x2c] sm:$0xf]
      %v1330 = vld [vmem:[%s15 + $0x30] sm:$0xf]
      %v1331 = vld [vmem:[%s15 + $0x34] sm:$0xf]
      %v1332 = vld [vmem:[%s15 + $0x38] sm:$0xf]
      %v1333 = vld [vmem:[%s15 + $0x3c] sm:$0xf]
      %v1334 = vld [vmem:[%s15 + $0x40] sm:$0xf]
      %v1335 = vld [vmem:[%s15 + $0x44] sm:$0xf]
      %v1336 = vld [vmem:[%s15 + $0x48] sm:$0xf]
      %v1337 = vld [vmem:[%s15 + $0x4c] sm:$0xf]
      %v1338 = vld [vmem:[%s15 + $0x50] sm:$0xf]
      %v1339 = vld [vmem:[%s15 + $0x54] sm:$0xf]
      %v1340 = vld [vmem:[%s15 + $0x58] sm:$0xf]
      %v1341 = vld [vmem:[%s15 + $0x5c] sm:$0xf]
      %v1342 = vld [vmem:[%s15 + $0x60] sm:$0xf]
      %v1343 = vld [vmem:[%s15 + $0x64] sm:$0xf]
      %v1344 = vld [vmem:[%s15 + $0x68] sm:$0xf]
      %v1345 = vld [vmem:[%s15 + $0x6c] sm:$0xf]
      %v1346 = vld [vmem:[%s15 + $0x70] sm:$0xf]
      %v1347 = vld [vmem:[%s15 + $0x74] sm:$0xf]
      %v1348 = vld [vmem:[%s15 + $0x78] sm:$0xf]
      %v1349 = vld [vmem:[%s15 + $0x7c] sm:$0xf]
      loop: start=0, step=1, limit=2
      $region89: #{mamba_layer_forward.1} parent=87 // loop_pre_header
        _
      $region90: #{mamba_layer_forward.1} parent=87 // loop_header
        %s1351 = sphi 0, %s1355
        %p1352 = scmp.ge.s32.totalorder %s1351, 2
        %v1356 = vphi 0.0, %v1932
        %v1357 = vphi 0.0, %v1933
      $region91: #{mamba_layer_forward.1} parent=87 // loop_header_branch
        %1354 = sbr.rel (%p1352) target = $region95
      $region92: #{mamba_layer_forward.1} parent=87 // loop_body
        %s1358 = smul.u32 %s1351, 32
        %s1359 = scalar_lea.vmem [#allocation2], %s1358
        %v1360 = vld [vmem:[%s1359] sm:$0xff]
        %v1361 = vld [vmem:[%s1359 + $0x8] sm:$0xff]
        %v1362 = vld [vmem:[%s1359 + $0x10] sm:$0xff]
        %v1363 = vld [vmem:[%s1359 + $0x18] sm:$0xff]
        %s1364 = scalar_lea.vmem [#allocation3], %s1358
        %v1365 = vld [vmem:[%s1364] sm:$0xff]
        %v1366 = vld [vmem:[%s1364 + $0x8] sm:$0xff]
        %v1367 = vld [vmem:[%s1364 + $0x10] sm:$0xff]
        %v1368 = vld [vmem:[%s1364 + $0x18] sm:$0xff]
        %s1369 = scalar_lea.vmem [#allocation4], %s1358
        %v1370 = vld [vmem:[%s1369] sm:$0xff]
        %v1371 = vld [vmem:[%s1369 + $0x8] sm:$0xff]
        %v1372 = vld [vmem:[%s1369 + $0x10] sm:$0xff]
        %v1373 = vld [vmem:[%s1369 + $0x18] sm:$0xff]
        %v1374 = vpack.c.bf16 %v1361, %v1360
        %v1375 = vpack.c.bf16 %v1363, %v1362
        %v1376 = vpack.c.bf16 %v1366, %v1365
        %v1377 = vpack.c.bf16 %v1368, %v1367
        %v1380 = vunpack.c.l.b16 %v1308
        %v1381 = vunpack.c.h.b16 %v1308
        %v1382 = vunpack.c.l.b16 %v1309
        %v1383 = vunpack.c.h.b16 %v1309
        %v1384 = vpack.c.b16 %v1382, %v1380
        %v1385 = vpack.c.b16 %v1383, %v1381
        %v1389 = vsel %vm1119, %v1374, 0
        %v1392 = vsel %vm1119, %v1375, 0
        %v1395 = vsel %vm1119, %v1376, 0
        %v1398 = vsel %vm1119, %v1377, 0
        %1400 = vmatpush.bf16.msra.mxu0 0
        %1401 = vmatpush.bf16.msra.mxu0 0
        %1402 = vmatpush.bf16.msra.mxu0 0
        %1403 = vmatpush.bf16.msra.mxu0 0
        %1404 = vmatpush.bf16.msra.mxu0 0
        %1405 = vmatpush.bf16.msra.mxu0 0
        %1406 = vmatpush.bf16.msra.mxu0 0
        %1407 = vmatpush.bf16.msra.mxu0 %v1384
        %1408 = vmatmul.bf16.gmra.mxu0 %v1389
        %v1409 = vpop.f32.mrf.mxu0
        %v1410 = vadd.f32 0.0, %v1409
        %v1411 = vpop.f32.mrf.mxu0
        %v1412 = vadd.f32 0.0, %v1411
        %1413 = vmatmul.bf16.gmra.mxu0 %v1392
        %v1414 = vpop.f32.mrf.mxu0
        %v1415 = vadd.f32 0.0, %v1414
        %v1416 = vpop.f32.mrf.mxu0
        %v1417 = vadd.f32 0.0, %v1416
        %1418 = vmatmul.bf16.gmra.mxu0 %v1395
        %v1419 = vpop.f32.mrf.mxu0
        %v1420 = vadd.f32 0.0, %v1419
        %v1421 = vpop.f32.mrf.mxu0
        %v1422 = vadd.f32 0.0, %v1421
        %1423 = vmatmul.bf16.gmra.mxu0 %v1398
        %v1424 = vpop.f32.mrf.mxu0
        %v1425 = vadd.f32 0.0, %v1424
        %v1426 = vpop.f32.mrf.mxu0
        %v1427 = vadd.f32 0.0, %v1426
        %1428 = vdwg.mxu0
        %1429 = vmatpush.bf16.msra.mxu0 0
        %1430 = vmatpush.bf16.msra.mxu0 0
        %1431 = vmatpush.bf16.msra.mxu0 0
        %1432 = vmatpush.bf16.msra.mxu0 0
        %1433 = vmatpush.bf16.msra.mxu0 0
        %1434 = vmatpush.bf16.msra.mxu0 0
        %1435 = vmatpush.bf16.msra.mxu0 0
        %1436 = vmatpush.bf16.msra.mxu0 %v1385
        %1437 = vmatmul.bf16.gmra.mxu0 %v1389
        %v1438 = vpop.f32.mrf.mxu0
        %v1439 = vadd.f32 0.0, %v1438
        %v1440 = vpop.f32.mrf.mxu0
        %v1441 = vadd.f32 0.0, %v1440
        %1442 = vmatmul.bf16.gmra.mxu0 %v1392
        %v1443 = vpop.f32.mrf.mxu0
        %v1444 = vadd.f32 0.0, %v1443
        %v1445 = vpop.f32.mrf.mxu0
        %v1446 = vadd.f32 0.0, %v1445
        %1447 = vmatmul.bf16.gmra.mxu0 %v1395
        %v1448 = vpop.f32.mrf.mxu0
        %v1449 = vadd.f32 0.0, %v1448
        %v1450 = vpop.f32.mrf.mxu0
        %v1451 = vadd.f32 0.0, %v1450
        %1452 = vmatmul.bf16.gmra.mxu0 %v1398
        %v1453 = vpop.f32.mrf.mxu0
        %v1454 = vadd.f32 0.0, %v1453
        %v1455 = vpop.f32.mrf.mxu0
        %v1456 = vadd.f32 0.0, %v1455
        %1457 = vdwg.mxu0
        %v1459 = vperm.slane %v1307, 0
        %v1460 = vperm.slane %v1307, 1
        %v1463 = vmul.f32 %v1410, %v1459
        %v1464 = vmul.f32 %v1439, %v1460
        %v1465 = vmul.f32 %v1412, %v1459
        %v1466 = vmul.f32 %v1441, %v1460
        %v1467 = vmul.f32 %v1415, %v1459
        %v1468 = vmul.f32 %v1444, %v1460
        %v1469 = vmul.f32 %v1417, %v1459
        %v1470 = vmul.f32 %v1446, %v1460
        %v1471 = vmul.f32 %v1463, 1.442695
        %v1472 = vpow.pop %v1471
        %v1473 = vmul.f32 %v1464, 1.442695
        %v1474 = vpow.pop %v1473
        %v1475 = vmul.f32 %v1465, 1.442695
        %v1476 = vpow.pop %v1475
        %v1477 = vmul.f32 %v1466, 1.442695
        %v1478 = vpow.pop %v1477
        %v1479 = vmul.f32 %v1467, 1.442695
        %v1480 = vpow.pop %v1479
        %v1481 = vmul.f32 %v1468, 1.442695
        %v1482 = vpow.pop %v1481
        %v1483 = vmul.f32 %v1469, 1.442695
        %v1484 = vpow.pop %v1483
        %v1485 = vmul.f32 %v1470, 1.442695
        %v1486 = vpow.pop %v1485
        %v1487 = vpack.c.bf16 %v1371, %v1370
        %v1488 = vpack.c.bf16 %v1373, %v1372
        %v1497 = vunpack.c.l.b16 %v1310
        %v1498 = vunpack.c.h.b16 %v1310
        %v1499 = vunpack.c.l.b16 %v1311
        %v1500 = vunpack.c.h.b16 %v1311
        %v1501 = vunpack.c.l.b16 %v1312
        %v1502 = vunpack.c.h.b16 %v1312
        %v1503 = vunpack.c.l.b16 %v1313
        %v1504 = vunpack.c.h.b16 %v1313
        %v1505 = vunpack.c.l.b16 %v1314
        %v1506 = vunpack.c.h.b16 %v1314
        %v1507 = vunpack.c.l.b16 %v1315
        %v1508 = vunpack.c.h.b16 %v1315
        %v1509 = vunpack.c.l.b16 %v1316
        %v1510 = vunpack.c.h.b16 %v1316
        %v1511 = vunpack.c.l.b16 %v1317
        %v1512 = vunpack.c.h.b16 %v1317
        %v1513 = vpack.c.b16 %v1501, %v1497
        %v1514 = vpack.c.b16 %v1502, %v1498
        %v1515 = vpack.c.b16 %v1503, %v1499
        %v1516 = vpack.c.b16 %v1504, %v1500
        %v1517 = vpack.c.b16 %v1509, %v1505
        %v1518 = vpack.c.b16 %v1510, %v1506
        %v1519 = vpack.c.b16 %v1511, %v1507
        %v1520 = vpack.c.b16 %v1512, %v1508
        %v1530 = vsel %vm1286, %v1487, 0
        %v1533 = vsel %vm1286, %v1488, 0
        %1535 = vmatpush.bf16.msra.mxu0 0
        %1536 = vmatpush.bf16.msra.mxu0 0
        %1537 = vmatpush.bf16.msra.mxu0 0
        %1538 = vmatpush.bf16.msra.mxu0 0
        %1539 = vmatpush.bf16.msra.mxu0 0
        %1540 = vmatpush.bf16.msra.mxu0 0
        %1541 = vmatpush.bf16.msra.mxu0 %v1517
        %1542 = vmatpush.bf16.msra.mxu0 %v1513
        %1543 = vmatmul.bf16.gmra.mxu0 %v1530
        %v1544 = vpop.f32.mrf.mxu0
        %v1545 = vadd.f32 0.0, %v1544
        %v1546 = vpop.f32.mrf.mxu0
        %v1547 = vadd.f32 0.0, %v1546
        %1548 = vmatmul.bf16.gmra.mxu0 %v1533
        %v1549 = vpop.f32.mrf.mxu0
        %v1550 = vadd.f32 0.0, %v1549
        %v1551 = vpop.f32.mrf.mxu0
        %v1552 = vadd.f32 0.0, %v1551
        %1553 = vdwg.mxu0
        %1554 = vmatpush.bf16.msra.mxu0 0
        %1555 = vmatpush.bf16.msra.mxu0 0
        %1556 = vmatpush.bf16.msra.mxu0 0
        %1557 = vmatpush.bf16.msra.mxu0 0
        %1558 = vmatpush.bf16.msra.mxu0 0
        %1559 = vmatpush.bf16.msra.mxu0 0
        %1560 = vmatpush.bf16.msra.mxu0 %v1518
        %1561 = vmatpush.bf16.msra.mxu0 %v1514
        %1562 = vmatmul.bf16.gmra.mxu0 %v1530
        %v1563 = vpop.f32.mrf.mxu0
        %v1564 = vadd.f32 0.0, %v1563
        %v1565 = vpop.f32.mrf.mxu0
        %v1566 = vadd.f32 0.0, %v1565
        %1567 = vmatmul.bf16.gmra.mxu0 %v1533
        %v1568 = vpop.f32.mrf.mxu0
        %v1569 = vadd.f32 0.0, %v1568
        %v1570 = vpop.f32.mrf.mxu0
        %v1571 = vadd.f32 0.0, %v1570
        %1572 = vdwg.mxu0
        %1573 = vmatpush.bf16.msra.mxu0 0
        %1574 = vmatpush.bf16.msra.mxu0 0
        %1575 = vmatpush.bf16.msra.mxu0 0
        %1576 = vmatpush.bf16.msra.mxu0 0
        %1577 = vmatpush.bf16.msra.mxu0 0
        %1578 = vmatpush.bf16.msra.mxu0 0
        %1579 = vmatpush.bf16.msra.mxu0 %v1519
        %1580 = vmatpush.bf16.msra.mxu0 %v1515
        %1581 = vmatmul.bf16.gmra.mxu0 %v1530
        %v1582 = vpop.f32.mrf.mxu0
        %v1583 = vadd.f32 0.0, %v1582
        %v1584 = vpop.f32.mrf.mxu0
        %v1585 = vadd.f32 0.0, %v1584
        %1586 = vmatmul.bf16.gmra.mxu0 %v1533
        %v1587 = vpop.f32.mrf.mxu0
        %v1588 = vadd.f32 0.0, %v1587
        %v1589 = vpop.f32.mrf.mxu0
        %v1590 = vadd.f32 0.0, %v1589
        %1591 = vdwg.mxu0
        %1592 = vmatpush.bf16.msra.mxu0 0
        %1593 = vmatpush.bf16.msra.mxu0 0
        %1594 = vmatpush.bf16.msra.mxu0 0
        %1595 = vmatpush.bf16.msra.mxu0 0
        %1596 = vmatpush.bf16.msra.mxu0 0
        %1597 = vmatpush.bf16.msra.mxu0 0
        %1598 = vmatpush.bf16.msra.mxu0 %v1520
        %1599 = vmatpush.bf16.msra.mxu0 %v1516
        %1600 = vmatmul.bf16.gmra.mxu0 %v1530
        %v1601 = vpop.f32.mrf.mxu0
        %v1602 = vadd.f32 0.0, %v1601
        %v1603 = vpop.f32.mrf.mxu0
        %v1604 = vadd.f32 0.0, %v1603
        %1605 = vmatmul.bf16.gmra.mxu0 %v1533
        %v1606 = vpop.f32.mrf.mxu0
        %v1607 = vadd.f32 0.0, %v1606
        %v1608 = vpop.f32.mrf.mxu0
        %v1609 = vadd.f32 0.0, %v1608
        %1610 = vdwg.mxu0
        %v1611 = vmul.f32 %v1420, %v1545
        %v1612 = vmul.f32 %v1449, %v1564
        %v1613 = vmul.f32 %v1422, %v1547
        %v1614 = vmul.f32 %v1451, %v1566
        %v1615 = vmul.f32 %v1425, %v1550
        %v1616 = vmul.f32 %v1454, %v1569
        %v1617 = vmul.f32 %v1427, %v1552
        %v1618 = vmul.f32 %v1456, %v1571
        %v1619 = vrot.slane %v1472, 7
        %v1620 = vrot.slane %v1474, 7
        %v1621 = vrot.slane %v1476, 7
        %v1622 = vrot.slane %v1478, 7
        %v1623 = vrot.slane %v1480, 7
        %v1624 = vrot.slane %v1482, 7
        %v1625 = vrot.slane %v1484, 7
        %v1626 = vrot.slane %v1486, 7
        %v1627 = vsel %vm892, %v1623, %v1625
        %v1628 = vsel %vm892, %v1624, %v1626
        %v1629 = vsel %vm892, %v1621, %v1623
        %v1630 = vsel %vm892, %v1622, %v1624
        %v1631 = vsel %vm892, %v1619, %v1621
        %v1632 = vsel %vm892, %v1620, %v1622
        %v1633 = vsel %vm892, %v1625, %v1619
        %v1634 = vsel %vm892, %v1626, %v1620
        %v1635 = vsel %vm876, %v1633, 1.0
        %v1636 = vsel %vm876, %v1634, 1.0
        %v1637 = vsel %vm877, %v1631, 1.0
        %v1638 = vsel %vm877, %v1632, 1.0
        %v1639 = vsel %vm878, %v1629, 1.0
        %v1640 = vsel %vm878, %v1630, 1.0
        %v1641 = vsel %vm879, %v1627, 1.0
        %v1642 = vsel %vm879, %v1628, 1.0
        %v1643 = vrot.slane %v1611, 7
        %v1644 = vrot.slane %v1612, 7
        %v1645 = vrot.slane %v1613, 7
        %v1646 = vrot.slane %v1614, 7
        %v1647 = vrot.slane %v1615, 7
        %v1648 = vrot.slane %v1616, 7
        %v1649 = vrot.slane %v1617, 7
        %v1650 = vrot.slane %v1618, 7
        %v1651 = vsel %vm892, %v1647, %v1649
        %v1652 = vsel %vm892, %v1648, %v1650
        %v1653 = vsel %vm892, %v1645, %v1647
        %v1654 = vsel %vm892, %v1646, %v1648
        %v1655 = vsel %vm892, %v1643, %v1645
        %v1656 = vsel %vm892, %v1644, %v1646
        %v1657 = vsel %vm892, %v1649, %v1643
        %v1658 = vsel %vm892, %v1650, %v1644
        %v1659 = vsel %vm876, %v1657, 0.0
        %v1660 = vsel %vm876, %v1658, 0.0
        %v1661 = vsel %vm877, %v1655, 0.0
        %v1662 = vsel %vm877, %v1656, 0.0
        %v1663 = vsel %vm878, %v1653, 0.0
        %v1664 = vsel %vm878, %v1654, 0.0
        %v1665 = vsel %vm879, %v1651, 0.0
        %v1666 = vsel %vm879, %v1652, 0.0
        %v1667 = vmul.f32 %v1472, %v1659
        %v1668 = vmul.f32 %v1474, %v1660
        %v1669 = vmul.f32 %v1476, %v1661
        %v1670 = vmul.f32 %v1478, %v1662
        %v1671 = vmul.f32 %v1480, %v1663
        %v1672 = vmul.f32 %v1482, %v1664
        %v1673 = vmul.f32 %v1484, %v1665
        %v1674 = vmul.f32 %v1486, %v1666
        %v1675 = vadd.f32 %v1667, %v1611
        %v1676 = vadd.f32 %v1668, %v1612
        %v1677 = vadd.f32 %v1669, %v1613
        %v1678 = vadd.f32 %v1670, %v1614
        %v1679 = vadd.f32 %v1671, %v1615
        %v1680 = vadd.f32 %v1672, %v1616
        %v1681 = vadd.f32 %v1673, %v1617
        %v1682 = vadd.f32 %v1674, %v1618
        %v1683 = vmul.f32 %v1472, %v1635
        %v1684 = vmul.f32 %v1474, %v1636
        %v1685 = vmul.f32 %v1476, %v1637
        %v1686 = vmul.f32 %v1478, %v1638
        %v1687 = vmul.f32 %v1480, %v1639
        %v1688 = vmul.f32 %v1482, %v1640
        %v1689 = vmul.f32 %v1484, %v1641
        %v1690 = vmul.f32 %v1486, %v1642
        %v1691 = vrot.slane %v1683, 6
        %v1692 = vrot.slane %v1684, 6
        %v1693 = vrot.slane %v1685, 6
        %v1694 = vrot.slane %v1686, 6
        %v1695 = vrot.slane %v1687, 6
        %v1696 = vrot.slane %v1688, 6
        %v1697 = vrot.slane %v1689, 6
        %v1698 = vrot.slane %v1690, 6
        %v1699 = vsel %vm946, %v1695, %v1697
        %v1700 = vsel %vm946, %v1696, %v1698
        %v1701 = vsel %vm946, %v1693, %v1695
        %v1702 = vsel %vm946, %v1694, %v1696
        %v1703 = vsel %vm946, %v1691, %v1693
        %v1704 = vsel %vm946, %v1692, %v1694
        %v1705 = vsel %vm946, %v1697, %v1691
        %v1706 = vsel %vm946, %v1698, %v1692
        %v1707 = vsel %vm930, %v1705, 1.0
        %v1708 = vsel %vm930, %v1706, 1.0
        %v1709 = vsel %vm931, %v1703, 1.0
        %v1710 = vsel %vm931, %v1704, 1.0
        %v1711 = vsel %vm932, %v1701, 1.0
        %v1712 = vsel %vm932, %v1702, 1.0
        %v1713 = vsel %vm933, %v1699, 1.0
        %v1714 = vsel %vm933, %v1700, 1.0
        %v1715 = vrot.slane %v1675, 6
        %v1716 = vrot.slane %v1676, 6
        %v1717 = vrot.slane %v1677, 6
        %v1718 = vrot.slane %v1678, 6
        %v1719 = vrot.slane %v1679, 6
        %v1720 = vrot.slane %v1680, 6
        %v1721 = vrot.slane %v1681, 6
        %v1722 = vrot.slane %v1682, 6
        %v1723 = vsel %vm946, %v1719, %v1721
        %v1724 = vsel %vm946, %v1720, %v1722
        %v1725 = vsel %vm946, %v1717, %v1719
        %v1726 = vsel %vm946, %v1718, %v1720
        %v1727 = vsel %vm946, %v1715, %v1717
        %v1728 = vsel %vm946, %v1716, %v1718
        %v1729 = vsel %vm946, %v1721, %v1715
        %v1730 = vsel %vm946, %v1722, %v1716
        %v1731 = vsel %vm930, %v1729, 0.0
        %v1732 = vsel %vm930, %v1730, 0.0
        %v1733 = vsel %vm931, %v1727, 0.0
        %v1734 = vsel %vm931, %v1728, 0.0
        %v1735 = vsel %vm932, %v1725, 0.0
        %v1736 = vsel %vm932, %v1726, 0.0
        %v1737 = vsel %vm933, %v1723, 0.0
        %v1738 = vsel %vm933, %v1724, 0.0
        %v1739 = vmul.f32 %v1683, %v1731
        %v1740 = vmul.f32 %v1684, %v1732
        %v1741 = vmul.f32 %v1685, %v1733
        %v1742 = vmul.f32 %v1686, %v1734
        %v1743 = vmul.f32 %v1687, %v1735
        %v1744 = vmul.f32 %v1688, %v1736
        %v1745 = vmul.f32 %v1689, %v1737
        %v1746 = vmul.f32 %v1690, %v1738
        %v1747 = vadd.f32 %v1739, %v1675
        %v1748 = vadd.f32 %v1740, %v1676
        %v1749 = vadd.f32 %v1741, %v1677
        %v1750 = vadd.f32 %v1742, %v1678
        %v1751 = vadd.f32 %v1743, %v1679
        %v1752 = vadd.f32 %v1744, %v1680
        %v1753 = vadd.f32 %v1745, %v1681
        %v1754 = vadd.f32 %v1746, %v1682
        %v1755 = vmul.f32 %v1683, %v1707
        %v1756 = vmul.f32 %v1684, %v1708
        %v1757 = vmul.f32 %v1685, %v1709
        %v1758 = vmul.f32 %v1686, %v1710
        %v1759 = vmul.f32 %v1687, %v1711
        %v1760 = vmul.f32 %v1688, %v1712
        %v1761 = vmul.f32 %v1689, %v1713
        %v1762 = vmul.f32 %v1690, %v1714
        %v1763 = vrot.slane %v1755, 4
        %v1764 = vrot.slane %v1756, 4
        %v1765 = vrot.slane %v1757, 4
        %v1766 = vrot.slane %v1758, 4
        %v1767 = vrot.slane %v1759, 4
        %v1768 = vrot.slane %v1760, 4
        %v1769 = vrot.slane %v1761, 4
        %v1770 = vrot.slane %v1762, 4
        %vm1771 = vcmp.lt.s32.totalorder %v855, 4
        %v1772 = vsel %vm1771, %v1767, %v1769
        %v1773 = vsel %vm1771, %v1768, %v1770
        %v1774 = vsel %vm1771, %v1765, %v1767
        %v1775 = vsel %vm1771, %v1766, %v1768
        %v1776 = vsel %vm1771, %v1763, %v1765
        %v1777 = vsel %vm1771, %v1764, %v1766
        %v1778 = vsel %vm1771, %v1769, %v1763
        %v1779 = vsel %vm1771, %v1770, %v1764
        %v1780 = vsel %vm1295, %v1778, 1.0
        %v1781 = vsel %vm1295, %v1779, 1.0
        %v1782 = vsel %vm1296, %v1776, 1.0
        %v1783 = vsel %vm1296, %v1777, 1.0
        %v1784 = vsel %vm1297, %v1774, 1.0
        %v1785 = vsel %vm1297, %v1775, 1.0
        %v1786 = vsel %vm1298, %v1772, 1.0
        %v1787 = vsel %vm1298, %v1773, 1.0
        %v1788 = vrot.slane %v1747, 4
        %v1789 = vrot.slane %v1748, 4
        %v1790 = vrot.slane %v1749, 4
        %v1791 = vrot.slane %v1750, 4
        %v1792 = vrot.slane %v1751, 4
        %v1793 = vrot.slane %v1752, 4
        %v1794 = vrot.slane %v1753, 4
        %v1795 = vrot.slane %v1754, 4
        %v1796 = vsel %vm1771, %v1792, %v1794
        %v1797 = vsel %vm1771, %v1793, %v1795
        %v1798 = vsel %vm1771, %v1790, %v1792
        %v1799 = vsel %vm1771, %v1791, %v1793
        %v1800 = vsel %vm1771, %v1788, %v1790
        %v1801 = vsel %vm1771, %v1789, %v1791
        %v1802 = vsel %vm1771, %v1794, %v1788
        %v1803 = vsel %vm1771, %v1795, %v1789
        %v1804 = vsel %vm1295, %v1802, 0.0
        %v1805 = vsel %vm1295, %v1803, 0.0
        %v1806 = vsel %vm1296, %v1800, 0.0
        %v1807 = vsel %vm1296, %v1801, 0.0
        %v1808 = vsel %vm1297, %v1798, 0.0
        %v1809 = vsel %vm1297, %v1799, 0.0
        %v1810 = vsel %vm1298, %v1796, 0.0
        %v1811 = vsel %vm1298, %v1797, 0.0
        %v1812 = vmul.f32 %v1755, %v1804
        %v1813 = vmul.f32 %v1756, %v1805
        %v1814 = vmul.f32 %v1757, %v1806
        %v1815 = vmul.f32 %v1758, %v1807
        %v1816 = vmul.f32 %v1759, %v1808
        %v1817 = vmul.f32 %v1760, %v1809
        %v1818 = vmul.f32 %v1761, %v1810
        %v1819 = vmul.f32 %v1762, %v1811
        %v1820 = vadd.f32 %v1812, %v1747
        %v1821 = vadd.f32 %v1813, %v1748
        %v1822 = vadd.f32 %v1814, %v1749
        %v1823 = vadd.f32 %v1815, %v1750
        %v1824 = vadd.f32 %v1816, %v1751
        %v1825 = vadd.f32 %v1817, %v1752
        %v1826 = vadd.f32 %v1818, %v1753
        %v1827 = vadd.f32 %v1819, %v1754
        %v1828 = vmul.f32 %v1755, %v1780
        %v1829 = vmul.f32 %v1756, %v1781
        %v1830 = vmul.f32 %v1757, %v1782
        %v1831 = vmul.f32 %v1758, %v1783
        %v1832 = vmul.f32 %v1759, %v1784
        %v1833 = vmul.f32 %v1760, %v1785
        %v1834 = vmul.f32 %v1761, %v1786
        %v1835 = vmul.f32 %v1762, %v1787
        %v1836 = vsel %vm1299, %v1834, 1.0
        %v1837 = vsel %vm1299, %v1835, 1.0
        %v1838 = vsel %vm1300, %v1828, 1.0
        %v1839 = vsel %vm1300, %v1829, 1.0
        %v1840 = vsel %vm1301, %v1830, 1.0
        %v1841 = vsel %vm1301, %v1831, 1.0
        %v1842 = vsel %vm1302, %v1832, 1.0
        %v1843 = vsel %vm1302, %v1833, 1.0
        %v1844 = vsel %vm1299, %v1826, 0.0
        %v1845 = vsel %vm1299, %v1827, 0.0
        %v1846 = vsel %vm1300, %v1820, 0.0
        %v1847 = vsel %vm1300, %v1821, 0.0
        %v1848 = vsel %vm1301, %v1822, 0.0
        %v1849 = vsel %vm1301, %v1823, 0.0
        %v1850 = vsel %vm1302, %v1824, 0.0
        %v1851 = vsel %vm1302, %v1825, 0.0
        %v1852 = vmul.f32 %v1828, %v1844
        %v1853 = vmul.f32 %v1829, %v1845
        %v1854 = vmul.f32 %v1830, %v1846
        %v1855 = vmul.f32 %v1831, %v1847
        %v1856 = vmul.f32 %v1832, %v1848
        %v1857 = vmul.f32 %v1833, %v1849
        %v1858 = vmul.f32 %v1834, %v1850
        %v1859 = vmul.f32 %v1835, %v1851
        %v1860 = vadd.f32 %v1852, %v1820
        %v1861 = vadd.f32 %v1853, %v1821
        %v1862 = vadd.f32 %v1854, %v1822
        %v1863 = vadd.f32 %v1855, %v1823
        %v1864 = vadd.f32 %v1856, %v1824
        %v1865 = vadd.f32 %v1857, %v1825
        %v1866 = vadd.f32 %v1858, %v1826
        %v1867 = vadd.f32 %v1859, %v1827
        %v1868 = vmul.f32 %v1828, %v1836
        %v1869 = vmul.f32 %v1829, %v1837
        %v1870 = vmul.f32 %v1830, %v1838
        %v1871 = vmul.f32 %v1831, %v1839
        %v1872 = vmul.f32 %v1832, %v1840
        %v1873 = vmul.f32 %v1833, %v1841
        %v1874 = vmul.f32 %v1834, %v1842
        %v1875 = vmul.f32 %v1835, %v1843
        %v1876 = vsel %vm1303, %v1872, 1.0
        %v1877 = vsel %vm1303, %v1873, 1.0
        %v1878 = vsel %vm1304, %v1874, 1.0
        %v1879 = vsel %vm1304, %v1875, 1.0
        %v1880 = vsel %vm1305, %v1868, 1.0
        %v1881 = vsel %vm1305, %v1869, 1.0
        %v1882 = vsel %vm1306, %v1870, 1.0
        %v1883 = vsel %vm1306, %v1871, 1.0
        %v1884 = vsel %vm1303, %v1864, 0.0
        %v1885 = vsel %vm1303, %v1865, 0.0
        %v1886 = vsel %vm1304, %v1866, 0.0
        %v1887 = vsel %vm1304, %v1867, 0.0
        %v1888 = vsel %vm1305, %v1860, 0.0
        %v1889 = vsel %vm1305, %v1861, 0.0
        %v1890 = vsel %vm1306, %v1862, 0.0
        %v1891 = vsel %vm1306, %v1863, 0.0
        %v1892 = vmul.f32 %v1868, %v1884
        %v1893 = vmul.f32 %v1869, %v1885
        %v1894 = vmul.f32 %v1870, %v1886
        %v1895 = vmul.f32 %v1871, %v1887
        %v1896 = vmul.f32 %v1872, %v1888
        %v1897 = vmul.f32 %v1873, %v1889
        %v1898 = vmul.f32 %v1874, %v1890
        %v1899 = vmul.f32 %v1875, %v1891
        %v1900 = vadd.f32 %v1892, %v1860
        %v1901 = vadd.f32 %v1893, %v1861
        %v1902 = vadd.f32 %v1894, %v1862
        %v1903 = vadd.f32 %v1895, %v1863
        %v1904 = vadd.f32 %v1896, %v1864
        %v1905 = vadd.f32 %v1897, %v1865
        %v1906 = vadd.f32 %v1898, %v1866
        %v1907 = vadd.f32 %v1899, %v1867
        %v1908 = vmul.f32 %v1868, %v1876
        %v1909 = vmul.f32 %v1869, %v1877
        %v1910 = vmul.f32 %v1870, %v1878
        %v1911 = vmul.f32 %v1871, %v1879
        %v1912 = vmul.f32 %v1872, %v1880
        %v1913 = vmul.f32 %v1873, %v1881
        %v1914 = vmul.f32 %v1874, %v1882
        %v1915 = vmul.f32 %v1875, %v1883
        %v1916 = vperm.slane %v1356, 7
        %v1917 = vperm.slane %v1357, 7
        %v1918 = vmul.f32 %v1908, %v1916
        %v1919 = vmul.f32 %v1909, %v1917
        %v1920 = vmul.f32 %v1910, %v1916
        %v1921 = vmul.f32 %v1911, %v1917
        %v1922 = vmul.f32 %v1912, %v1916
        %v1923 = vmul.f32 %v1913, %v1917
        %v1924 = vmul.f32 %v1914, %v1916
        %v1925 = vmul.f32 %v1915, %v1917
        %v1926 = vadd.f32 %v1918, %v1900
        %v1927 = vadd.f32 %v1919, %v1901
        %v1928 = vadd.f32 %v1920, %v1902
        %v1929 = vadd.f32 %v1921, %v1903
        %v1930 = vadd.f32 %v1922, %v1904
        %v1931 = vadd.f32 %v1923, %v1905
        %v1932 = vadd.f32 %v1924, %v1906
        %v1933 = vadd.f32 %v1925, %v1907
        %v1934 = vmul.f32 %v1926, %v1583
        %v1935 = vmul.f32 %v1927, %v1602
        %v1936 = vmul.f32 %v1928, %v1585
        %v1937 = vmul.f32 %v1929, %v1604
        %v1938 = vmul.f32 %v1930, %v1588
        %v1939 = vmul.f32 %v1931, %v1607
        %v1940 = vmul.f32 %v1932, %v1590
        %v1941 = vmul.f32 %v1933, %v1609
        %v1942 = vpack.c.bf16 %v1936, %v1934
        %v1943 = vpack.c.bf16 %v1937, %v1935
        %v1944 = vpack.c.bf16 %v1940, %v1938
        %v1945 = vpack.c.bf16 %v1941, %v1939
        %v1978 = vunpack.c.l.b16 %v1318
        %v1979 = vunpack.c.l.b16 %v1319
        %v1980 = vunpack.c.l.b16 %v1320
        %v1981 = vunpack.c.l.b16 %v1321
        %v1982 = vunpack.c.l.b16 %v1322
        %v1983 = vunpack.c.l.b16 %v1323
        %v1984 = vunpack.c.l.b16 %v1324
        %v1985 = vunpack.c.l.b16 %v1325
        %v1986 = vunpack.c.l.b16 %v1326
        %v1987 = vunpack.c.l.b16 %v1327
        %v1988 = vunpack.c.l.b16 %v1328
        %v1989 = vunpack.c.l.b16 %v1329
        %v1990 = vunpack.c.l.b16 %v1330
        %v1991 = vunpack.c.l.b16 %v1331
        %v1992 = vunpack.c.l.b16 %v1332
        %v1993 = vunpack.c.l.b16 %v1333
        %v1994 = vunpack.c.l.b16 %v1334
        %v1995 = vunpack.c.l.b16 %v1335
        %v1996 = vunpack.c.l.b16 %v1336
        %v1997 = vunpack.c.l.b16 %v1337
        %v1998 = vunpack.c.l.b16 %v1338
        %v1999 = vunpack.c.l.b16 %v1339
        %v2000 = vunpack.c.l.b16 %v1340
        %v2001 = vunpack.c.l.b16 %v1341
        %v2002 = vunpack.c.l.b16 %v1342
        %v2003 = vunpack.c.l.b16 %v1343
        %v2004 = vunpack.c.l.b16 %v1344
        %v2005 = vunpack.c.l.b16 %v1345
        %v2006 = vunpack.c.l.b16 %v1346
        %v2007 = vunpack.c.l.b16 %v1347
        %v2008 = vunpack.c.l.b16 %v1348
        %v2009 = vunpack.c.l.b16 %v1349
        %v2010 = vpack.c.b16 %v1979, %v1978
        %v2011 = vpack.c.b16 %v1981, %v1980
        %v2012 = vpack.c.b16 %v1983, %v1982
        %v2013 = vpack.c.b16 %v1985, %v1984
        %v2014 = vpack.c.b16 %v1987, %v1986
        %v2015 = vpack.c.b16 %v1989, %v1988
        %v2016 = vpack.c.b16 %v1991, %v1990
        %v2017 = vpack.c.b16 %v1993, %v1992
        %v2018 = vpack.c.b16 %v1995, %v1994
        %v2019 = vpack.c.b16 %v1997, %v1996
        %v2020 = vpack.c.b16 %v1999, %v1998
        %v2021 = vpack.c.b16 %v2001, %v2000
        %v2022 = vpack.c.b16 %v2003, %v2002
        %v2023 = vpack.c.b16 %v2005, %v2004
        %v2024 = vpack.c.b16 %v2007, %v2006
        %v2025 = vpack.c.b16 %v2009, %v2008
        %2042 = vmatpush.bf16.msra.mxu0 %v2017
        %2043 = vmatpush.bf16.msra.mxu0 %v2016
        %2044 = vmatpush.bf16.msra.mxu0 %v2015
        %2045 = vmatpush.bf16.msra.mxu0 %v2014
        %2046 = vmatpush.bf16.msra.mxu0 %v2013
        %2047 = vmatpush.bf16.msra.mxu0 %v2012
        %2048 = vmatpush.bf16.msra.mxu0 %v2011
        %2049 = vmatpush.bf16.msra.mxu0 %v2010
        %2050 = vmatmul.bf16.gmra.mxu0 %v1942
        %v2051 = vpop.f32.mrf.mxu0
        %v2052 = vadd.f32 0.0, %v2051
        %v2053 = vpop.f32.mrf.mxu0
        %v2054 = vadd.f32 0.0, %v2053
        %2055 = vmatmul.bf16.gmra.mxu0 %v1944
        %v2056 = vpop.f32.mrf.mxu0
        %v2057 = vadd.f32 0.0, %v2056
        %v2058 = vpop.f32.mrf.mxu0
        %v2059 = vadd.f32 0.0, %v2058
        %2060 = vdwg.mxu0
        %2061 = vmatpush.bf16.msra.mxu0 %v2025
        %2062 = vmatpush.bf16.msra.mxu0 %v2024
        %2063 = vmatpush.bf16.msra.mxu0 %v2023
        %2064 = vmatpush.bf16.msra.mxu0 %v2022
        %2065 = vmatpush.bf16.msra.mxu0 %v2021
        %2066 = vmatpush.bf16.msra.mxu0 %v2020
        %2067 = vmatpush.bf16.msra.mxu0 %v2019
        %2068 = vmatpush.bf16.msra.mxu0 %v2018
        %2069 = vmatmul.bf16.gmra.mxu0 %v1943
        %v2070 = vpop.f32.mrf.mxu0
        %v2071 = vadd.f32 %v2052, %v2070
        %v2072 = vpop.f32.mrf.mxu0
        %v2073 = vadd.f32 %v2054, %v2072
        %2074 = vmatmul.bf16.gmra.mxu0 %v1945
        %v2075 = vpop.f32.mrf.mxu0
        %v2076 = vadd.f32 %v2057, %v2075
        %v2077 = vpop.f32.mrf.mxu0
        %v2078 = vadd.f32 %v2059, %v2077
        %2079 = vdwg.mxu0
        %s2080 = scalar_lea.vmem [#allocation5], %s1358
        %2081 = vst.msk [vmem:[%s2080] sm:$0xff] %vm1119, %v2071
        %2082 = vst.msk [vmem:[%s2080 + $0x8] sm:$0xff] %vm1119, %v2073
        %2083 = vst.msk [vmem:[%s2080 + $0x10] sm:$0xff] %vm1119, %v2076
        %2084 = vst.msk [vmem:[%s2080 + $0x18] sm:$0xff] %vm1119, %v2078
      $region93: #{mamba_layer_forward.1} parent=87 // loop_footer
        %s1355 = sadd.s32 1, %s1351
      $region94: #{mamba_layer_forward.1} parent=87 // loop_footer_branch
        %1350 = sbr.rel target = $region90
      $region95: #{mamba_layer_forward.1} parent=87 // loop_exit
        _
      %v2085 = vld [vmem:[#allocation5] sm:$0xff]
      %v2086 = vld [vmem:[#allocation5 + $0x8] sm:$0xff]
      %v2087 = vld [vmem:[#allocation5 + $0x10] sm:$0xff]
      %v2088 = vld [vmem:[#allocation5 + $0x18] sm:$0xff]
      %v2089 = vld [vmem:[#allocation5 + $0x20] sm:$0xff]
      %v2090 = vld [vmem:[#allocation5 + $0x28] sm:$0xff]
      %v2091 = vld [vmem:[#allocation5 + $0x30] sm:$0xff]
      %v2092 = vld [vmem:[#allocation5 + $0x38] sm:$0xff]
      %v2093 = vld [vmem:[%s9] sm:$0x1]
      %v2095 = vperm.slane %v2093, 0
      %v2097 = vmul.f32 %v1089, %v2095
      %v2098 = vmul.f32 %v1090, %v2095
      %v2099 = vmul.f32 %v1091, %v2095
      %v2100 = vmul.f32 %v1092, %v2095
      %v2101 = vmul.f32 %v1093, %v2095
      %v2102 = vmul.f32 %v1094, %v2095
      %v2103 = vmul.f32 %v1095, %v2095
      %v2104 = vmul.f32 %v1096, %v2095
      %v2105 = vadd.f32 %v2085, %v2097
      %v2106 = vadd.f32 %v2086, %v2098
      %v2107 = vadd.f32 %v2087, %v2099
      %v2108 = vadd.f32 %v2088, %v2100
      %v2109 = vadd.f32 %v2089, %v2101
      %v2110 = vadd.f32 %v2090, %v2102
      %v2111 = vadd.f32 %v2091, %v2103
      %v2112 = vadd.f32 %v2092, %v2104
      %v2113 = vsub.f32 0.0, %v835
      %v2114 = vsub.f32 0.0, %v837
      %v2115 = vsub.f32 0.0, %v840
      %v2116 = vsub.f32 0.0, %v842
      %v2117 = vsub.f32 0.0, %v845
      %v2118 = vsub.f32 0.0, %v847
      %v2119 = vsub.f32 0.0, %v850
      %v2120 = vsub.f32 0.0, %v852
      %v2121 = vmul.f32 %v2113, 1.442695
      %v2122 = vpow.pop %v2121
      %v2123 = vmul.f32 %v2114, 1.442695
      %v2124 = vpow.pop %v2123
      %v2125 = vmul.f32 %v2115, 1.442695
      %v2126 = vpow.pop %v2125
      %v2127 = vmul.f32 %v2116, 1.442695
      %v2128 = vpow.pop %v2127
      %v2129 = vmul.f32 %v2117, 1.442695
      %v2130 = vpow.pop %v2129
      %v2131 = vmul.f32 %v2118, 1.442695
      %v2132 = vpow.pop %v2131
      %v2133 = vmul.f32 %v2119, 1.442695
      %v2134 = vpow.pop %v2133
      %v2135 = vmul.f32 %v2120, 1.442695
      %v2136 = vpow.pop %v2135
      %v2137 = vadd.f32 %v2122, 1.0
      %v2138 = vadd.f32 %v2124, 1.0
      %v2139 = vadd.f32 %v2126, 1.0
      %v2140 = vadd.f32 %v2128, 1.0
      %v2141 = vadd.f32 %v2130, 1.0
      %v2142 = vadd.f32 %v2132, 1.0
      %v2143 = vadd.f32 %v2134, 1.0
      %v2144 = vadd.f32 %v2136, 1.0
      %v2145 = vrcp.pop %v2137
      %v2146 = vrcp.pop %v2138
      %v2147 = vrcp.pop %v2139
      %v2148 = vrcp.pop %v2140
      %v2149 = vrcp.pop %v2141
      %v2150 = vrcp.pop %v2142
      %v2151 = vrcp.pop %v2143
      %v2152 = vrcp.pop %v2144
      %v2153 = vmul.f32 %v835, %v2145
      %v2154 = vmul.f32 %v837, %v2146
      %v2155 = vmul.f32 %v840, %v2147
      %v2156 = vmul.f32 %v842, %v2148
      %v2157 = vmul.f32 %v845, %v2149
      %v2158 = vmul.f32 %v847, %v2150
      %v2159 = vmul.f32 %v850, %v2151
      %v2160 = vmul.f32 %v852, %v2152
      %v2161 = vmul.f32 %v2105, %v2153
      %v2162 = vmul.f32 %v2106, %v2154
      %v2163 = vmul.f32 %v2107, %v2155
      %v2164 = vmul.f32 %v2108, %v2156
      %v2165 = vmul.f32 %v2109, %v2157
      %v2166 = vmul.f32 %v2110, %v2158
      %v2167 = vmul.f32 %v2111, %v2159
      %v2168 = vmul.f32 %v2112, %v2160
      %v2169 = vpack.c.bf16 %v2162, %v2161
      %v2170 = vpack.c.bf16 %v2164, %v2163
      %v2171 = vpack.c.bf16 %v2166, %v2165
      %v2172 = vpack.c.bf16 %v2168, %v2167
      %v2173 = vld [vmem:[%s10] sm:$0xf]
      %v2174 = vld [vmem:[%s10 + $0x4] sm:$0xf]
      %s2175 = sld [smem:[#allocation6]]
      %v2176 = vstv %s2175
      %v2177 = vmul.f32 %v2176, %v551
      %v2178 = vmul.f32 %v2176, %v552
      %v2179 = vmul.f32 %v2176, %v553
      %v2180 = vmul.f32 %v2176, %v554
      %v2181 = vmul.f32 %v2176, %v555
      %v2182 = vmul.f32 %v2176, %v556
      %v2183 = vmul.f32 %v2176, %v557
      %v2184 = vmul.f32 %v2176, %v558
      %v2187 = vunpack.c.l.b16 %v2173
      %v2188 = vunpack.c.l.b16 %v2174
      %v2189 = vpack.c.b16 %v2188, %v2187
      %v2192 = vsel %vm1119, %v2169, 0
      %v2195 = vsel %vm1119, %v2170, 0
      %v2198 = vsel %vm1119, %v2171, 0
      %v2201 = vsel %vm1119, %v2172, 0
      %2203 = vmatpush.bf16.msra.mxu0 0
      %2204 = vmatpush.bf16.msra.mxu0 0
      %2205 = vmatpush.bf16.msra.mxu0 0
      %2206 = vmatpush.bf16.msra.mxu0 0
      %2207 = vmatpush.bf16.msra.mxu0 0
      %2208 = vmatpush.bf16.msra.mxu0 0
      %2209 = vmatpush.bf16.msra.mxu0 0
      %2210 = vmatpush.bf16.msra.mxu0 %v2189
      %2211 = vmatmul.bf16.gmra.mxu0 %v2192
      %v2212 = vpop.f32.mrf.mxu0
      %v2213 = vadd.f32 %v2177, %v2212
      %v2214 = vpop.f32.mrf.mxu0
      %v2215 = vadd.f32 %v2178, %v2214
      %2216 = vmatmul.bf16.gmra.mxu0 %v2195
      %v2217 = vpop.f32.mrf.mxu0
      %v2218 = vadd.f32 %v2179, %v2217
      %v2219 = vpop.f32.mrf.mxu0
      %v2220 = vadd.f32 %v2180, %v2219
      %2221 = vmatmul.bf16.gmra.mxu0 %v2198
      %v2222 = vpop.f32.mrf.mxu0
      %v2223 = vadd.f32 %v2181, %v2222
      %v2224 = vpop.f32.mrf.mxu0
      %v2225 = vadd.f32 %v2182, %v2224
      %2226 = vmatmul.bf16.gmra.mxu0 %v2201
      %v2227 = vpop.f32.mrf.mxu0
      %v2228 = vadd.f32 %v2183, %v2227
      %v2229 = vpop.f32.mrf.mxu0
      %v2230 = vadd.f32 %v2184, %v2229
      %2231 = vdwg.mxu0
      %v2232 = vsel %vm559, %v2213, 0.0
      %2233 = vadd.xlane.f32.xlu0 %v2232
      %v2234 = vpop.xlane.xlu0 %2233
      %v2235 = vsel %vm559, %v2215, 0.0
      %2236 = vadd.xlane.f32.xlu0 %v2235
      %v2237 = vpop.xlane.xlu0 %2236
      %v2238 = vsel %vm559, %v2218, 0.0
      %2239 = vadd.xlane.f32.xlu0 %v2238
      %v2240 = vpop.xlane.xlu0 %2239
      %v2241 = vsel %vm559, %v2220, 0.0
      %2242 = vadd.xlane.f32.xlu0 %v2241
      %v2243 = vpop.xlane.xlu0 %2242
      %v2244 = vsel %vm559, %v2223, 0.0
      %2245 = vadd.xlane.f32.xlu0 %v2244
      %v2246 = vpop.xlane.xlu0 %2245
      %v2247 = vsel %vm559, %v2225, 0.0
      %2248 = vadd.xlane.f32.xlu0 %v2247
      %v2249 = vpop.xlane.xlu0 %2248
      %v2250 = vsel %vm559, %v2228, 0.0
      %2251 = vadd.xlane.f32.xlu0 %v2250
      %v2252 = vpop.xlane.xlu0 %2251
      %v2253 = vsel %vm559, %v2230, 0.0
      %2254 = vadd.xlane.f32.xlu0 %v2253
      %v2255 = vpop.xlane.xlu0 %2254
      %v2256 = vmul.f32 %v2234, %v590
      %v2257 = vmul.f32 %v2237, %v590
      %v2258 = vmul.f32 %v2240, %v590
      %v2259 = vmul.f32 %v2243, %v590
      %v2260 = vmul.f32 %v2246, %v590
      %v2261 = vmul.f32 %v2249, %v590
      %v2262 = vmul.f32 %v2252, %v590
      %v2263 = vmul.f32 %v2255, %v590
      %v2264 = vsub.f32 %v2213, %v2256
      %v2265 = vsub.f32 %v2215, %v2257
      %v2266 = vsub.f32 %v2218, %v2258
      %v2267 = vsub.f32 %v2220, %v2259
      %v2268 = vsub.f32 %v2223, %v2260
      %v2269 = vsub.f32 %v2225, %v2261
      %v2270 = vsub.f32 %v2228, %v2262
      %v2271 = vsub.f32 %v2230, %v2263
      %v2272 = vmul.f32 %v2264, %v2264
      %v2273 = vmul.f32 %v2265, %v2265
      %v2274 = vmul.f32 %v2266, %v2266
      %v2275 = vmul.f32 %v2267, %v2267
      %v2276 = vmul.f32 %v2268, %v2268
      %v2277 = vmul.f32 %v2269, %v2269
      %v2278 = vmul.f32 %v2270, %v2270
      %v2279 = vmul.f32 %v2271, %v2271
      %v2280 = vsel %vm559, %v2272, 0.0
      %2281 = vadd.xlane.f32.xlu0 %v2280
      %v2282 = vpop.xlane.xlu0 %2281
      %v2283 = vsel %vm559, %v2273, 0.0
      %2284 = vadd.xlane.f32.xlu0 %v2283
      %v2285 = vpop.xlane.xlu0 %2284
      %v2286 = vsel %vm559, %v2274, 0.0
      %2287 = vadd.xlane.f32.xlu0 %v2286
      %v2288 = vpop.xlane.xlu0 %2287
      %v2289 = vsel %vm559, %v2275, 0.0
      %2290 = vadd.xlane.f32.xlu0 %v2289
      %v2291 = vpop.xlane.xlu0 %2290
      %v2292 = vsel %vm559, %v2276, 0.0
      %2293 = vadd.xlane.f32.xlu0 %v2292
      %v2294 = vpop.xlane.xlu0 %2293
      %v2295 = vsel %vm559, %v2277, 0.0
      %2296 = vadd.xlane.f32.xlu0 %v2295
      %v2297 = vpop.xlane.xlu0 %2296
      %v2298 = vsel %vm559, %v2278, 0.0
      %2299 = vadd.xlane.f32.xlu0 %v2298
      %v2300 = vpop.xlane.xlu0 %2299
      %v2301 = vsel %vm559, %v2279, 0.0
      %2302 = vadd.xlane.f32.xlu0 %v2301
      %v2303 = vpop.xlane.xlu0 %2302
      %v2304 = vmul.f32 %v2282, %v590
      %v2305 = vmul.f32 %v2285, %v590
      %v2306 = vmul.f32 %v2288, %v590
      %v2307 = vmul.f32 %v2291, %v590
      %v2308 = vmul.f32 %v2294, %v590
      %v2309 = vmul.f32 %v2297, %v590
      %v2310 = vmul.f32 %v2300, %v590
      %v2311 = vmul.f32 %v2303, %v590
      %v2312 = vadd.f32 %v2304, 1e-05
      %v2313 = vadd.f32 %v2305, 1e-05
      %v2314 = vadd.f32 %v2306, 1e-05
      %v2315 = vadd.f32 %v2307, 1e-05
      %v2316 = vadd.f32 %v2308, 1e-05
      %v2317 = vadd.f32 %v2309, 1e-05
      %v2318 = vadd.f32 %v2310, 1e-05
      %v2319 = vadd.f32 %v2311, 1e-05
      %v2320 = vrsqrt.pop %v2312
      %v2321 = vmul.f32 %v2320, %v2312
      %v2322 = vmul.f32 %v2321, %v2320
      %v2323 = vmul.f32 0.5, %v2322
      %v2324 = vsub.f32 1.5, %v2323
      %v2325 = vmul.f32 %v2320, %v2324
      %vm2326 = vweird.f32 %v2312
      %vm2327 = vweird.f32 %v2320
      %vm2328 = vmor %vm2326, %vm2327
      %v2329 = vsel %vm2328, %v2320, %v2325
      %v2330 = vrsqrt.pop %v2313
      %v2331 = vmul.f32 %v2330, %v2313
      %v2332 = vmul.f32 %v2331, %v2330
      %v2333 = vmul.f32 0.5, %v2332
      %v2334 = vsub.f32 1.5, %v2333
      %v2335 = vmul.f32 %v2330, %v2334
      %vm2336 = vweird.f32 %v2313
      %vm2337 = vweird.f32 %v2330
      %vm2338 = vmor %vm2336, %vm2337
      %v2339 = vsel %vm2338, %v2330, %v2335
      %v2340 = vrsqrt.pop %v2314
      %v2341 = vmul.f32 %v2340, %v2314
      %v2342 = vmul.f32 %v2341, %v2340
      %v2343 = vmul.f32 0.5, %v2342
      %v2344 = vsub.f32 1.5, %v2343
      %v2345 = vmul.f32 %v2340, %v2344
      %vm2346 = vweird.f32 %v2314
      %vm2347 = vweird.f32 %v2340
      %vm2348 = vmor %vm2346, %vm2347
      %v2349 = vsel %vm2348, %v2340, %v2345
      %v2350 = vrsqrt.pop %v2315
      %v2351 = vmul.f32 %v2350, %v2315
      %v2352 = vmul.f32 %v2351, %v2350
      %v2353 = vmul.f32 0.5, %v2352
      %v2354 = vsub.f32 1.5, %v2353
      %v2355 = vmul.f32 %v2350, %v2354
      %vm2356 = vweird.f32 %v2315
      %vm2357 = vweird.f32 %v2350
      %vm2358 = vmor %vm2356, %vm2357
      %v2359 = vsel %vm2358, %v2350, %v2355
      %v2360 = vrsqrt.pop %v2316
      %v2361 = vmul.f32 %v2360, %v2316
      %v2362 = vmul.f32 %v2361, %v2360
      %v2363 = vmul.f32 0.5, %v2362
      %v2364 = vsub.f32 1.5, %v2363
      %v2365 = vmul.f32 %v2360, %v2364
      %vm2366 = vweird.f32 %v2316
      %vm2367 = vweird.f32 %v2360
      %vm2368 = vmor %vm2366, %vm2367
      %v2369 = vsel %vm2368, %v2360, %v2365
      %v2370 = vrsqrt.pop %v2317
      %v2371 = vmul.f32 %v2370, %v2317
      %v2372 = vmul.f32 %v2371, %v2370
      %v2373 = vmul.f32 0.5, %v2372
      %v2374 = vsub.f32 1.5, %v2373
      %v2375 = vmul.f32 %v2370, %v2374
      %vm2376 = vweird.f32 %v2317
      %vm2377 = vweird.f32 %v2370
      %vm2378 = vmor %vm2376, %vm2377
      %v2379 = vsel %vm2378, %v2370, %v2375
      %v2380 = vrsqrt.pop %v2318
      %v2381 = vmul.f32 %v2380, %v2318
      %v2382 = vmul.f32 %v2381, %v2380
      %v2383 = vmul.f32 0.5, %v2382
      %v2384 = vsub.f32 1.5, %v2383
      %v2385 = vmul.f32 %v2380, %v2384
      %vm2386 = vweird.f32 %v2318
      %vm2387 = vweird.f32 %v2380
      %vm2388 = vmor %vm2386, %vm2387
      %v2389 = vsel %vm2388, %v2380, %v2385
      %v2390 = vrsqrt.pop %v2319
      %v2391 = vmul.f32 %v2390, %v2319
      %v2392 = vmul.f32 %v2391, %v2390
      %v2393 = vmul.f32 0.5, %v2392
      %v2394 = vsub.f32 1.5, %v2393
      %v2395 = vmul.f32 %v2390, %v2394
      %vm2396 = vweird.f32 %v2319
      %vm2397 = vweird.f32 %v2390
      %vm2398 = vmor %vm2396, %vm2397
      %v2399 = vsel %vm2398, %v2390, %v2395
      %v2400 = vmul.f32 %v2264, %v2329
      %v2401 = vmul.f32 %v2265, %v2339
      %v2402 = vmul.f32 %v2266, %v2349
      %v2403 = vmul.f32 %v2267, %v2359
      %v2404 = vmul.f32 %v2268, %v2369
      %v2405 = vmul.f32 %v2269, %v2379
      %v2406 = vmul.f32 %v2270, %v2389
      %v2407 = vmul.f32 %v2271, %v2399
      %v2408 = vld [vmem:[%s1] sm:$0x1]
      %v2410 = vperm.slane %v2408, 0
      %v2412 = vmul.f32 %v2400, %v2410
      %v2413 = vmul.f32 %v2401, %v2410
      %v2414 = vmul.f32 %v2402, %v2410
      %v2415 = vmul.f32 %v2403, %v2410
      %v2416 = vmul.f32 %v2404, %v2410
      %v2417 = vmul.f32 %v2405, %v2410
      %v2418 = vmul.f32 %v2406, %v2410
      %v2419 = vmul.f32 %v2407, %v2410
      %v2420 = vld [vmem:[%s2] sm:$0x1]
      %v2422 = vperm.slane %v2420, 0
      %v2424 = vadd.f32 %v2412, %v2422
      %v2425 = vadd.f32 %v2413, %v2422
      %v2426 = vadd.f32 %v2414, %v2422
      %v2427 = vadd.f32 %v2415, %v2422
      %v2428 = vadd.f32 %v2416, %v2422
      %v2429 = vadd.f32 %v2417, %v2422
      %v2430 = vadd.f32 %v2418, %v2422
      %v2431 = vadd.f32 %v2419, %v2422
      %v2432 = vpack.c.bf16 %v2425, %v2424
      %v2433 = vpack.c.bf16 %v2427, %v2426
      %v2434 = vpack.c.bf16 %v2429, %v2428
      %v2435 = vpack.c.bf16 %v2431, %v2430
      %v2436 = vld [vmem:[%s11] sm:$0xf]
      %v2437 = vld [vmem:[%s12] sm:$0x1]
      %v2439 = vperm.slane %v2437, 0
      %v2442 = vsel %vm559, %v2432, 0
      %v2445 = vsel %vm559, %v2433, 0
      %v2448 = vsel %vm559, %v2434, 0
      %v2451 = vsel %vm559, %v2435, 0
      %v2454 = vsel %vm789, %v2436, 0
      %2456 = vmatpush.bf16.msra.mxu0 0
      %2457 = vmatpush.bf16.msra.mxu0 0
      %2458 = vmatpush.bf16.msra.mxu0 0
      %2459 = vmatpush.bf16.msra.mxu0 0
      %2460 = vmatpush.bf16.msra.mxu0 0
      %2461 = vmatpush.bf16.msra.mxu0 0
      %2462 = vmatpush.bf16.msra.mxu0 0
      %2463 = vmatpush.bf16.msra.mxu0 %v2454
      %2464 = vmatmul.bf16.gmra.mxu0 %v2442
      %v2465 = vpop.f32.mrf.mxu0
      %v2466 = vadd.f32 %v2439, %v2465
      %v2467 = vpop.f32.mrf.mxu0
      %v2468 = vadd.f32 %v2439, %v2467
      %2469 = vmatmul.bf16.gmra.mxu0 %v2445
      %v2470 = vpop.f32.mrf.mxu0
      %v2471 = vadd.f32 %v2439, %v2470
      %v2472 = vpop.f32.mrf.mxu0
      %v2473 = vadd.f32 %v2439, %v2472
      %2474 = vmatmul.bf16.gmra.mxu0 %v2448
      %v2475 = vpop.f32.mrf.mxu0
      %v2476 = vadd.f32 %v2439, %v2475
      %v2477 = vpop.f32.mrf.mxu0
      %v2478 = vadd.f32 %v2439, %v2477
      %2479 = vmatmul.bf16.gmra.mxu0 %v2451
      %v2480 = vpop.f32.mrf.mxu0
      %v2481 = vadd.f32 %v2439, %v2480
      %v2482 = vpop.f32.mrf.mxu0
      %v2483 = vadd.f32 %v2439, %v2482
      %2484 = vdwg.mxu0
      %2485 = vst [vmem:[%s549] sm:$0xff] %v2466
      %2486 = vst [vmem:[%s549 + $0x8] sm:$0xff] %v2468
      %2487 = vst [vmem:[%s549 + $0x10] sm:$0xff] %v2471
      %2488 = vst [vmem:[%s549 + $0x18] sm:$0xff] %v2473
      %2489 = vst [vmem:[%s549 + $0x20] sm:$0xff] %v2476
      %2490 = vst [vmem:[%s549 + $0x28] sm:$0xff] %v2478
      %2491 = vst [vmem:[%s549 + $0x30] sm:$0xff] %v2481
      %2492 = vst [vmem:[%s549 + $0x38] sm:$0xff] %v2483
      %p2493 = scmp.lt.s32.totalorder %s29, 1
      %s2494 = scalar_select %p2493, %s29, 1
      %s2495 = smul.addr %s2494, 8
      %s2496 = smul.addr %s2495, 8
      %s2497 = scalar_lea.vmem %s17, %s2496
      // Predicated region
      $region96: #{mamba_layer_forward.1} parent=87 // pred_check
        %p2498 = pneg %p409
      $region97: #{mamba_layer_forward.1} parent=87 // pred_check_branch
        %2500 = sbr.rel (%p2498) target = $region99
      $region98: #{mamba_layer_forward.1} parent=87 // pred_region
        _
      $region99: #{mamba_layer_forward.1} parent=87 // pred_fallthru
        _
    $region88: #{mamba_layer_forward.1} parent=5 // pred_fallthru
      _
    %p2501 = scmp.le.s32.totalorder 2, %s24
    // Predicated region
    $region100: #{mamba_layer_forward.1} parent=5 // pred_check
      %p2502 = pneg %p2501
    $region101: #{mamba_layer_forward.1} parent=5 // pred_check_branch
      %2504 = sbr.rel (%p2502) target = $region103
    $region102: #{mamba_layer_forward.1} parent=5 // pred_region
      %s2505 = ssub.s32 %s24, 2
      // Predicated region
      $region104: #{mamba_layer_forward.1} parent=102 // pred_check
        %p2506 = pneg %p415
      $region105: #{mamba_layer_forward.1} parent=102 // pred_check_branch
        %2508 = sbr.rel (%p2506) target = $region107
      $region106: #{mamba_layer_forward.1} parent=102 // pred_region
        %p2509 = scmp.lt.s32.totalorder %s30, 1
        %s2510 = scalar_select %p2509, %s30, 1
        %s2511 = smul.addr %s2510, 8
        %s2512 = smul.addr %s2511, 8
        %s2513 = scalar_lea.vmem %s17, %s2512
      $region107: #{mamba_layer_forward.1} parent=102 // pred_fallthru
        _
    $region103: #{mamba_layer_forward.1} parent=5 // pred_fallthru
      _
  $region6: #{mamba_layer_forward.1} parent=0 // loop_footer
    %s28 = sadd.s32 1, %s24
  $region7: #{mamba_layer_forward.1} parent=0 // loop_footer_branch
    %23 = sbr.rel target = $region3
  $region8: #{mamba_layer_forward.1} parent=0 // loop_exit
    _

</llo_original>
